<compile_context>
chip_gen: v6e
topology: v6e:2x2x1
jax: 0.10.0
libtpu: 0.0.40
codegen_flags: <defaults>
</compile_context>

<pallas_src>
import functools
import math

import jax
import jax.numpy as jnp
from jax.experimental import pallas as pl
from jax.experimental.pallas import tpu as pltpu


# ----------------------------- in-kernel helpers ----------------------------

def _layernorm(x, gamma, beta, eps=1e-5):
    # one-pass statistics: halves the cross-lane (XLU) reductions per LN
    mean = jnp.mean(x, axis=-1, keepdims=True)
    mean2 = jnp.mean(x * x, axis=-1, keepdims=True)
    var = jnp.maximum(mean2 - mean * mean, 0.0)
    return (x - mean) * jax.lax.rsqrt(var + eps) * gamma + beta


def _softmax_last(x):
    x = x - jnp.max(x, axis=-1, keepdims=True)
    e = jnp.exp(x)
    return e / jnp.sum(e, axis=-1, keepdims=True)


# ------------------------------ fused kernel --------------------------------

def _make_kernel(n_head, n_layers, mask_heads, compute_dtype, resident):
    """mask_heads == 0 means no mask input at all.
    resident == True: per-layer weights arrive as full (L, ...) blocks and are
    indexed by the layer grid id; False: streamed (1, ...) per-layer blocks."""
    has_mask = mask_heads > 0

    def kernel(*refs):
        i = 0
        x_ref = refs[i]; i += 1
        bias_ref = None
        if has_mask:
            bias_ref = refs[i]; i += 1
        (ln1_g, ln1_b, wqkv, bqkv, wp, bp,
         ln2_g, ln2_b, w1, b1, w2, b2,
         lnf_g, lnf_b, wh) = refs[i:i + 15]
        out_ref, act_ref, ctx_ref = refs[i + 15:i + 18]

        Bb, T, C = x_ref.shape
        M = Bb * T
        hd = C // n_head
        l = pl.program_id(1)

        def sel(ref):
            # per-layer stacked weight: resident -> dynamic layer index,
            # streamed -> the (1, ...) block already holds layer l.
            return ref[l] if resident else ref[0]

        # Load the batch block into the resident VMEM activation scratch once.
        @pl.when(l == 0)
        def _():
            act_ref[...] = x_ref[...].reshape(M, C).astype(jnp.float32)

        x = act_ref[...]                                        # (M, C) f32

        # ---------------- self-attention (pre-LN, dropout = identity) -------
        xn = _layernorm(x, sel(ln1_g), sel(ln1_b)).astype(compute_dtype)
        # fused QKV: (M, C) @ (C, 3C); 1/sqrt(hd) folded into the Q columns.
        qkv = jnp.dot(xn, sel(wqkv),
                      preferred_element_type=jnp.float32) + sel(bqkv)
        qkv_c = qkv.astype(compute_dtype)                       # (M, 3C) bf16

        if has_mask:
            # bf16 additive bias, upcast once; the add stays in f32 scores.
            bias_all = bias_ref[...].astype(jnp.float32)        # (bb, Hm, T, T)
            bias_b = bias_all[:, 0] if mask_heads == 1 else None

        for h in range(n_head):                                 # static unroll
            lo = h * hd
            qh = qkv_c[:, lo:lo + hd].reshape(Bb, T, hd)
            kh = qkv_c[:, C + lo:C + lo + hd].reshape(Bb, T, hd)
            vh = qkv_c[:, 2 * C + lo:2 * C + lo + hd].reshape(Bb, T, hd)
            # bf16 x bf16 -> f32 score matmul (one MXU pass)
            s = jnp.einsum('bqd,bkd->bqk', qh, kh,
                           preferred_element_type=jnp.float32)  # (Bb, T, T)
            if has_mask:
                s = s + (bias_b if mask_heads == 1 else bias_all[:, h])
            p = _softmax_last(s).astype(compute_dtype)
            yh = jnp.einsum('bqk,bkd->bqd', p, vh,
                            preferred_element_type=jnp.float32)  # (Bb, T, hd)
            # write the per-head context into the (M, C) slab (no K=hd matmul)
            ctx_ref[:, lo:lo + hd] = yh.reshape(M, hd).astype(compute_dtype)

        # single full-contraction output projection: (M, C) @ (C, C)
        y = jnp.dot(ctx_ref[...], sel(wp), preferred_element_type=jnp.float32)
        x = x + y + sel(bp)

        # -------------------------------- MLP -------------------------------
        xn2 = _layernorm(x, sel(ln2_g), sel(ln2_b)).astype(compute_dtype)
        h1 = jnp.dot(xn2, sel(w1), preferred_element_type=jnp.float32) + sel(b1)
        # tanh GELU lowers to the EUP slot.
        # TODO(synk): exact-erf GELU (torch nn.GELU default) if bit-closer
        # numerics are required; drift is well inside the bf16 compute noise.
        h1 = jax.nn.gelu(h1, approximate=True)
        x = x + jnp.dot(h1.astype(compute_dtype), sel(w2),
                        preferred_element_type=jnp.float32) + sel(b2)
        act_ref[...] = x

        # -------------- final LayerNorm + head, fused in last layer ---------
        @pl.when(l == n_layers - 1)
        def _():
            xf = _layernorm(act_ref[...], lnf_g[...], lnf_b[...])
            logits = jnp.dot(xf.astype(compute_dtype), wh[...],
                             preferred_element_type=jnp.float32)
            out_ref[...] = logits.reshape(Bb, T, -1).astype(out_ref.dtype)

    return kernel


# --------------------------------- wrapper -----------------------------------

def _pick_batch_block(B, T, target_m=512, min_grid=2):
    """Largest divisor of B with B_blk*T <= target_m, while keeping
    grid_b >= min_grid whenever B allows it (dual-TC chips)."""
    cap = B // min_grid if B >= min_grid else B
    cap = max(cap, 1)
    best = 1
    for d in range(1, cap + 1):
        if B % d == 0 and d * T <= max(target_m, T):
            best = d
    return best


def cross_cond_trans_head(fused, x, src_mask, n_head, num_vq=None):
    """Pallas forward.  fused = fuse_params(...).  src_mask: bool,
    broadcastable to (B, n_head, T, T) (e.g. (1,1,T,T)/(B,1,T,T)/(B,H,T,T)),
    or None.  num_vq must be a STATIC python int (bind via functools.partial)
    or None (no vocab-padding slice)."""
    B, T, C = x.shape
    L = fused["wqkv"].shape[0]
    Vp = fused["wh"].shape[1]
    Ff = fused["w1"].shape[-1]
    compute_dtype = fused["wqkv"].dtype
    assert num_vq is None or isinstance(num_vq, int), \
        "num_vq must be a static Python int (bind it via functools.partial)"

    B_blk = _pick_batch_block(B, T)
    grid_b = B // B_blk
    M = B_blk * T

    per_layer = ("ln1_g", "ln1_b", "wqkv", "bqkv", "wp", "bp",
                 "ln2_g", "ln2_b", "w1", "b1", "w2", "b2")
    final = ("lnf_g", "lnf_b", "wh")

    def nbytes(a):
        return a.size * jnp.dtype(a.dtype).itemsize

    weight_bytes = sum(nbytes(fused[k]) for k in per_layer + final)
    # Small models: keep the full weight stack resident in VMEM (fetched once,
    # no per-step weight DMA); large models: stream per-layer blocks.
    resident = weight_bytes <= (12 << 20)

    def layer_spec(a):
        if resident:
            return pl.BlockSpec(a.shape, lambda bi, l, z=(0,) * a.ndim: z)
        return pl.BlockSpec((1,) + a.shape[1:],
                            lambda bi, l, n=a.ndim: (l,) + (0,) * (n - 1))

    def const_spec(a):
        return pl.BlockSpec(a.shape, lambda bi, l, z=(0,) * a.ndim: z)

    in_specs = [pl.BlockSpec((B_blk, T, C), lambda bi, l: (bi, 0, 0))]
    args = [x]
    mask_heads = 0
    mask_bytes = 0
    if src_mask is not None:
        assert src_mask.ndim == 4, "src_mask must be rank-4 (B?, H?, T, T)"
        Bm, Hm = src_mask.shape[0], src_mask.shape[1]
        assert Bm in (1, B) and Hm in (1, n_head)
        # compact additive bias in bf16 (halves DMA/VMEM); 0 = attend,
        # -1e30 = masked (finite => fully-masked rows become uniform, not NaN).
        bias = jnp.where(src_mask, 0.0, -1e30).astype(jnp.bfloat16)
        if Bm == B:
            in_specs.append(pl.BlockSpec((B_blk, Hm, T, T),
                                         lambda bi, l: (bi, 0, 0, 0)))
        else:
            in_specs.append(pl.BlockSpec((1, Hm, T, T),
                                         lambda bi, l: (0, 0, 0, 0)))
        args.append(bias)
        mask_heads = Hm
        mask_bytes = (B_blk if Bm == B else 1) * Hm * T * T * 2

    for k in per_layer:
        in_specs.append(layer_spec(fused[k]))
        args.append(fused[k])
    for k in final:
        in_specs.append(const_spec(fused[k]))
        args.append(fused[k])

    kernel = _make_kernel(n_head, L, mask_heads, compute_dtype, resident)

    # ---- explicit VMEM budget (scoped defaults: 16 MiB v5e / 32 MiB v6e,v7x)
    c_item = jnp.dtype(compute_dtype).itemsize
    act_bytes = M * C * 4 + M * C * c_item                       # scratches
    io_bytes = 2 * (M * C * 4 + M * Vp * 4)                      # x / out blocks
    interm_bytes = 4 * M * max(3 * C, Ff) * 4                    # qkv / h1 (f32)
    if resident:
        w_vmem = weight_bytes
    else:
        w_vmem = (2 * (sum(nbytes(fused[k]) for k in per_layer) // L)
                  + sum(nbytes(fused[k]) for k in final))
    est = act_bytes + io_bytes + interm_bytes + w_vmem + 4 * mask_bytes
    vmem_limit = int(min(100 << 20, max(32 << 20, 2 * est)))

    # ---- advisory cost estimate for the XLA scheduler
    flops_layer = (2 * M * C * 3 * C + 2 * M * C * C + 4 * M * C * Ff
                   + 4 * M * T * C)
    flops = grid_b * (L * flops_layer + 2 * M * C * Vp)
    transcendentals = grid_b * L * (B_blk * n_head * T * T + M * Ff)
    if resident:
        w_hbm = weight_bytes
    else:
        w_hbm = (grid_b * L * (sum(nbytes(fused[k]) for k in per_layer) // L)
                 + sum(nbytes(fused[k]) for k in final))
    bytes_accessed = int(x.size * jnp.dtype(x.dtype).itemsize
                         + B * T * Vp * 4 + w_hbm + grid_b * mask_bytes)

    out = pl.pallas_call(
        kernel,
        out_shape=jax.ShapeDtypeStruct((B, T, Vp), x.dtype),
        grid=(grid_b, L),
        in_specs=in_specs,
        out_specs=pl.BlockSpec((B_blk, T, Vp), lambda bi, l: (bi, 0, 0)),
        scratch_shapes=[pltpu.VMEM((M, C), jnp.float32),     # resident act
                        pltpu.VMEM((M, C), compute_dtype)],  # per-layer ctx
        compiler_params=pltpu.CompilerParams(
            dimension_semantics=("parallel", "arbitrary"),
            vmem_limit_bytes=vmem_limit),
        cost_estimate=pl.CostEstimate(flops=int(flops),
                                      transcendentals=int(transcendentals),
                                      bytes_accessed=bytes_accessed),
    )(*args)

    if num_vq is not None and num_vq != Vp:
        out = out[..., :num_vq]
    return out


# --------------------------- parameter construction -------------------------

def init_params(key, embed_dim, num_layers, fc_rate, num_vq):
    """PyTorch-equivalent parameters (f32, Linear weights stored (in, out))."""
    C = embed_dim
    Ff = fc_rate * C
    keys = jax.random.split(key, num_layers * 6 + 1)

    def lin(k, fi, fo):
        # module._init_weights: normal(0, 0.02), bias zero
        return 0.02 * jax.random.normal(k, (fi, fo), jnp.float32)

    blocks = []
    ki = 0
    for _ in range(num_layers):
        blk = dict(
            ln1_g=jnp.ones((1, C), jnp.float32), ln1_b=jnp.zeros((1, C), jnp.float32),
            wq=lin(keys[ki + 0], C, C), bq=jnp.zeros((1, C), jnp.float32),
            wk=lin(keys[ki + 1], C, C), bk=jnp.zeros((1, C), jnp.float32),
            wv=lin(keys[ki + 2], C, C), bv=jnp.zeros((1, C), jnp.float32),
            wp=lin(keys[ki + 3], C, C), bp=jnp.zeros((1, C), jnp.float32),
            ln2_g=jnp.ones((1, C), jnp.float32), ln2_b=jnp.zeros((1, C), jnp.float32),
            w1=lin(keys[ki + 4], C, Ff), b1=jnp.zeros((1, Ff), jnp.float32),
            w2=lin(keys[ki + 5], Ff, C), b2=jnp.zeros((1, C), jnp.float32),
        )
        ki += 6
        blocks.append(blk)
    return dict(blocks=blocks,
                lnf_g=jnp.ones((1, C), jnp.float32),
                lnf_b=jnp.zeros((1, C), jnp.float32),
                wh=lin(keys[ki], C, num_vq))


def fuse_params(params, n_head, compute_dtype=jnp.bfloat16):
    """Stack per-layer weights into (L, ...) arrays, fuse QKV, fold the
    1/sqrt(hd) scale into Q, cast matmul weights to compute_dtype and pad the
    head output dim to a multiple of 128.  (num_vq is NOT stored here; it is a
    static int passed to the wrapper.)"""
    blocks = params["blocks"]
    C = blocks[0]["wq"].shape[0]
    hd = C // n_head
    scale = 1.0 / math.sqrt(hd)

    def stack(fn, dtype):
        return jnp.stack([fn(b) for b in blocks], axis=0).astype(dtype)

    fused = dict(
        ln1_g=stack(lambda b: b["ln1_g"], jnp.float32),
        ln1_b=stack(lambda b: b["ln1_b"], jnp.float32),
        wqkv=stack(lambda b: jnp.concatenate(
            [b["wq"] * scale, b["wk"], b["wv"]], axis=1), compute_dtype),
        bqkv=stack(lambda b: jnp.concatenate(
            [b["bq"] * scale, b["bk"], b["bv"]], axis=1), jnp.float32),
        wp=stack(lambda b: b["wp"], compute_dtype),
        bp=stack(lambda b: b["bp"], jnp.float32),
        ln2_g=stack(lambda b: b["ln2_g"], jnp.float32),
        ln2_b=stack(lambda b: b["ln2_b"], jnp.float32),
        w1=stack(lambda b: b["w1"], compute_dtype),
        b1=stack(lambda b: b["b1"], jnp.float32),
        w2=stack(lambda b: b["w2"], compute_dtype),
        b2=stack(lambda b: b["b2"], jnp.float32),
        lnf_g=params["lnf_g"].astype(jnp.float32),
        lnf_b=params["lnf_b"].astype(jnp.float32),
    )
    wh = params["wh"]
    V = wh.shape[1]
    Vp = ((V + 127) // 128) * 128
    if Vp != V:
        wh = jnp.pad(wh, ((0, 0), (0, Vp - V)))
    fused["wh"] = wh.astype(compute_dtype)
    return fused


# --------------------------- pure-JAX reference ------------------------------

def ref_forward(params, x, src_mask, n_head):
    def ln(x, g, b, eps=1e-5):
        m = jnp.mean(x, -1, keepdims=True)
        v = jnp.mean((x - m) ** 2, -1, keepdims=True)
        return (x - m) / jnp.sqrt(v + eps) * g + b

    B, T, C = x.shape
    hd = C // n_head
    for blk in params["blocks"]:
        xn = ln(x, blk["ln1_g"], blk["ln1_b"])
        q = (xn @ blk["wq"] + blk["bq"]).reshape(B, T, n_head, hd).transpose(0, 2, 1, 3)
        k = (xn @ blk["wk"] + blk["bk"]).reshape(B, T, n_head, hd).transpose(0, 2, 1, 3)
        v = (xn @ blk["wv"] + blk["bv"]).reshape(B, T, n_head, hd).transpose(0, 2, 1, 3)
        att = (q @ k.transpose(0, 1, 3, 2)) / math.sqrt(hd)
        if src_mask is not None:
            att = jnp.where(src_mask, att, -jnp.inf)
        att = jax.nn.softmax(att, axis=-1)
        y = (att @ v).transpose(0, 2, 1, 3).reshape(B, T, C)
        x = x + (y @ blk["wp"] + blk["bp"])
        xn2 = ln(x, blk["ln2_g"], blk["ln2_b"])
        h = jax.nn.gelu(xn2 @ blk["w1"] + blk["b1"], approximate=False)
        x = x + (h @ blk["w2"] + blk["b2"])
    x = ln(x, params["lnf_g"], params["lnf_b"])
    return x @ params["wh"]


# --------------------------------- main --------------------------------------

if __name__ == "__main__":
    # shapes consistent with the module defaults (block_size=16, n_head=8)
    B, T = 2, 16
    embed_dim, n_head, num_layers, fc_rate, num_vq = 128, 8, 2, 4, 128

    key = jax.random.PRNGKey(0)
    pkey, xkey = jax.random.split(key)
    params = init_params(pkey, embed_dim, num_layers, fc_rate, num_vq)
    fused = fuse_params(params, n_head, compute_dtype=jnp.bfloat16)

    x = jax.random.normal(xkey, (B, T, embed_dim), jnp.float32)
    # compact causal mask (broadcastable to (B, n_head, T, T)); True = attend
    src_mask = jnp.tril(jnp.ones((T, T), bool))[None, None]

    fwd = jax.jit(functools.partial(cross_cond_trans_head,
                                    n_head=n_head, num_vq=num_vq))
    logits = jax.block_until_ready(fwd(fused, x, src_mask))

    expected = ref_forward(params, x, src_mask, n_head)
    assert logits.shape == (B, T, num_vq)
    err = float(jnp.max(jnp.abs(logits - expected)))
    assert jnp.allclose(logits, expected, atol=1e-2, rtol=1e-2), err

    print("KERNEL_OK")
</pallas_src>

<mosaic_0001>
module attributes {stable_mosaic.version = 11 : i64} {
  func.func @kernel(%arg0: i32, %arg1: i32, %arg2: memref<1x16x128xf32, #tpu.memory_space<vmem>>, %arg3: memref<1x1x16x16xbf16, #tpu.memory_space<vmem>>, %arg4: memref<2x1x128xf32, #tpu.memory_space<vmem>>, %arg5: memref<2x1x128xf32, #tpu.memory_space<vmem>>, %arg6: memref<2x128x384xbf16, #tpu.memory_space<vmem>>, %arg7: memref<2x1x384xf32, #tpu.memory_space<vmem>>, %arg8: memref<2x128x128xbf16, #tpu.memory_space<vmem>>, %arg9: memref<2x1x128xf32, #tpu.memory_space<vmem>>, %arg10: memref<2x1x128xf32, #tpu.memory_space<vmem>>, %arg11: memref<2x1x128xf32, #tpu.memory_space<vmem>>, %arg12: memref<2x128x512xbf16, #tpu.memory_space<vmem>>, %arg13: memref<2x1x512xf32, #tpu.memory_space<vmem>>, %arg14: memref<2x512x128xbf16, #tpu.memory_space<vmem>>, %arg15: memref<2x1x128xf32, #tpu.memory_space<vmem>>, %arg16: memref<1x128xf32, #tpu.memory_space<vmem>>, %arg17: memref<1x128xf32, #tpu.memory_space<vmem>>, %arg18: memref<128x128xbf16, #tpu.memory_space<vmem>>, %arg19: memref<1x16x128xf32, #tpu.memory_space<vmem>>, %arg20: memref<16x128xf32, #tpu.memory_space<vmem>>, %arg21: memref<16x128xbf16, #tpu.memory_space<vmem>>) attributes {dimension_semantics = [#tpu.dimension_semantics<parallel>, #tpu.dimension_semantics<arbitrary>], iteration_bounds = array<i64: 2, 2>, scalar_prefetch = 0 : i64, scratch_operands = 2 : i64, tpu.core_type = #tpu.core_type<tc>, window_params = [{transform_indices = @transform_0, window_bounds = array<i64: 1, 16, 128>}, {pipeline_mode = #tpu.pipeline_mode<synchronous>, transform_indices = @transform_1, window_bounds = array<i64: 1, 1, 16, 16>}, {pipeline_mode = #tpu.pipeline_mode<synchronous>, transform_indices = @transform_2, window_bounds = array<i64: 2, 1, 128>}, {pipeline_mode = #tpu.pipeline_mode<synchronous>, transform_indices = @transform_3, window_bounds = array<i64: 2, 1, 128>}, {pipeline_mode = #tpu.pipeline_mode<synchronous>, transform_indices = @transform_4, window_bounds = array<i64: 2, 128, 384>}, {pipeline_mode = #tpu.pipeline_mode<synchronous>, transform_indices = @transform_5, window_bounds = array<i64: 2, 1, 384>}, {pipeline_mode = #tpu.pipeline_mode<synchronous>, transform_indices = @transform_6, window_bounds = array<i64: 2, 128, 128>}, {pipeline_mode = #tpu.pipeline_mode<synchronous>, transform_indices = @transform_7, window_bounds = array<i64: 2, 1, 128>}, {pipeline_mode = #tpu.pipeline_mode<synchronous>, transform_indices = @transform_8, window_bounds = array<i64: 2, 1, 128>}, {pipeline_mode = #tpu.pipeline_mode<synchronous>, transform_indices = @transform_9, window_bounds = array<i64: 2, 1, 128>}, {pipeline_mode = #tpu.pipeline_mode<synchronous>, transform_indices = @transform_10, window_bounds = array<i64: 2, 128, 512>}, {pipeline_mode = #tpu.pipeline_mode<synchronous>, transform_indices = @transform_11, window_bounds = array<i64: 2, 1, 512>}, {pipeline_mode = #tpu.pipeline_mode<synchronous>, transform_indices = @transform_12, window_bounds = array<i64: 2, 512, 128>}, {pipeline_mode = #tpu.pipeline_mode<synchronous>, transform_indices = @transform_13, window_bounds = array<i64: 2, 1, 128>}, {pipeline_mode = #tpu.pipeline_mode<synchronous>, transform_indices = @transform_14, window_bounds = array<i64: 1, 128>}, {pipeline_mode = #tpu.pipeline_mode<synchronous>, transform_indices = @transform_15, window_bounds = array<i64: 1, 128>}, {pipeline_mode = #tpu.pipeline_mode<synchronous>, transform_indices = @transform_16, window_bounds = array<i64: 128, 128>}, {transform_indices = @transform_17, window_bounds = array<i64: 1, 16, 128>}]} {
    %c0_i32 = arith.constant 0 : i32
    %0 = arith.cmpi eq, %arg1, %c0_i32 : i32
    %1 = arith.extui %0 : i1 to i32
    %c0_i32_0 = arith.constant 0 : i32
    %2 = arith.cmpi ne, %1, %c0_i32_0 : i32
    scf.if %2 {
      %c0_95 = arith.constant 0 : index
      %c0_96 = arith.constant 0 : index
      %c0_97 = arith.constant 0 : index
      %303 = vector.load %arg2[%c0_95, %c0_96, %c0_97] : memref<1x16x128xf32, #tpu.memory_space<vmem>>, vector<1x16x128xf32>
      %304 = vector.shape_cast %303 : vector<1x16x128xf32> to vector<16x128xf32>
      %c0_98 = arith.constant 0 : index
      %c0_99 = arith.constant 0 : index
      %305 = vector.load %arg20[%c0_98, %c0_99] : memref<16x128xf32, #tpu.memory_space<vmem>>, vector<16x128xf32>
      tpu.vector_store %arg20[%c0_98, %c0_99], %304 {strides = array<i32>} : memref<16x128xf32, #tpu.memory_space<vmem>>, vector<16x128xf32>,
    } else {
    }
    %c0 = arith.constant 0 : index
    %c0_1 = arith.constant 0 : index
    %3 = vector.load %arg20[%c0, %c0_1] : memref<16x128xf32, #tpu.memory_space<vmem>>, vector<16x128xf32>
    %4 = arith.index_cast %arg1 : i32 to index
    %c0_2 = arith.constant 0 : index
    %c0_3 = arith.constant 0 : index
    %5 = vector.load %arg4[%4, %c0_2, %c0_3] : memref<2x1x128xf32, #tpu.memory_space<vmem>>, vector<1x1x128xf32>
    %6 = vector.shape_cast %5 : vector<1x1x128xf32> to vector<1x128xf32>
    %7 = arith.index_cast %arg1 : i32 to index
    %c0_4 = arith.constant 0 : index
    %c0_5 = arith.constant 0 : index
    %8 = vector.load %arg5[%7, %c0_4, %c0_5] : memref<2x1x128xf32, #tpu.memory_space<vmem>>, vector<1x1x128xf32>
    %9 = vector.shape_cast %8 : vector<1x1x128xf32> to vector<1x128xf32>
    %cst = arith.constant dense<0.000000e+00> : vector<16xf32>
    %10 = vector.multi_reduction <add>, %3, %cst [1] : vector<16x128xf32> to vector<16xf32>
    %11 = vector.shape_cast %10 : vector<16xf32> to vector<16x1xf32>
    %cst_6 = arith.constant 1.280000e+02 : f32
    %12 = vector.broadcast %cst_6 : f32 to vector<16x1xf32>
    %13 = arith.divf %11, %12 : vector<16x1xf32>
    %14 = arith.mulf %3, %3 : vector<16x128xf32>
    %cst_7 = arith.constant dense<0.000000e+00> : vector<16xf32>
    %15 = vector.multi_reduction <add>, %14, %cst_7 [1] : vector<16x128xf32> to vector<16xf32>
    %16 = vector.shape_cast %15 : vector<16xf32> to vector<16x1xf32>
    %cst_8 = arith.constant 1.280000e+02 : f32
    %17 = vector.broadcast %cst_8 : f32 to vector<16x1xf32>
    %18 = arith.divf %16, %17 : vector<16x1xf32>
    %19 = arith.mulf %13, %13 : vector<16x1xf32>
    %20 = arith.subf %18, %19 : vector<16x1xf32>
    %cst_9 = arith.constant 0.000000e+00 : f32
    %21 = vector.broadcast %cst_9 : f32 to vector<16x1xf32>
    %22 = arith.maximumf %20, %21 : vector<16x1xf32>
    %23 = vector.broadcast %13 : vector<16x1xf32> to vector<16x128xf32>
    %24 = arith.subf %3, %23 : vector<16x128xf32>
    %cst_10 = arith.constant 9.99999974E-6 : f32
    %25 = vector.broadcast %cst_10 : f32 to vector<16x1xf32>
    %26 = arith.addf %22, %25 : vector<16x1xf32>
    %27 = math.rsqrt %26 : vector<16x1xf32>
    %28 = vector.broadcast %27 : vector<16x1xf32> to vector<16x128xf32>
    %29 = arith.mulf %24, %28 : vector<16x128xf32>
    %30 = vector.broadcast %6 : vector<1x128xf32> to vector<16x128xf32>
    %31 = arith.mulf %29, %30 : vector<16x128xf32>
    %32 = vector.broadcast %9 : vector<1x128xf32> to vector<16x128xf32>
    %33 = arith.addf %31, %32 : vector<16x128xf32>
    %34 = arith.truncf %33 : vector<16x128xf32> to vector<16x128xbf16>
    %35 = arith.index_cast %arg1 : i32 to index
    %c0_11 = arith.constant 0 : index
    %c0_12 = arith.constant 0 : index
    %36 = vector.load %arg6[%35, %c0_11, %c0_12] : memref<2x128x384xbf16, #tpu.memory_space<vmem>>, vector<1x128x384xbf16>
    %37 = vector.shape_cast %36 : vector<1x128x384xbf16> to vector<128x384xbf16>
    %cst_13 = arith.constant dense<0.000000e+00> : vector<16x384xf32>
    %38 = tpu.matmul %34, %37, %cst_13 {dimension_numbers = #tpu.dot_dimension_numbers<[1], [0], [0], [1], [0, 0, 1, 1], [], []>} : vector<16x128xbf16>, vector<128x384xbf16>, vector<16x384xf32> -> vector<16x384xf32>
    %39 = arith.index_cast %arg1 : i32 to index
    %c0_14 = arith.constant 0 : index
    %c0_15 = arith.constant 0 : index
    %40 = vector.load %arg7[%39, %c0_14, %c0_15] : memref<2x1x384xf32, #tpu.memory_space<vmem>>, vector<1x1x384xf32>
    %41 = vector.shape_cast %40 : vector<1x1x384xf32> to vector<1x384xf32>
    %42 = vector.broadcast %41 : vector<1x384xf32> to vector<16x384xf32>
    %43 = arith.addf %38, %42 : vector<16x384xf32>
    %44 = arith.truncf %43 : vector<16x384xf32> to vector<16x384xbf16>
    %c0_16 = arith.constant 0 : index
    %c0_17 = arith.constant 0 : index
    %c0_18 = arith.constant 0 : index
    %c0_19 = arith.constant 0 : index
    %45 = vector.load %arg3[%c0_16, %c0_17, %c0_18, %c0_19] : memref<1x1x16x16xbf16, #tpu.memory_space<vmem>>, vector<1x1x16x16xbf16>
    %46 = arith.extf %45 : vector<1x1x16x16xbf16> to vector<1x1x16x16xf32>
    %47 = vector.shape_cast %46 : vector<1x1x16x16xf32> to vector<1x16x16xf32>
    %48 = vector.extract_strided_slice %44 {offsets = [0, 0], sizes = [16, 16], strides = [1, 1]} : vector<16x384xbf16> to vector<16x16xbf16>
    %49 = vector.shape_cast %48 : vector<16x16xbf16> to vector<1x16x16xbf16>
    %50 = vector.extract_strided_slice %44 {offsets = [0, 128], sizes = [16, 16], strides = [1, 1]} : vector<16x384xbf16> to vector<16x16xbf16>
    %51 = vector.shape_cast %50 : vector<16x16xbf16> to vector<1x16x16xbf16>
    %52 = vector.extract_strided_slice %44 {offsets = [0, 256], sizes = [16, 16], strides = [1, 1]} : vector<16x384xbf16> to vector<16x16xbf16>
    %53 = vector.shape_cast %52 : vector<16x16xbf16> to vector<1x16x16xbf16>
    "tpu.trace_start"() <{level = 10 : i32, message = "bqd,bkd->bqk"}> : () -> ()
    %cst_20 = arith.constant dense<0.000000e+00> : vector<1x16x16xf32>
    %54 = tpu.matmul %49, %51, %cst_20 {dimension_numbers = #tpu.dot_dimension_numbers<[2], [2], [1], [1], [0, 0, 0, 1, 1, 1], [0], [0]>} : vector<1x16x16xbf16>, vector<1x16x16xbf16>, vector<1x16x16xf32> -> vector<1x16x16xf32>
    "tpu.trace_stop"() : () -> ()
    %55 = arith.addf %54, %47 : vector<1x16x16xf32>
    %cst_21 = arith.constant dense<0xFF800000> : vector<1x16xf32>
    %56 = vector.multi_reduction <maximumf>, %55, %cst_21 [2] : vector<1x16x16xf32> to vector<1x16xf32>
    %57 = vector.shape_cast %56 : vector<1x16xf32> to vector<1x16x1xf32>
    %58 = vector.broadcast %57 : vector<1x16x1xf32> to vector<1x16x16xf32>
    %59 = arith.subf %55, %58 : vector<1x16x16xf32>
    %60 = math.exp %59 : vector<1x16x16xf32>
    %cst_22 = arith.constant dense<0.000000e+00> : vector<1x16xf32>
    %61 = vector.multi_reduction <add>, %60, %cst_22 [2] : vector<1x16x16xf32> to vector<1x16xf32>
    %62 = vector.shape_cast %61 : vector<1x16xf32> to vector<1x16x1xf32>
    %63 = vector.broadcast %62 : vector<1x16x1xf32> to vector<1x16x16xf32>
    %64 = arith.divf %60, %63 : vector<1x16x16xf32>
    %65 = arith.truncf %64 : vector<1x16x16xf32> to vector<1x16x16xbf16>
    "tpu.trace_start"() <{level = 10 : i32, message = "bqk,bkd->bqd"}> : () -> ()
    %cst_23 = arith.constant dense<0.000000e+00> : vector<1x16x16xf32>
    %66 = tpu.matmul %65, %53, %cst_23 {dimension_numbers = #tpu.dot_dimension_numbers<[2], [1], [1], [2], [0, 0, 0, 1, 1, 2], [0], [0]>} : vector<1x16x16xbf16>, vector<1x16x16xbf16>, vector<1x16x16xf32> -> vector<1x16x16xf32>
    "tpu.trace_stop"() : () -> ()
    %67 = vector.shape_cast %66 : vector<1x16x16xf32> to vector<16x16xf32>
    %68 = arith.truncf %67 : vector<16x16xf32> to vector<16x16xbf16>
    %c0_24 = arith.constant 0 : index
    %c0_25 = arith.constant 0 : index
    %69 = vector.load %arg21[%c0_24, %c0_25] : memref<16x128xbf16, #tpu.memory_space<vmem>>, vector<16x16xbf16>
    tpu.vector_store %arg21[%c0_24, %c0_25], %68 {strides = array<i32>} : memref<16x128xbf16, #tpu.memory_space<vmem>>, vector<16x16xbf16>,
    %70 = vector.extract_strided_slice %44 {offsets = [0, 16], sizes = [16, 16], strides = [1, 1]} : vector<16x384xbf16> to vector<16x16xbf16>
    %71 = vector.shape_cast %70 : vector<16x16xbf16> to vector<1x16x16xbf16>
    %72 = vector.extract_strided_slice %44 {offsets = [0, 144], sizes = [16, 16], strides = [1, 1]} : vector<16x384xbf16> to vector<16x16xbf16>
    %73 = vector.shape_cast %72 : vector<16x16xbf16> to vector<1x16x16xbf16>
    %74 = vector.extract_strided_slice %44 {offsets = [0, 272], sizes = [16, 16], strides = [1, 1]} : vector<16x384xbf16> to vector<16x16xbf16>
    %75 = vector.shape_cast %74 : vector<16x16xbf16> to vector<1x16x16xbf16>
    "tpu.trace_start"() <{level = 10 : i32, message = "bqd,bkd->bqk"}> : () -> ()
    %cst_26 = arith.constant dense<0.000000e+00> : vector<1x16x16xf32>
    %76 = tpu.matmul %71, %73, %cst_26 {dimension_numbers = #tpu.dot_dimension_numbers<[2], [2], [1], [1], [0, 0, 0, 1, 1, 1], [0], [0]>} : vector<1x16x16xbf16>, vector<1x16x16xbf16>, vector<1x16x16xf32> -> vector<1x16x16xf32>
    "tpu.trace_stop"() : () -> ()
    %77 = arith.addf %76, %47 : vector<1x16x16xf32>
    %cst_27 = arith.constant dense<0xFF800000> : vector<1x16xf32>
    %78 = vector.multi_reduction <maximumf>, %77, %cst_27 [2] : vector<1x16x16xf32> to vector<1x16xf32>
    %79 = vector.shape_cast %78 : vector<1x16xf32> to vector<1x16x1xf32>
    %80 = vector.broadcast %79 : vector<1x16x1xf32> to vector<1x16x16xf32>
    %81 = arith.subf %77, %80 : vector<1x16x16xf32>
    %82 = math.exp %81 : vector<1x16x16xf32>
    %cst_28 = arith.constant dense<0.000000e+00> : vector<1x16xf32>
    %83 = vector.multi_reduction <add>, %82, %cst_28 [2] : vector<1x16x16xf32> to vector<1x16xf32>
    %84 = vector.shape_cast %83 : vector<1x16xf32> to vector<1x16x1xf32>
    %85 = vector.broadcast %84 : vector<1x16x1xf32> to vector<1x16x16xf32>
    %86 = arith.divf %82, %85 : vector<1x16x16xf32>
    %87 = arith.truncf %86 : vector<1x16x16xf32> to vector<1x16x16xbf16>
    "tpu.trace_start"() <{level = 10 : i32, message = "bqk,bkd->bqd"}> : () -> ()
    %cst_29 = arith.constant dense<0.000000e+00> : vector<1x16x16xf32>
    %88 = tpu.matmul %87, %75, %cst_29 {dimension_numbers = #tpu.dot_dimension_numbers<[2], [1], [1], [2], [0, 0, 0, 1, 1, 2], [0], [0]>} : vector<1x16x16xbf16>, vector<1x16x16xbf16>, vector<1x16x16xf32> -> vector<1x16x16xf32>
    "tpu.trace_stop"() : () -> ()
    %89 = vector.shape_cast %88 : vector<1x16x16xf32> to vector<16x16xf32>
    %90 = arith.truncf %89 : vector<16x16xf32> to vector<16x16xbf16>
    %c0_30 = arith.constant 0 : index
    %c16 = arith.constant 16 : index
    %91 = vector.load %arg21[%c0_30, %c16] : memref<16x128xbf16, #tpu.memory_space<vmem>>, vector<16x16xbf16>
    tpu.vector_store %arg21[%c0_30, %c16], %90 {strides = array<i32>} : memref<16x128xbf16, #tpu.memory_space<vmem>>, vector<16x16xbf16>,
    %92 = vector.extract_strided_slice %44 {offsets = [0, 32], sizes = [16, 16], strides = [1, 1]} : vector<16x384xbf16> to vector<16x16xbf16>
    %93 = vector.shape_cast %92 : vector<16x16xbf16> to vector<1x16x16xbf16>
    %94 = vector.extract_strided_slice %44 {offsets = [0, 160], sizes = [16, 16], strides = [1, 1]} : vector<16x384xbf16> to vector<16x16xbf16>
    %95 = vector.shape_cast %94 : vector<16x16xbf16> to vector<1x16x16xbf16>
    %96 = vector.extract_strided_slice %44 {offsets = [0, 288], sizes = [16, 16], strides = [1, 1]} : vector<16x384xbf16> to vector<16x16xbf16>
    %97 = vector.shape_cast %96 : vector<16x16xbf16> to vector<1x16x16xbf16>
    "tpu.trace_start"() <{level = 10 : i32, message = "bqd,bkd->bqk"}> : () -> ()
    %cst_31 = arith.constant dense<0.000000e+00> : vector<1x16x16xf32>
    %98 = tpu.matmul %93, %95, %cst_31 {dimension_numbers = #tpu.dot_dimension_numbers<[2], [2], [1], [1], [0, 0, 0, 1, 1, 1], [0], [0]>} : vector<1x16x16xbf16>, vector<1x16x16xbf16>, vector<1x16x16xf32> -> vector<1x16x16xf32>
    "tpu.trace_stop"() : () -> ()
    %99 = arith.addf %98, %47 : vector<1x16x16xf32>
    %cst_32 = arith.constant dense<0xFF800000> : vector<1x16xf32>
    %100 = vector.multi_reduction <maximumf>, %99, %cst_32 [2] : vector<1x16x16xf32> to vector<1x16xf32>
    %101 = vector.shape_cast %100 : vector<1x16xf32> to vector<1x16x1xf32>
    %102 = vector.broadcast %101 : vector<1x16x1xf32> to vector<1x16x16xf32>
    %103 = arith.subf %99, %102 : vector<1x16x16xf32>
    %104 = math.exp %103 : vector<1x16x16xf32>
    %cst_33 = arith.constant dense<0.000000e+00> : vector<1x16xf32>
    %105 = vector.multi_reduction <add>, %104, %cst_33 [2] : vector<1x16x16xf32> to vector<1x16xf32>
    %106 = vector.shape_cast %105 : vector<1x16xf32> to vector<1x16x1xf32>
    %107 = vector.broadcast %106 : vector<1x16x1xf32> to vector<1x16x16xf32>
    %108 = arith.divf %104, %107 : vector<1x16x16xf32>
    %109 = arith.truncf %108 : vector<1x16x16xf32> to vector<1x16x16xbf16>
    "tpu.trace_start"() <{level = 10 : i32, message = "bqk,bkd->bqd"}> : () -> ()
    %cst_34 = arith.constant dense<0.000000e+00> : vector<1x16x16xf32>
    %110 = tpu.matmul %109, %97, %cst_34 {dimension_numbers = #tpu.dot_dimension_numbers<[2], [1], [1], [2], [0, 0, 0, 1, 1, 2], [0], [0]>} : vector<1x16x16xbf16>, vector<1x16x16xbf16>, vector<1x16x16xf32> -> vector<1x16x16xf32>
    "tpu.trace_stop"() : () -> ()
    %111 = vector.shape_cast %110 : vector<1x16x16xf32> to vector<16x16xf32>
    %112 = arith.truncf %111 : vector<16x16xf32> to vector<16x16xbf16>
    %c0_35 = arith.constant 0 : index
    %c32 = arith.constant 32 : index
    %113 = vector.load %arg21[%c0_35, %c32] : memref<16x128xbf16, #tpu.memory_space<vmem>>, vector<16x16xbf16>
    tpu.vector_store %arg21[%c0_35, %c32], %112 {strides = array<i32>} : memref<16x128xbf16, #tpu.memory_space<vmem>>, vector<16x16xbf16>,
    %114 = vector.extract_strided_slice %44 {offsets = [0, 48], sizes = [16, 16], strides = [1, 1]} : vector<16x384xbf16> to vector<16x16xbf16>
    %115 = vector.shape_cast %114 : vector<16x16xbf16> to vector<1x16x16xbf16>
    %116 = vector.extract_strided_slice %44 {offsets = [0, 176], sizes = [16, 16], strides = [1, 1]} : vector<16x384xbf16> to vector<16x16xbf16>
    %117 = vector.shape_cast %116 : vector<16x16xbf16> to vector<1x16x16xbf16>
    %118 = vector.extract_strided_slice %44 {offsets = [0, 304], sizes = [16, 16], strides = [1, 1]} : vector<16x384xbf16> to vector<16x16xbf16>
    %119 = vector.shape_cast %118 : vector<16x16xbf16> to vector<1x16x16xbf16>
    "tpu.trace_start"() <{level = 10 : i32, message = "bqd,bkd->bqk"}> : () -> ()
    %cst_36 = arith.constant dense<0.000000e+00> : vector<1x16x16xf32>
    %120 = tpu.matmul %115, %117, %cst_36 {dimension_numbers = #tpu.dot_dimension_numbers<[2], [2], [1], [1], [0, 0, 0, 1, 1, 1], [0], [0]>} : vector<1x16x16xbf16>, vector<1x16x16xbf16>, vector<1x16x16xf32> -> vector<1x16x16xf32>
    "tpu.trace_stop"() : () -> ()
    %121 = arith.addf %120, %47 : vector<1x16x16xf32>
    %cst_37 = arith.constant dense<0xFF800000> : vector<1x16xf32>
    %122 = vector.multi_reduction <maximumf>, %121, %cst_37 [2] : vector<1x16x16xf32> to vector<1x16xf32>
    %123 = vector.shape_cast %122 : vector<1x16xf32> to vector<1x16x1xf32>
    %124 = vector.broadcast %123 : vector<1x16x1xf32> to vector<1x16x16xf32>
    %125 = arith.subf %121, %124 : vector<1x16x16xf32>
    %126 = math.exp %125 : vector<1x16x16xf32>
    %cst_38 = arith.constant dense<0.000000e+00> : vector<1x16xf32>
    %127 = vector.multi_reduction <add>, %126, %cst_38 [2] : vector<1x16x16xf32> to vector<1x16xf32>
    %128 = vector.shape_cast %127 : vector<1x16xf32> to vector<1x16x1xf32>
    %129 = vector.broadcast %128 : vector<1x16x1xf32> to vector<1x16x16xf32>
    %130 = arith.divf %126, %129 : vector<1x16x16xf32>
    %131 = arith.truncf %130 : vector<1x16x16xf32> to vector<1x16x16xbf16>
    "tpu.trace_start"() <{level = 10 : i32, message = "bqk,bkd->bqd"}> : () -> ()
    %cst_39 = arith.constant dense<0.000000e+00> : vector<1x16x16xf32>
    %132 = tpu.matmul %131, %119, %cst_39 {dimension_numbers = #tpu.dot_dimension_numbers<[2], [1], [1], [2], [0, 0, 0, 1, 1, 2], [0], [0]>} : vector<1x16x16xbf16>, vector<1x16x16xbf16>, vector<1x16x16xf32> -> vector<1x16x16xf32>
    "tpu.trace_stop"() : () -> ()
    %133 = vector.shape_cast %132 : vector<1x16x16xf32> to vector<16x16xf32>
    %134 = arith.truncf %133 : vector<16x16xf32> to vector<16x16xbf16>
    %c0_40 = arith.constant 0 : index
    %c48 = arith.constant 48 : index
    %135 = vector.load %arg21[%c0_40, %c48] : memref<16x128xbf16, #tpu.memory_space<vmem>>, vector<16x16xbf16>
    tpu.vector_store %arg21[%c0_40, %c48], %134 {strides = array<i32>} : memref<16x128xbf16, #tpu.memory_space<vmem>>, vector<16x16xbf16>,
    %136 = vector.extract_strided_slice %44 {offsets = [0, 64], sizes = [16, 16], strides = [1, 1]} : vector<16x384xbf16> to vector<16x16xbf16>
    %137 = vector.shape_cast %136 : vector<16x16xbf16> to vector<1x16x16xbf16>
    %138 = vector.extract_strided_slice %44 {offsets = [0, 192], sizes = [16, 16], strides = [1, 1]} : vector<16x384xbf16> to vector<16x16xbf16>
    %139 = vector.shape_cast %138 : vector<16x16xbf16> to vector<1x16x16xbf16>
    %140 = vector.extract_strided_slice %44 {offsets = [0, 320], sizes = [16, 16], strides = [1, 1]} : vector<16x384xbf16> to vector<16x16xbf16>
    %141 = vector.shape_cast %140 : vector<16x16xbf16> to vector<1x16x16xbf16>
    "tpu.trace_start"() <{level = 10 : i32, message = "bqd,bkd->bqk"}> : () -> ()
    %cst_41 = arith.constant dense<0.000000e+00> : vector<1x16x16xf32>
    %142 = tpu.matmul %137, %139, %cst_41 {dimension_numbers = #tpu.dot_dimension_numbers<[2], [2], [1], [1], [0, 0, 0, 1, 1, 1], [0], [0]>} : vector<1x16x16xbf16>, vector<1x16x16xbf16>, vector<1x16x16xf32> -> vector<1x16x16xf32>
    "tpu.trace_stop"() : () -> ()
    %143 = arith.addf %142, %47 : vector<1x16x16xf32>
    %cst_42 = arith.constant dense<0xFF800000> : vector<1x16xf32>
    %144 = vector.multi_reduction <maximumf>, %143, %cst_42 [2] : vector<1x16x16xf32> to vector<1x16xf32>
    %145 = vector.shape_cast %144 : vector<1x16xf32> to vector<1x16x1xf32>
    %146 = vector.broadcast %145 : vector<1x16x1xf32> to vector<1x16x16xf32>
    %147 = arith.subf %143, %146 : vector<1x16x16xf32>
    %148 = math.exp %147 : vector<1x16x16xf32>
    %cst_43 = arith.constant dense<0.000000e+00> : vector<1x16xf32>
    %149 = vector.multi_reduction <add>, %148, %cst_43 [2] : vector<1x16x16xf32> to vector<1x16xf32>
    %150 = vector.shape_cast %149 : vector<1x16xf32> to vector<1x16x1xf32>
    %151 = vector.broadcast %150 : vector<1x16x1xf32> to vector<1x16x16xf32>
    %152 = arith.divf %148, %151 : vector<1x16x16xf32>
    %153 = arith.truncf %152 : vector<1x16x16xf32> to vector<1x16x16xbf16>
    "tpu.trace_start"() <{level = 10 : i32, message = "bqk,bkd->bqd"}> : () -> ()
    %cst_44 = arith.constant dense<0.000000e+00> : vector<1x16x16xf32>
    %154 = tpu.matmul %153, %141, %cst_44 {dimension_numbers = #tpu.dot_dimension_numbers<[2], [1], [1], [2], [0, 0, 0, 1, 1, 2], [0], [0]>} : vector<1x16x16xbf16>, vector<1x16x16xbf16>, vector<1x16x16xf32> -> vector<1x16x16xf32>
    "tpu.trace_stop"() : () -> ()
    %155 = vector.shape_cast %154 : vector<1x16x16xf32> to vector<16x16xf32>
    %156 = arith.truncf %155 : vector<16x16xf32> to vector<16x16xbf16>
    %c0_45 = arith.constant 0 : index
    %c64 = arith.constant 64 : index
    %157 = vector.load %arg21[%c0_45, %c64] : memref<16x128xbf16, #tpu.memory_space<vmem>>, vector<16x16xbf16>
    tpu.vector_store %arg21[%c0_45, %c64], %156 {strides = array<i32>} : memref<16x128xbf16, #tpu.memory_space<vmem>>, vector<16x16xbf16>,
    %158 = vector.extract_strided_slice %44 {offsets = [0, 80], sizes = [16, 16], strides = [1, 1]} : vector<16x384xbf16> to vector<16x16xbf16>
    %159 = vector.shape_cast %158 : vector<16x16xbf16> to vector<1x16x16xbf16>
    %160 = vector.extract_strided_slice %44 {offsets = [0, 208], sizes = [16, 16], strides = [1, 1]} : vector<16x384xbf16> to vector<16x16xbf16>
    %161 = vector.shape_cast %160 : vector<16x16xbf16> to vector<1x16x16xbf16>
    %162 = vector.extract_strided_slice %44 {offsets = [0, 336], sizes = [16, 16], strides = [1, 1]} : vector<16x384xbf16> to vector<16x16xbf16>
    %163 = vector.shape_cast %162 : vector<16x16xbf16> to vector<1x16x16xbf16>
    "tpu.trace_start"() <{level = 10 : i32, message = "bqd,bkd->bqk"}> : () -> ()
    %cst_46 = arith.constant dense<0.000000e+00> : vector<1x16x16xf32>
    %164 = tpu.matmul %159, %161, %cst_46 {dimension_numbers = #tpu.dot_dimension_numbers<[2], [2], [1], [1], [0, 0, 0, 1, 1, 1], [0], [0]>} : vector<1x16x16xbf16>, vector<1x16x16xbf16>, vector<1x16x16xf32> -> vector<1x16x16xf32>
    "tpu.trace_stop"() : () -> ()
    %165 = arith.addf %164, %47 : vector<1x16x16xf32>
    %cst_47 = arith.constant dense<0xFF800000> : vector<1x16xf32>
    %166 = vector.multi_reduction <maximumf>, %165, %cst_47 [2] : vector<1x16x16xf32> to vector<1x16xf32>
    %167 = vector.shape_cast %166 : vector<1x16xf32> to vector<1x16x1xf32>
    %168 = vector.broadcast %167 : vector<1x16x1xf32> to vector<1x16x16xf32>
    %169 = arith.subf %165, %168 : vector<1x16x16xf32>
    %170 = math.exp %169 : vector<1x16x16xf32>
    %cst_48 = arith.constant dense<0.000000e+00> : vector<1x16xf32>
    %171 = vector.multi_reduction <add>, %170, %cst_48 [2] : vector<1x16x16xf32> to vector<1x16xf32>
    %172 = vector.shape_cast %171 : vector<1x16xf32> to vector<1x16x1xf32>
    %173 = vector.broadcast %172 : vector<1x16x1xf32> to vector<1x16x16xf32>
    %174 = arith.divf %170, %173 : vector<1x16x16xf32>
    %175 = arith.truncf %174 : vector<1x16x16xf32> to vector<1x16x16xbf16>
    "tpu.trace_start"() <{level = 10 : i32, message = "bqk,bkd->bqd"}> : () -> ()
    %cst_49 = arith.constant dense<0.000000e+00> : vector<1x16x16xf32>
    %176 = tpu.matmul %175, %163, %cst_49 {dimension_numbers = #tpu.dot_dimension_numbers<[2], [1], [1], [2], [0, 0, 0, 1, 1, 2], [0], [0]>} : vector<1x16x16xbf16>, vector<1x16x16xbf16>, vector<1x16x16xf32> -> vector<1x16x16xf32>
    "tpu.trace_stop"() : () -> ()
    %177 = vector.shape_cast %176 : vector<1x16x16xf32> to vector<16x16xf32>
    %178 = arith.truncf %177 : vector<16x16xf32> to vector<16x16xbf16>
    %c0_50 = arith.constant 0 : index
    %c80 = arith.constant 80 : index
    %179 = vector.load %arg21[%c0_50, %c80] : memref<16x128xbf16, #tpu.memory_space<vmem>>, vector<16x16xbf16>
    tpu.vector_store %arg21[%c0_50, %c80], %178 {strides = array<i32>} : memref<16x128xbf16, #tpu.memory_space<vmem>>, vector<16x16xbf16>,
    %180 = vector.extract_strided_slice %44 {offsets = [0, 96], sizes = [16, 16], strides = [1, 1]} : vector<16x384xbf16> to vector<16x16xbf16>
    %181 = vector.shape_cast %180 : vector<16x16xbf16> to vector<1x16x16xbf16>
    %182 = vector.extract_strided_slice %44 {offsets = [0, 224], sizes = [16, 16], strides = [1, 1]} : vector<16x384xbf16> to vector<16x16xbf16>
    %183 = vector.shape_cast %182 : vector<16x16xbf16> to vector<1x16x16xbf16>
    %184 = vector.extract_strided_slice %44 {offsets = [0, 352], sizes = [16, 16], strides = [1, 1]} : vector<16x384xbf16> to vector<16x16xbf16>
    %185 = vector.shape_cast %184 : vector<16x16xbf16> to vector<1x16x16xbf16>
    "tpu.trace_start"() <{level = 10 : i32, message = "bqd,bkd->bqk"}> : () -> ()
    %cst_51 = arith.constant dense<0.000000e+00> : vector<1x16x16xf32>
    %186 = tpu.matmul %181, %183, %cst_51 {dimension_numbers = #tpu.dot_dimension_numbers<[2], [2], [1], [1], [0, 0, 0, 1, 1, 1], [0], [0]>} : vector<1x16x16xbf16>, vector<1x16x16xbf16>, vector<1x16x16xf32> -> vector<1x16x16xf32>
    "tpu.trace_stop"() : () -> ()
    %187 = arith.addf %186, %47 : vector<1x16x16xf32>
    %cst_52 = arith.constant dense<0xFF800000> : vector<1x16xf32>
    %188 = vector.multi_reduction <maximumf>, %187, %cst_52 [2] : vector<1x16x16xf32> to vector<1x16xf32>
    %189 = vector.shape_cast %188 : vector<1x16xf32> to vector<1x16x1xf32>
    %190 = vector.broadcast %189 : vector<1x16x1xf32> to vector<1x16x16xf32>
    %191 = arith.subf %187, %190 : vector<1x16x16xf32>
    %192 = math.exp %191 : vector<1x16x16xf32>
    %cst_53 = arith.constant dense<0.000000e+00> : vector<1x16xf32>
    %193 = vector.multi_reduction <add>, %192, %cst_53 [2] : vector<1x16x16xf32> to vector<1x16xf32>
    %194 = vector.shape_cast %193 : vector<1x16xf32> to vector<1x16x1xf32>
    %195 = vector.broadcast %194 : vector<1x16x1xf32> to vector<1x16x16xf32>
    %196 = arith.divf %192, %195 : vector<1x16x16xf32>
    %197 = arith.truncf %196 : vector<1x16x16xf32> to vector<1x16x16xbf16>
    "tpu.trace_start"() <{level = 10 : i32, message = "bqk,bkd->bqd"}> : () -> ()
    %cst_54 = arith.constant dense<0.000000e+00> : vector<1x16x16xf32>
    %198 = tpu.matmul %197, %185, %cst_54 {dimension_numbers = #tpu.dot_dimension_numbers<[2], [1], [1], [2], [0, 0, 0, 1, 1, 2], [0], [0]>} : vector<1x16x16xbf16>, vector<1x16x16xbf16>, vector<1x16x16xf32> -> vector<1x16x16xf32>
    "tpu.trace_stop"() : () -> ()
    %199 = vector.shape_cast %198 : vector<1x16x16xf32> to vector<16x16xf32>
    %200 = arith.truncf %199 : vector<16x16xf32> to vector<16x16xbf16>
    %c0_55 = arith.constant 0 : index
    %c96 = arith.constant 96 : index
    %201 = vector.load %arg21[%c0_55, %c96] : memref<16x128xbf16, #tpu.memory_space<vmem>>, vector<16x16xbf16>
    tpu.vector_store %arg21[%c0_55, %c96], %200 {strides = array<i32>} : memref<16x128xbf16, #tpu.memory_space<vmem>>, vector<16x16xbf16>,
    %202 = vector.extract_strided_slice %44 {offsets = [0, 112], sizes = [16, 16], strides = [1, 1]} : vector<16x384xbf16> to vector<16x16xbf16>
    %203 = vector.shape_cast %202 : vector<16x16xbf16> to vector<1x16x16xbf16>
    %204 = vector.extract_strided_slice %44 {offsets = [0, 240], sizes = [16, 16], strides = [1, 1]} : vector<16x384xbf16> to vector<16x16xbf16>
    %205 = vector.shape_cast %204 : vector<16x16xbf16> to vector<1x16x16xbf16>
    %206 = vector.extract_strided_slice %44 {offsets = [0, 368], sizes = [16, 16], strides = [1, 1]} : vector<16x384xbf16> to vector<16x16xbf16>
    %207 = vector.shape_cast %206 : vector<16x16xbf16> to vector<1x16x16xbf16>
    "tpu.trace_start"() <{level = 10 : i32, message = "bqd,bkd->bqk"}> : () -> ()
    %cst_56 = arith.constant dense<0.000000e+00> : vector<1x16x16xf32>
    %208 = tpu.matmul %203, %205, %cst_56 {dimension_numbers = #tpu.dot_dimension_numbers<[2], [2], [1], [1], [0, 0, 0, 1, 1, 1], [0], [0]>} : vector<1x16x16xbf16>, vector<1x16x16xbf16>, vector<1x16x16xf32> -> vector<1x16x16xf32>
    "tpu.trace_stop"() : () -> ()
    %209 = arith.addf %208, %47 : vector<1x16x16xf32>
    %cst_57 = arith.constant dense<0xFF800000> : vector<1x16xf32>
    %210 = vector.multi_reduction <maximumf>, %209, %cst_57 [2] : vector<1x16x16xf32> to vector<1x16xf32>
    %211 = vector.shape_cast %210 : vector<1x16xf32> to vector<1x16x1xf32>
    %212 = vector.broadcast %211 : vector<1x16x1xf32> to vector<1x16x16xf32>
    %213 = arith.subf %209, %212 : vector<1x16x16xf32>
    %214 = math.exp %213 : vector<1x16x16xf32>
    %cst_58 = arith.constant dense<0.000000e+00> : vector<1x16xf32>
    %215 = vector.multi_reduction <add>, %214, %cst_58 [2] : vector<1x16x16xf32> to vector<1x16xf32>
    %216 = vector.shape_cast %215 : vector<1x16xf32> to vector<1x16x1xf32>
    %217 = vector.broadcast %216 : vector<1x16x1xf32> to vector<1x16x16xf32>
    %218 = arith.divf %214, %217 : vector<1x16x16xf32>
    %219 = arith.truncf %218 : vector<1x16x16xf32> to vector<1x16x16xbf16>
    "tpu.trace_start"() <{level = 10 : i32, message = "bqk,bkd->bqd"}> : () -> ()
    %cst_59 = arith.constant dense<0.000000e+00> : vector<1x16x16xf32>
    %220 = tpu.matmul %219, %207, %cst_59 {dimension_numbers = #tpu.dot_dimension_numbers<[2], [1], [1], [2], [0, 0, 0, 1, 1, 2], [0], [0]>} : vector<1x16x16xbf16>, vector<1x16x16xbf16>, vector<1x16x16xf32> -> vector<1x16x16xf32>
    "tpu.trace_stop"() : () -> ()
    %221 = vector.shape_cast %220 : vector<1x16x16xf32> to vector<16x16xf32>
    %222 = arith.truncf %221 : vector<16x16xf32> to vector<16x16xbf16>
    %c0_60 = arith.constant 0 : index
    %c112 = arith.constant 112 : index
    %223 = vector.load %arg21[%c0_60, %c112] : memref<16x128xbf16, #tpu.memory_space<vmem>>, vector<16x16xbf16>
    tpu.vector_store %arg21[%c0_60, %c112], %222 {strides = array<i32>} : memref<16x128xbf16, #tpu.memory_space<vmem>>, vector<16x16xbf16>,
    %c0_61 = arith.constant 0 : index
    %c0_62 = arith.constant 0 : index
    %224 = vector.load %arg21[%c0_61, %c0_62] : memref<16x128xbf16, #tpu.memory_space<vmem>>, vector<16x128xbf16>
    %225 = arith.index_cast %arg1 : i32 to index
    %c0_63 = arith.constant 0 : index
    %c0_64 = arith.constant 0 : index
    %226 = vector.load %arg8[%225, %c0_63, %c0_64] : memref<2x128x128xbf16, #tpu.memory_space<vmem>>, vector<1x128x128xbf16>
    %227 = vector.shape_cast %226 : vector<1x128x128xbf16> to vector<128x128xbf16>
    %cst_65 = arith.constant dense<0.000000e+00> : vector<16x128xf32>
    %228 = tpu.matmul %224, %227, %cst_65 {dimension_numbers = #tpu.dot_dimension_numbers<[1], [0], [0], [1], [0, 0, 1, 1], [], []>} : vector<16x128xbf16>, vector<128x128xbf16>, vector<16x128xf32> -> vector<16x128xf32>
    %229 = arith.addf %3, %228 : vector<16x128xf32>
    %230 = arith.index_cast %arg1 : i32 to index
    %c0_66 = arith.constant 0 : index
    %c0_67 = arith.constant 0 : index
    %231 = vector.load %arg9[%230, %c0_66, %c0_67] : memref<2x1x128xf32, #tpu.memory_space<vmem>>, vector<1x1x128xf32>
    %232 = vector.shape_cast %231 : vector<1x1x128xf32> to vector<1x128xf32>
    %233 = vector.broadcast %232 : vector<1x128xf32> to vector<16x128xf32>
    %234 = arith.addf %229, %233 : vector<16x128xf32>
    %235 = arith.index_cast %arg1 : i32 to index
    %c0_68 = arith.constant 0 : index
    %c0_69 = arith.constant 0 : index
    %236 = vector.load %arg10[%235, %c0_68, %c0_69] : memref<2x1x128xf32, #tpu.memory_space<vmem>>, vector<1x1x128xf32>
    %237 = vector.shape_cast %236 : vector<1x1x128xf32> to vector<1x128xf32>
    %238 = arith.index_cast %arg1 : i32 to index
    %c0_70 = arith.constant 0 : index
    %c0_71 = arith.constant 0 : index
    %239 = vector.load %arg11[%238, %c0_70, %c0_71] : memref<2x1x128xf32, #tpu.memory_space<vmem>>, vector<1x1x128xf32>
    %240 = vector.shape_cast %239 : vector<1x1x128xf32> to vector<1x128xf32>
    %cst_72 = arith.constant dense<0.000000e+00> : vector<16xf32>
    %241 = vector.multi_reduction <add>, %234, %cst_72 [1] : vector<16x128xf32> to vector<16xf32>
    %242 = vector.shape_cast %241 : vector<16xf32> to vector<16x1xf32>
    %cst_73 = arith.constant 1.280000e+02 : f32
    %243 = vector.broadcast %cst_73 : f32 to vector<16x1xf32>
    %244 = arith.divf %242, %243 : vector<16x1xf32>
    %245 = arith.mulf %234, %234 : vector<16x128xf32>
    %cst_74 = arith.constant dense<0.000000e+00> : vector<16xf32>
    %246 = vector.multi_reduction <add>, %245, %cst_74 [1] : vector<16x128xf32> to vector<16xf32>
    %247 = vector.shape_cast %246 : vector<16xf32> to vector<16x1xf32>
    %cst_75 = arith.constant 1.280000e+02 : f32
    %248 = vector.broadcast %cst_75 : f32 to vector<16x1xf32>
    %249 = arith.divf %247, %248 : vector<16x1xf32>
    %250 = arith.mulf %244, %244 : vector<16x1xf32>
    %251 = arith.subf %249, %250 : vector<16x1xf32>
    %cst_76 = arith.constant 0.000000e+00 : f32
    %252 = vector.broadcast %cst_76 : f32 to vector<16x1xf32>
    %253 = arith.maximumf %251, %252 : vector<16x1xf32>
    %254 = vector.broadcast %244 : vector<16x1xf32> to vector<16x128xf32>
    %255 = arith.subf %234, %254 : vector<16x128xf32>
    %cst_77 = arith.constant 9.99999974E-6 : f32
    %256 = vector.broadcast %cst_77 : f32 to vector<16x1xf32>
    %257 = arith.addf %253, %256 : vector<16x1xf32>
    %258 = math.rsqrt %257 : vector<16x1xf32>
    %259 = vector.broadcast %258 : vector<16x1xf32> to vector<16x128xf32>
    %260 = arith.mulf %255, %259 : vector<16x128xf32>
    %261 = vector.broadcast %237 : vector<1x128xf32> to vector<16x128xf32>
    %262 = arith.mulf %260, %261 : vector<16x128xf32>
    %263 = vector.broadcast %240 : vector<1x128xf32> to vector<16x128xf32>
    %264 = arith.addf %262, %263 : vector<16x128xf32>
    %265 = arith.truncf %264 : vector<16x128xf32> to vector<16x128xbf16>
    %266 = arith.index_cast %arg1 : i32 to index
    %c0_78 = arith.constant 0 : index
    %c0_79 = arith.constant 0 : index
    %267 = vector.load %arg12[%266, %c0_78, %c0_79] : memref<2x128x512xbf16, #tpu.memory_space<vmem>>, vector<1x128x512xbf16>
    %268 = vector.shape_cast %267 : vector<1x128x512xbf16> to vector<128x512xbf16>
    %cst_80 = arith.constant dense<0.000000e+00> : vector<16x512xf32>
    %269 = tpu.matmul %265, %268, %cst_80 {dimension_numbers = #tpu.dot_dimension_numbers<[1], [0], [0], [1], [0, 0, 1, 1], [], []>} : vector<16x128xbf16>, vector<128x512xbf16>, vector<16x512xf32> -> vector<16x512xf32>
    %270 = arith.index_cast %arg1 : i32 to index
    %c0_81 = arith.constant 0 : index
    %c0_82 = arith.constant 0 : index
    %271 = vector.load %arg13[%270, %c0_81, %c0_82] : memref<2x1x512xf32, #tpu.memory_space<vmem>>, vector<1x1x512xf32>
    %272 = vector.shape_cast %271 : vector<1x1x512xf32> to vector<1x512xf32>
    %273 = vector.broadcast %272 : vector<1x512xf32> to vector<16x512xf32>
    %274 = arith.addf %269, %273 : vector<16x512xf32>
    %275 = arith.mulf %274, %274 : vector<16x512xf32>
    %276 = arith.mulf %274, %275 : vector<16x512xf32>
    %cst_83 = arith.constant 4.471500e-02 : f32
    %277 = vector.broadcast %cst_83 : f32 to vector<16x512xf32>
    %278 = arith.mulf %277, %276 : vector<16x512xf32>
    %279 = arith.addf %274, %278 : vector<16x512xf32>
    %cst_84 = arith.constant 0.797884583 : f32
    %280 = vector.broadcast %cst_84 : f32 to vector<16x512xf32>
    %281 = arith.mulf %280, %279 : vector<16x512xf32>
    %282 = math.tanh %281 : vector<16x512xf32>
    %cst_85 = arith.constant 1.000000e+00 : f32
    %283 = vector.broadcast %cst_85 : f32 to vector<16x512xf32>
    %284 = arith.addf %283, %282 : vector<16x512xf32>
    %cst_86 = arith.constant 5.000000e-01 : f32
    %285 = vector.broadcast %cst_86 : f32 to vector<16x512xf32>
    %286 = arith.mulf %285, %284 : vector<16x512xf32>
    %287 = arith.mulf %274, %286 : vector<16x512xf32>
    %288 = arith.truncf %287 : vector<16x512xf32> to vector<16x512xbf16>
    %289 = arith.index_cast %arg1 : i32 to index
    %c0_87 = arith.constant 0 : index
    %c0_88 = arith.constant 0 : index
    %290 = vector.load %arg14[%289, %c0_87, %c0_88] : memref<2x512x128xbf16, #tpu.memory_space<vmem>>, vector<1x512x128xbf16>
    %291 = vector.shape_cast %290 : vector<1x512x128xbf16> to vector<512x128xbf16>
    %cst_89 = arith.constant dense<0.000000e+00> : vector<16x128xf32>
    %292 = tpu.matmul %288, %291, %cst_89 {dimension_numbers = #tpu.dot_dimension_numbers<[1], [0], [0], [1], [0, 0, 1, 1], [], []>} : vector<16x512xbf16>, vector<512x128xbf16>, vector<16x128xf32> -> vector<16x128xf32>
    %293 = arith.addf %234, %292 : vector<16x128xf32>
    %294 = arith.index_cast %arg1 : i32 to index
    %c0_90 = arith.constant 0 : index
    %c0_91 = arith.constant 0 : index
    %295 = vector.load %arg15[%294, %c0_90, %c0_91] : memref<2x1x128xf32, #tpu.memory_space<vmem>>, vector<1x1x128xf32>
    %296 = vector.shape_cast %295 : vector<1x1x128xf32> to vector<1x128xf32>
    %297 = vector.broadcast %296 : vector<1x128xf32> to vector<16x128xf32>
    %298 = arith.addf %293, %297 : vector<16x128xf32>
    %c0_92 = arith.constant 0 : index
    %c0_93 = arith.constant 0 : index
    %299 = vector.load %arg20[%c0_92, %c0_93] : memref<16x128xf32, #tpu.memory_space<vmem>>, vector<16x128xf32>
    tpu.vector_store %arg20[%c0_92, %c0_93], %298 {strides = array<i32>} : memref<16x128xf32, #tpu.memory_space<vmem>>, vector<16x128xf32>,
    %c1_i32 = arith.constant 1 : i32
    %300 = arith.cmpi eq, %arg1, %c1_i32 : i32
    %301 = arith.extui %300 : i1 to i32
    %c0_i32_94 = arith.constant 0 : i32
    %302 = arith.cmpi ne, %301, %c0_i32_94 : i32
    scf.if %302 {
      %c0_95 = arith.constant 0 : index
      %c0_96 = arith.constant 0 : index
      %303 = vector.load %arg20[%c0_95, %c0_96] : memref<16x128xf32, #tpu.memory_space<vmem>>, vector<16x128xf32>
      %c0_97 = arith.constant 0 : index
      %c0_98 = arith.constant 0 : index
      %304 = vector.load %arg16[%c0_97, %c0_98] : memref<1x128xf32, #tpu.memory_space<vmem>>, vector<1x128xf32>
      %c0_99 = arith.constant 0 : index
      %c0_100 = arith.constant 0 : index
      %305 = vector.load %arg17[%c0_99, %c0_100] : memref<1x128xf32, #tpu.memory_space<vmem>>, vector<1x128xf32>
      %cst_101 = arith.constant dense<0.000000e+00> : vector<16xf32>
      %306 = vector.multi_reduction <add>, %303, %cst_101 [1] : vector<16x128xf32> to vector<16xf32>
      %307 = vector.shape_cast %306 : vector<16xf32> to vector<16x1xf32>
      %cst_102 = arith.constant 1.280000e+02 : f32
      %308 = vector.broadcast %cst_102 : f32 to vector<16x1xf32>
      %309 = arith.divf %307, %308 : vector<16x1xf32>
      %310 = arith.mulf %303, %303 : vector<16x128xf32>
      %cst_103 = arith.constant dense<0.000000e+00> : vector<16xf32>
      %311 = vector.multi_reduction <add>, %310, %cst_103 [1] : vector<16x128xf32> to vector<16xf32>
      %312 = vector.shape_cast %311 : vector<16xf32> to vector<16x1xf32>
      %cst_104 = arith.constant 1.280000e+02 : f32
      %313 = vector.broadcast %cst_104 : f32 to vector<16x1xf32>
      %314 = arith.divf %312, %313 : vector<16x1xf32>
      %315 = arith.mulf %309, %309 : vector<16x1xf32>
      %316 = arith.subf %314, %315 : vector<16x1xf32>
      %cst_105 = arith.constant 0.000000e+00 : f32
      %317 = vector.broadcast %cst_105 : f32 to vector<16x1xf32>
      %318 = arith.maximumf %316, %317 : vector<16x1xf32>
      %319 = vector.broadcast %309 : vector<16x1xf32> to vector<16x128xf32>
      %320 = arith.subf %303, %319 : vector<16x128xf32>
      %cst_106 = arith.constant 9.99999974E-6 : f32
      %321 = vector.broadcast %cst_106 : f32 to vector<16x1xf32>
      %322 = arith.addf %318, %321 : vector<16x1xf32>
      %323 = math.rsqrt %322 : vector<16x1xf32>
      %324 = vector.broadcast %323 : vector<16x1xf32> to vector<16x128xf32>
      %325 = arith.mulf %320, %324 : vector<16x128xf32>
      %326 = vector.broadcast %304 : vector<1x128xf32> to vector<16x128xf32>
      %327 = arith.mulf %325, %326 : vector<16x128xf32>
      %328 = vector.broadcast %305 : vector<1x128xf32> to vector<16x128xf32>
      %329 = arith.addf %327, %328 : vector<16x128xf32>
      %330 = arith.truncf %329 : vector<16x128xf32> to vector<16x128xbf16>
      %c0_107 = arith.constant 0 : index
      %c0_108 = arith.constant 0 : index
      %331 = vector.load %arg18[%c0_107, %c0_108] : memref<128x128xbf16, #tpu.memory_space<vmem>>, vector<128x128xbf16>
      %cst_109 = arith.constant dense<0.000000e+00> : vector<16x128xf32>
      %332 = tpu.matmul %330, %331, %cst_109 {dimension_numbers = #tpu.dot_dimension_numbers<[1], [0], [0], [1], [0, 0, 1, 1], [], []>} : vector<16x128xbf16>, vector<128x128xbf16>, vector<16x128xf32> -> vector<16x128xf32>
      %333 = vector.shape_cast %332 : vector<16x128xf32> to vector<1x16x128xf32>
      %c0_110 = arith.constant 0 : index
      %c0_111 = arith.constant 0 : index
      %c0_112 = arith.constant 0 : index
      %334 = vector.load %arg19[%c0_110, %c0_111, %c0_112] : memref<1x16x128xf32, #tpu.memory_space<vmem>>, vector<1x16x128xf32>
      tpu.vector_store %arg19[%c0_110, %c0_111, %c0_112], %333 {strides = array<i32>} : memref<1x16x128xf32, #tpu.memory_space<vmem>>, vector<1x16x128xf32>,
    } else {
    }
    return
  }
  func.func @transform_0(%arg0: i32, %arg1: i32) -> (i32, i32, i32) {
    %c0_i32 = arith.constant 0 : i32
    %c0_i32_0 = arith.constant 0 : i32
    %c0_i32_1 = arith.constant 0 : i32
    return %arg0, %c0_i32, %c0_i32_0 : i32, i32, i32
  }
  func.func @transform_1(%arg0: i32, %arg1: i32) -> (i32, i32, i32, i32) {
    %c0_i32 = arith.constant 0 : i32
    %c0_i32_0 = arith.constant 0 : i32
    %c0_i32_1 = arith.constant 0 : i32
    %c0_i32_2 = arith.constant 0 : i32
    %c0_i32_3 = arith.constant 0 : i32
    return %c0_i32, %c0_i32_0, %c0_i32_1, %c0_i32_2 : i32, i32, i32, i32
  }
  func.func @transform_2(%arg0: i32, %arg1: i32) -> (i32, i32, i32) {
    %c0_i32 = arith.constant 0 : i32
    %c0_i32_0 = arith.constant 0 : i32
    %c0_i32_1 = arith.constant 0 : i32
    %c0_i32_2 = arith.constant 0 : i32
    return %c0_i32, %c0_i32_0, %c0_i32_1 : i32, i32, i32
  }
  func.func @transform_3(%arg0: i32, %arg1: i32) -> (i32, i32, i32) {
    %c0_i32 = arith.constant 0 : i32
    %c0_i32_0 = arith.constant 0 : i32
    %c0_i32_1 = arith.constant 0 : i32
    %c0_i32_2 = arith.constant 0 : i32
    return %c0_i32, %c0_i32_0, %c0_i32_1 : i32, i32, i32
  }
  func.func @transform_4(%arg0: i32, %arg1: i32) -> (i32, i32, i32) {
    %c0_i32 = arith.constant 0 : i32
    %c0_i32_0 = arith.constant 0 : i32
    %c0_i32_1 = arith.constant 0 : i32
    %c0_i32_2 = arith.constant 0 : i32
    return %c0_i32, %c0_i32_0, %c0_i32_1 : i32, i32, i32
  }
  func.func @transform_5(%arg0: i32, %arg1: i32) -> (i32, i32, i32) {
    %c0_i32 = arith.constant 0 : i32
    %c0_i32_0 = arith.constant 0 : i32
    %c0_i32_1 = arith.constant 0 : i32
    %c0_i32_2 = arith.constant 0 : i32
    return %c0_i32, %c0_i32_0, %c0_i32_1 : i32, i32, i32
  }
  func.func @transform_6(%arg0: i32, %arg1: i32) -> (i32, i32, i32) {
    %c0_i32 = arith.constant 0 : i32
    %c0_i32_0 = arith.constant 0 : i32
    %c0_i32_1 = arith.constant 0 : i32
    %c0_i32_2 = arith.constant 0 : i32
    return %c0_i32, %c0_i32_0, %c0_i32_1 : i32, i32, i32
  }
  func.func @transform_7(%arg0: i32, %arg1: i32) -> (i32, i32, i32) {
    %c0_i32 = arith.constant 0 : i32
    %c0_i32_0 = arith.constant 0 : i32
    %c0_i32_1 = arith.constant 0 : i32
    %c0_i32_2 = arith.constant 0 : i32
    return %c0_i32, %c0_i32_0, %c0_i32_1 : i32, i32, i32
  }
  func.func @transform_8(%arg0: i32, %arg1: i32) -> (i32, i32, i32) {
    %c0_i32 = arith.constant 0 : i32
    %c0_i32_0 = arith.constant 0 : i32
    %c0_i32_1 = arith.constant 0 : i32
    %c0_i32_2 = arith.constant 0 : i32
    return %c0_i32, %c0_i32_0, %c0_i32_1 : i32, i32, i32
  }
  func.func @transform_9(%arg0: i32, %arg1: i32) -> (i32, i32, i32) {
    %c0_i32 = arith.constant 0 : i32
    %c0_i32_0 = arith.constant 0 : i32
    %c0_i32_1 = arith.constant 0 : i32
    %c0_i32_2 = arith.constant 0 : i32
    return %c0_i32, %c0_i32_0, %c0_i32_1 : i32, i32, i32
  }
  func.func @transform_10(%arg0: i32, %arg1: i32) -> (i32, i32, i32) {
    %c0_i32 = arith.constant 0 : i32
    %c0_i32_0 = arith.constant 0 : i32
    %c0_i32_1 = arith.constant 0 : i32
    %c0_i32_2 = arith.constant 0 : i32
    return %c0_i32, %c0_i32_0, %c0_i32_1 : i32, i32, i32
  }
  func.func @transform_11(%arg0: i32, %arg1: i32) -> (i32, i32, i32) {
    %c0_i32 = arith.constant 0 : i32
    %c0_i32_0 = arith.constant 0 : i32
    %c0_i32_1 = arith.constant 0 : i32
    %c0_i32_2 = arith.constant 0 : i32
    return %c0_i32, %c0_i32_0, %c0_i32_1 : i32, i32, i32
  }
  func.func @transform_12(%arg0: i32, %arg1: i32) -> (i32, i32, i32) {
    %c0_i32 = arith.constant 0 : i32
    %c0_i32_0 = arith.constant 0 : i32
    %c0_i32_1 = arith.constant 0 : i32
    %c0_i32_2 = arith.constant 0 : i32
    return %c0_i32, %c0_i32_0, %c0_i32_1 : i32, i32, i32
  }
  func.func @transform_13(%arg0: i32, %arg1: i32) -> (i32, i32, i32) {
    %c0_i32 = arith.constant 0 : i32
    %c0_i32_0 = arith.constant 0 : i32
    %c0_i32_1 = arith.constant 0 : i32
    %c0_i32_2 = arith.constant 0 : i32
    return %c0_i32, %c0_i32_0, %c0_i32_1 : i32, i32, i32
  }
  func.func @transform_14(%arg0: i32, %arg1: i32) -> (i32, i32) {
    %c0_i32 = arith.constant 0 : i32
    %c0_i32_0 = arith.constant 0 : i32
    %c0_i32_1 = arith.constant 0 : i32
    return %c0_i32, %c0_i32_0 : i32, i32
  }
  func.func @transform_15(%arg0: i32, %arg1: i32) -> (i32, i32) {
    %c0_i32 = arith.constant 0 : i32
    %c0_i32_0 = arith.constant 0 : i32
    %c0_i32_1 = arith.constant 0 : i32
    return %c0_i32, %c0_i32_0 : i32, i32
  }
  func.func @transform_16(%arg0: i32, %arg1: i32) -> (i32, i32) {
    %c0_i32 = arith.constant 0 : i32
    %c0_i32_0 = arith.constant 0 : i32
    %c0_i32_1 = arith.constant 0 : i32
    return %c0_i32, %c0_i32_0 : i32, i32
  }
  func.func @transform_17(%arg0: i32, %arg1: i32) -> (i32, i32, i32) {
    %c0_i32 = arith.constant 0 : i32
    %c0_i32_0 = arith.constant 0 : i32
    %c0_i32_1 = arith.constant 0 : i32
    return %arg0, %c0_i32, %c0_i32_0 : i32, i32, i32
  }
}

</mosaic_0001>

<llo_original>
// kernel: cross_cond_trans_head.1
$region0: #{cross_cond_trans_head.1}
  #allocation0 [shape = 'u32[]', space=smem, size = 0x4, offset = 0x4, fixed_abs, tag = 'smem constant byte address 0x4 - core index']
  #allocation1 [shape = 'u32[144,128]{1,0:T(1,128)}', space=vmem, size = 0x12000, scoped, tag = 'internal scratch']
  #allocation2 [shape = 'f32[16,128]{1,0:T(8,128)}', space=vmem, size = 0x2000, scoped, tag = 'scratch operand']
  #allocation3 [shape = 'bf16[16,128]{1,0:T(8,128)(2,1)}', space=vmem, size = 0x1000, scoped, tag = 'scratch operand']
  %s0 = inlined_call_operand.vmem [shape: f32[2,16,128], index: 0, kind: input, shape index: {}]
  %s1 = inlined_call_operand.vmem [shape: bf16[1,1,16,16], index: 1, kind: input, shape index: {}]
  %s2 = inlined_call_operand.hbm [shape: f32[2,1,128], index: 2, kind: input, shape index: {}]
  %s3 = inlined_call_operand.hbm [shape: f32[2,1,128], index: 3, kind: input, shape index: {}]
  %s4 = inlined_call_operand.hbm [shape: bf16[2,128,384], index: 4, kind: input, shape index: {}]
  %s5 = inlined_call_operand.vmem [shape: f32[2,1,384], index: 5, kind: input, shape index: {}]
  %s6 = inlined_call_operand.hbm [shape: bf16[2,128,128], index: 6, kind: input, shape index: {}]
  %s7 = inlined_call_operand.hbm [shape: f32[2,1,128], index: 7, kind: input, shape index: {}]
  %s8 = inlined_call_operand.hbm [shape: f32[2,1,128], index: 8, kind: input, shape index: {}]
  %s9 = inlined_call_operand.hbm [shape: f32[2,1,128], index: 9, kind: input, shape index: {}]
  %s10 = inlined_call_operand.hbm [shape: bf16[2,128,512], index: 10, kind: input, shape index: {}]
  %s11 = inlined_call_operand.hbm [shape: f32[2,1,512], index: 11, kind: input, shape index: {}]
  %s12 = inlined_call_operand.hbm [shape: bf16[2,512,128], index: 12, kind: input, shape index: {}]
  %s13 = inlined_call_operand.hbm [shape: f32[2,1,128], index: 13, kind: input, shape index: {}]
  %s14 = inlined_call_operand.vmem [shape: f32[1,128], index: 14, kind: input, shape index: {}]
  %s15 = inlined_call_operand.hbm [shape: f32[1,128], index: 15, kind: input, shape index: {}]
  %s16 = inlined_call_operand.hbm [shape: bf16[128,128], index: 16, kind: input, shape index: {}]
  %s17 = inlined_call_operand.hbm [shape: f32[2,16,128], index: 17, kind: output, shape index: {}]
  %s18 = sld [smem:[#allocation0]]
  $region161: #{cross_cond_trans_head.1} parent=0
    _
  %s20 = ssub.s32 1, %s18
  %s21 = scalar_select 0, %s20, %s18
  $region1: #{cross_cond_trans_head.1} parent=0
    #allocation4 [shape = 'u8[1024]{0}', space=vmem, size = 0x400, scoped, tag = 'input window, operand 2, single buffered']
    #allocation5 [shape = 's32[2]{0}', space=sflag, size = 0x8, scoped, tag = 'scoped memory for cross_cond_trans_head.1']
    #allocation6 [shape = 's32[2]{0}', space=sflag, size = 0x8, scoped, tag = 'scoped memory for cross_cond_trans_head.1']
    #allocation7 [shape = 'u8[1024]{0}', space=vmem, size = 0x400, scoped, tag = 'input window, operand 3, single buffered']
    #allocation8 [shape = 's32[1]{0}', space=sflag, size = 0x4, scoped, tag = 'scoped memory for cross_cond_trans_head.1']
    #allocation9 [shape = 'u8[196608]{0}', space=vmem, size = 0x30000, scoped, tag = 'input window, operand 4, single buffered']
    #allocation10 [shape = 'u8[65536]{0}', space=vmem, size = 0x10000, scoped, tag = 'input window, operand 6, single buffered']
    #allocation11 [shape = 's32[1]{0}', space=sflag, size = 0x4, scoped, tag = 'scoped memory for cross_cond_trans_head.1']
    #allocation12 [shape = 'u8[1024]{0}', space=vmem, size = 0x400, scoped, tag = 'input window, operand 7, single buffered']
    #allocation13 [shape = 'u8[1024]{0}', space=vmem, size = 0x400, scoped, tag = 'input window, operand 8, single buffered']
    #allocation14 [shape = 's32[1]{0}', space=sflag, size = 0x4, scoped, tag = 'scoped memory for cross_cond_trans_head.1']
    #allocation15 [shape = 'u8[1024]{0}', space=vmem, size = 0x400, scoped, tag = 'input window, operand 9, single buffered']
    #allocation16 [shape = 'u8[262144]{0}', space=vmem, size = 0x40000, scoped, tag = 'input window, operand 10, single buffered']
    #allocation17 [shape = 's32[1]{0}', space=sflag, size = 0x4, scoped, tag = 'scoped memory for cross_cond_trans_head.1']
    #allocation18 [shape = 'u8[4096]{0}', space=vmem, size = 0x1000, scoped, tag = 'input window, operand 11, single buffered']
    #allocation19 [shape = 'u8[262144]{0}', space=vmem, size = 0x40000, scoped, tag = 'input window, operand 12, single buffered']
    #allocation20 [shape = 's32[1]{0}', space=sflag, size = 0x4, scoped, tag = 'scoped memory for cross_cond_trans_head.1']
    #allocation21 [shape = 'u8[1024]{0}', space=vmem, size = 0x400, scoped, tag = 'input window, operand 13, single buffered']
    #allocation22 [shape = 'u8[512]{0}', space=vmem, size = 0x400, scoped, tag = 'input window, operand 15, single buffered']
    #allocation23 [shape = 's32[1]{0}', space=sflag, size = 0x4, scoped, tag = 'scoped memory for cross_cond_trans_head.1']
    #allocation24 [shape = 'u8[32768]{0}', space=vmem, size = 0x8000, scoped, tag = 'input window, operand 16, single buffered']
    #allocation25 [shape = 'u8[16384]{0}', space=vmem, size = 0x4000, scoped, tag = 'output window, operand 0']
    %22 = vsyncpa [#allocation5], 0
    %23 = vsyncpa [#allocation8], 0
    %24 = vsyncpa [#allocation11], 0
    %25 = vsyncpa [#allocation14], 0
    %26 = vsyncpa [#allocation17], 0
    %27 = vsyncpa [#allocation20], 0
    %28 = vsyncpa [#allocation23], 0
    %29 = vsyncpa [#allocation6], 0
    %s30 = scalar_lea.sflag [#allocation6], 1
    %31 = vsyncpa %s30, 0
    loop: start=0, step=1, limit=6
    $region2: #{cross_cond_trans_head.1} parent=1 // loop_pre_header
      _
    $region3: #{cross_cond_trans_head.1} parent=1 // loop_header
      %s33 = sphi 0, %s37
      %p34 = scmp.ge.s32.totalorder %s33, 6
      %s40 = sphi 0, %s52
      %s41 = sphi 0, %s48
      %s42 = sphi 0, %s40
      %s43 = sphi 0, %s41
      %s44 = sphi 0, %s42
      %s45 = sphi 0, %s43
      %s55 = sphi 0, %s57
      %s58 = sphi 0, %s55
      %s59 = sphi 0, %s58
      %s75 = sphi 0, %s59
      %s79 = sphi 0, %s79
      %s81 = sphi 0, %s79
      %s82 = sphi 0, %s81
      %s96 = sphi 0, %s82
      %s100 = sphi 0, %s100
      %s102 = sphi 0, %s100
      %s103 = sphi 0, %s102
      %s117 = sphi 0, %s103
      %s121 = sphi 0, %s121
      %s123 = sphi 0, %s121
      %s124 = sphi 0, %s123
      %s138 = sphi 0, %s124
      %s142 = sphi 0, %s142
      %s144 = sphi 0, %s142
      %s145 = sphi 0, %s144
      %s159 = sphi 0, %s145
      %s163 = sphi 0, %s163
      %s165 = sphi 0, %s163
      %s166 = sphi 0, %s165
      %s180 = sphi 0, %s166
      %s184 = sphi 0, %s184
      %s186 = sphi 0, %s184
      %s187 = sphi 0, %s186
      %s201 = sphi 0, %s187
      %s205 = sphi 0, %s205
      %s207 = sphi 0, %s205
      %s208 = sphi 0, %s207
      %s222 = sphi 0, %s208
      %s226 = sphi 0, %s226
      %s228 = sphi 0, %s226
      %s229 = sphi 0, %s228
      %s243 = sphi 0, %s229
      %s247 = sphi 0, %s247
      %s249 = sphi 0, %s247
      %s250 = sphi 0, %s249
      %s264 = sphi 0, %s250
      %s268 = sphi 0, %s268
      %s270 = sphi 0, %s268
      %s271 = sphi 0, %s270
      %s285 = sphi 0, %s271
      %s289 = sphi 0, %s289
      %s291 = sphi 0, %s289
      %s292 = sphi 0, %s291
      %s306 = sphi 0, %s292
      %s310 = sphi 0, %s310
      %s312 = sphi 0, %s310
      %s313 = sphi 0, %s312
      %s327 = sphi 0, %s313
      %s331 = sphi 0, %s331
      %s333 = sphi 0, %s331
      %s334 = sphi 0, %s333
      %s348 = sphi 0, %s334
      %s352 = sphi 0, %s352
      %s354 = sphi 0, %s352
      %s355 = sphi 0, %s354
      %s369 = sphi 0, %s355
      %s373 = sphi 0, %s373
      %s375 = sphi 0, %s373
      %s376 = sphi 0, %s375
      %s390 = sphi 0, %s376
      %s394 = sphi 0, %s394
      %s396 = sphi 0, %s394
      %s397 = sphi 0, %s396
      %s411 = sphi 0, %s397
      %s417 = sphi 0, %s419
      %s420 = sphi 0, %s417
      %s421 = sphi 0, %s420
      %s437 = sphi 0, %s421
    $region4: #{cross_cond_trans_head.1} parent=1 // loop_header_branch
      %36 = sbr.rel (%p34) target = $region8
    $region5: #{cross_cond_trans_head.1} parent=1 // loop_body
      %s38 = ssub.s32 %s33, 1
      %s39 = ssub.s32 %s33, 2
      %s46 = sadd.s32 1, %s41
      %p47 = scmp.ge.s32.totalorder %s46, 2
      %s48 = scalar_select %p47, 0, %s46
      %s49 = sadd.s32 1, %s40
      %s50 = scalar_select %p47, %s49, %s40
      %p51 = scmp.ge.s32.totalorder %s50, 2
      %s52 = scalar_select %p51, 0, %s50
      %s53 = ssub.s32 %s40, %s52
      %p54 = scmp.eq.s32.totalorder %s53, 0
      %s56 = sadd.s32 %s55, 1
      %s57 = scalar_select %p54, %s55, %s56
      %p60 = pneg %p54
      %p61 = scmp.eq.s32.totalorder %s33, 3
      %p62 = por %p60, %p61
      %p63 = scmp.ne.s32.totalorder %s55, %s58
      %p64 = scmp.eq.s32.totalorder %s33, 0
      %p65 = por %p63, %p64
      %p66 = scmp.ne.s32.totalorder %s55, %s58
      %p67 = scmp.eq.s32.totalorder %s38, 3
      %p68 = por %p66, %p67
      %p69 = scmp.ne.s32.totalorder %s58, %s59
      %p70 = scmp.eq.s32.totalorder %s38, 0
      %p71 = por %p69, %p70
      %p72 = scmp.ne.s32.totalorder %s58, %s59
      %p73 = scmp.eq.s32.totalorder %s39, 3
      %p74 = por %p72, %p73
      %p76 = scmp.ne.s32.totalorder %s59, %s75
      %p77 = scmp.eq.s32.totalorder %s39, 0
      %p78 = por %p76, %p77
      %s80 = sadd.s32 %s79, 1
      %p83 = scmp.eq.s32.totalorder %s33, 3
      %p84 = scmp.ne.s32.totalorder %s79, %s81
      %p85 = scmp.eq.s32.totalorder %s33, 0
      %p86 = por %p84, %p85
      %p87 = scmp.ne.s32.totalorder %s79, %s81
      %p88 = scmp.eq.s32.totalorder %s38, 3
      %p89 = por %p87, %p88
      %p90 = scmp.ne.s32.totalorder %s81, %s82
      %p91 = scmp.eq.s32.totalorder %s38, 0
      %p92 = por %p90, %p91
      %p93 = scmp.ne.s32.totalorder %s81, %s82
      %p94 = scmp.eq.s32.totalorder %s39, 3
      %p95 = por %p93, %p94
      %p97 = scmp.ne.s32.totalorder %s82, %s96
      %p98 = scmp.eq.s32.totalorder %s39, 0
      %p99 = por %p97, %p98
      %s101 = sadd.s32 %s100, 1
      %p104 = scmp.eq.s32.totalorder %s33, 3
      %p105 = scmp.ne.s32.totalorder %s100, %s102
      %p106 = scmp.eq.s32.totalorder %s33, 0
      %p107 = por %p105, %p106
      %p108 = scmp.ne.s32.totalorder %s100, %s102
      %p109 = scmp.eq.s32.totalorder %s38, 3
      %p110 = por %p108, %p109
      %p111 = scmp.ne.s32.totalorder %s102, %s103
      %p112 = scmp.eq.s32.totalorder %s38, 0
      %p113 = por %p111, %p112
      %p114 = scmp.ne.s32.totalorder %s102, %s103
      %p115 = scmp.eq.s32.totalorder %s39, 3
      %p116 = por %p114, %p115
      %p118 = scmp.ne.s32.totalorder %s103, %s117
      %p119 = scmp.eq.s32.totalorder %s39, 0
      %p120 = por %p118, %p119
      %s122 = sadd.s32 %s121, 1
      %p125 = scmp.eq.s32.totalorder %s33, 3
      %p126 = scmp.ne.s32.totalorder %s121, %s123
      %p127 = scmp.eq.s32.totalorder %s33, 0
      %p128 = por %p126, %p127
      %p129 = scmp.ne.s32.totalorder %s121, %s123
      %p130 = scmp.eq.s32.totalorder %s38, 3
      %p131 = por %p129, %p130
      %p132 = scmp.ne.s32.totalorder %s123, %s124
      %p133 = scmp.eq.s32.totalorder %s38, 0
      %p134 = por %p132, %p133
      %p135 = scmp.ne.s32.totalorder %s123, %s124
      %p136 = scmp.eq.s32.totalorder %s39, 3
      %p137 = por %p135, %p136
      %p139 = scmp.ne.s32.totalorder %s124, %s138
      %p140 = scmp.eq.s32.totalorder %s39, 0
      %p141 = por %p139, %p140
      %s143 = sadd.s32 %s142, 1
      %p146 = scmp.eq.s32.totalorder %s33, 3
      %p147 = scmp.ne.s32.totalorder %s142, %s144
      %p148 = scmp.eq.s32.totalorder %s33, 0
      %p149 = por %p147, %p148
      %p150 = scmp.ne.s32.totalorder %s142, %s144
      %p151 = scmp.eq.s32.totalorder %s38, 3
      %p152 = por %p150, %p151
      %p153 = scmp.ne.s32.totalorder %s144, %s145
      %p154 = scmp.eq.s32.totalorder %s38, 0
      %p155 = por %p153, %p154
      %p156 = scmp.ne.s32.totalorder %s144, %s145
      %p157 = scmp.eq.s32.totalorder %s39, 3
      %p158 = por %p156, %p157
      %p160 = scmp.ne.s32.totalorder %s145, %s159
      %p161 = scmp.eq.s32.totalorder %s39, 0
      %p162 = por %p160, %p161
      %s164 = sadd.s32 %s163, 1
      %p167 = scmp.eq.s32.totalorder %s33, 3
      %p168 = scmp.ne.s32.totalorder %s163, %s165
      %p169 = scmp.eq.s32.totalorder %s33, 0
      %p170 = por %p168, %p169
      %p171 = scmp.ne.s32.totalorder %s163, %s165
      %p172 = scmp.eq.s32.totalorder %s38, 3
      %p173 = por %p171, %p172
      %p174 = scmp.ne.s32.totalorder %s165, %s166
      %p175 = scmp.eq.s32.totalorder %s38, 0
      %p176 = por %p174, %p175
      %p177 = scmp.ne.s32.totalorder %s165, %s166
      %p178 = scmp.eq.s32.totalorder %s39, 3
      %p179 = por %p177, %p178
      %p181 = scmp.ne.s32.totalorder %s166, %s180
      %p182 = scmp.eq.s32.totalorder %s39, 0
      %p183 = por %p181, %p182
      %s185 = sadd.s32 %s184, 1
      %p188 = scmp.eq.s32.totalorder %s33, 3
      %p189 = scmp.ne.s32.totalorder %s184, %s186
      %p190 = scmp.eq.s32.totalorder %s33, 0
      %p191 = por %p189, %p190
      %p192 = scmp.ne.s32.totalorder %s184, %s186
      %p193 = scmp.eq.s32.totalorder %s38, 3
      %p194 = por %p192, %p193
      %p195 = scmp.ne.s32.totalorder %s186, %s187
      %p196 = scmp.eq.s32.totalorder %s38, 0
      %p197 = por %p195, %p196
      %p198 = scmp.ne.s32.totalorder %s186, %s187
      %p199 = scmp.eq.s32.totalorder %s39, 3
      %p200 = por %p198, %p199
      %p202 = scmp.ne.s32.totalorder %s187, %s201
      %p203 = scmp.eq.s32.totalorder %s39, 0
      %p204 = por %p202, %p203
      %s206 = sadd.s32 %s205, 1
      %p209 = scmp.eq.s32.totalorder %s33, 3
      %p210 = scmp.ne.s32.totalorder %s205, %s207
      %p211 = scmp.eq.s32.totalorder %s33, 0
      %p212 = por %p210, %p211
      %p213 = scmp.ne.s32.totalorder %s205, %s207
      %p214 = scmp.eq.s32.totalorder %s38, 3
      %p215 = por %p213, %p214
      %p216 = scmp.ne.s32.totalorder %s207, %s208
      %p217 = scmp.eq.s32.totalorder %s38, 0
      %p218 = por %p216, %p217
      %p219 = scmp.ne.s32.totalorder %s207, %s208
      %p220 = scmp.eq.s32.totalorder %s39, 3
      %p221 = por %p219, %p220
      %p223 = scmp.ne.s32.totalorder %s208, %s222
      %p224 = scmp.eq.s32.totalorder %s39, 0
      %p225 = por %p223, %p224
      %s227 = sadd.s32 %s226, 1
      %p230 = scmp.eq.s32.totalorder %s33, 3
      %p231 = scmp.ne.s32.totalorder %s226, %s228
      %p232 = scmp.eq.s32.totalorder %s33, 0
      %p233 = por %p231, %p232
      %p234 = scmp.ne.s32.totalorder %s226, %s228
      %p235 = scmp.eq.s32.totalorder %s38, 3
      %p236 = por %p234, %p235
      %p237 = scmp.ne.s32.totalorder %s228, %s229
      %p238 = scmp.eq.s32.totalorder %s38, 0
      %p239 = por %p237, %p238
      %p240 = scmp.ne.s32.totalorder %s228, %s229
      %p241 = scmp.eq.s32.totalorder %s39, 3
      %p242 = por %p240, %p241
      %p244 = scmp.ne.s32.totalorder %s229, %s243
      %p245 = scmp.eq.s32.totalorder %s39, 0
      %p246 = por %p244, %p245
      %s248 = sadd.s32 %s247, 1
      %p251 = scmp.eq.s32.totalorder %s33, 3
      %p252 = scmp.ne.s32.totalorder %s247, %s249
      %p253 = scmp.eq.s32.totalorder %s33, 0
      %p254 = por %p252, %p253
      %p255 = scmp.ne.s32.totalorder %s247, %s249
      %p256 = scmp.eq.s32.totalorder %s38, 3
      %p257 = por %p255, %p256
      %p258 = scmp.ne.s32.totalorder %s249, %s250
      %p259 = scmp.eq.s32.totalorder %s38, 0
      %p260 = por %p258, %p259
      %p261 = scmp.ne.s32.totalorder %s249, %s250
      %p262 = scmp.eq.s32.totalorder %s39, 3
      %p263 = por %p261, %p262
      %p265 = scmp.ne.s32.totalorder %s250, %s264
      %p266 = scmp.eq.s32.totalorder %s39, 0
      %p267 = por %p265, %p266
      %s269 = sadd.s32 %s268, 1
      %p272 = scmp.eq.s32.totalorder %s33, 3
      %p273 = scmp.ne.s32.totalorder %s268, %s270
      %p274 = scmp.eq.s32.totalorder %s33, 0
      %p275 = por %p273, %p274
      %p276 = scmp.ne.s32.totalorder %s268, %s270
      %p277 = scmp.eq.s32.totalorder %s38, 3
      %p278 = por %p276, %p277
      %p279 = scmp.ne.s32.totalorder %s270, %s271
      %p280 = scmp.eq.s32.totalorder %s38, 0
      %p281 = por %p279, %p280
      %p282 = scmp.ne.s32.totalorder %s270, %s271
      %p283 = scmp.eq.s32.totalorder %s39, 3
      %p284 = por %p282, %p283
      %p286 = scmp.ne.s32.totalorder %s271, %s285
      %p287 = scmp.eq.s32.totalorder %s39, 0
      %p288 = por %p286, %p287
      %s290 = sadd.s32 %s289, 1
      %p293 = scmp.eq.s32.totalorder %s33, 3
      %p294 = scmp.ne.s32.totalorder %s289, %s291
      %p295 = scmp.eq.s32.totalorder %s33, 0
      %p296 = por %p294, %p295
      %p297 = scmp.ne.s32.totalorder %s289, %s291
      %p298 = scmp.eq.s32.totalorder %s38, 3
      %p299 = por %p297, %p298
      %p300 = scmp.ne.s32.totalorder %s291, %s292
      %p301 = scmp.eq.s32.totalorder %s38, 0
      %p302 = por %p300, %p301
      %p303 = scmp.ne.s32.totalorder %s291, %s292
      %p304 = scmp.eq.s32.totalorder %s39, 3
      %p305 = por %p303, %p304
      %p307 = scmp.ne.s32.totalorder %s292, %s306
      %p308 = scmp.eq.s32.totalorder %s39, 0
      %p309 = por %p307, %p308
      %s311 = sadd.s32 %s310, 1
      %p314 = scmp.eq.s32.totalorder %s33, 3
      %p315 = scmp.ne.s32.totalorder %s310, %s312
      %p316 = scmp.eq.s32.totalorder %s33, 0
      %p317 = por %p315, %p316
      %p318 = scmp.ne.s32.totalorder %s310, %s312
      %p319 = scmp.eq.s32.totalorder %s38, 3
      %p320 = por %p318, %p319
      %p321 = scmp.ne.s32.totalorder %s312, %s313
      %p322 = scmp.eq.s32.totalorder %s38, 0
      %p323 = por %p321, %p322
      %p324 = scmp.ne.s32.totalorder %s312, %s313
      %p325 = scmp.eq.s32.totalorder %s39, 3
      %p326 = por %p324, %p325
      %p328 = scmp.ne.s32.totalorder %s313, %s327
      %p329 = scmp.eq.s32.totalorder %s39, 0
      %p330 = por %p328, %p329
      %s332 = sadd.s32 %s331, 1
      %p335 = scmp.eq.s32.totalorder %s33, 3
      %p336 = scmp.ne.s32.totalorder %s331, %s333
      %p337 = scmp.eq.s32.totalorder %s33, 0
      %p338 = por %p336, %p337
      %p339 = scmp.ne.s32.totalorder %s331, %s333
      %p340 = scmp.eq.s32.totalorder %s38, 3
      %p341 = por %p339, %p340
      %p342 = scmp.ne.s32.totalorder %s333, %s334
      %p343 = scmp.eq.s32.totalorder %s38, 0
      %p344 = por %p342, %p343
      %p345 = scmp.ne.s32.totalorder %s333, %s334
      %p346 = scmp.eq.s32.totalorder %s39, 3
      %p347 = por %p345, %p346
      %p349 = scmp.ne.s32.totalorder %s334, %s348
      %p350 = scmp.eq.s32.totalorder %s39, 0
      %p351 = por %p349, %p350
      %s353 = sadd.s32 %s352, 1
      %p356 = scmp.eq.s32.totalorder %s33, 3
      %p357 = scmp.ne.s32.totalorder %s352, %s354
      %p358 = scmp.eq.s32.totalorder %s33, 0
      %p359 = por %p357, %p358
      %p360 = scmp.ne.s32.totalorder %s352, %s354
      %p361 = scmp.eq.s32.totalorder %s38, 3
      %p362 = por %p360, %p361
      %p363 = scmp.ne.s32.totalorder %s354, %s355
      %p364 = scmp.eq.s32.totalorder %s38, 0
      %p365 = por %p363, %p364
      %p366 = scmp.ne.s32.totalorder %s354, %s355
      %p367 = scmp.eq.s32.totalorder %s39, 3
      %p368 = por %p366, %p367
      %p370 = scmp.ne.s32.totalorder %s355, %s369
      %p371 = scmp.eq.s32.totalorder %s39, 0
      %p372 = por %p370, %p371
      %s374 = sadd.s32 %s373, 1
      %p377 = scmp.eq.s32.totalorder %s33, 3
      %p378 = scmp.ne.s32.totalorder %s373, %s375
      %p379 = scmp.eq.s32.totalorder %s33, 0
      %p380 = por %p378, %p379
      %p381 = scmp.ne.s32.totalorder %s373, %s375
      %p382 = scmp.eq.s32.totalorder %s38, 3
      %p383 = por %p381, %p382
      %p384 = scmp.ne.s32.totalorder %s375, %s376
      %p385 = scmp.eq.s32.totalorder %s38, 0
      %p386 = por %p384, %p385
      %p387 = scmp.ne.s32.totalorder %s375, %s376
      %p388 = scmp.eq.s32.totalorder %s39, 3
      %p389 = por %p387, %p388
      %p391 = scmp.ne.s32.totalorder %s376, %s390
      %p392 = scmp.eq.s32.totalorder %s39, 0
      %p393 = por %p391, %p392
      %s395 = sadd.s32 %s394, 1
      %p398 = scmp.eq.s32.totalorder %s33, 3
      %p399 = scmp.ne.s32.totalorder %s394, %s396
      %p400 = scmp.eq.s32.totalorder %s33, 0
      %p401 = por %p399, %p400
      %p402 = scmp.ne.s32.totalorder %s394, %s396
      %p403 = scmp.eq.s32.totalorder %s38, 3
      %p404 = por %p402, %p403
      %p405 = scmp.ne.s32.totalorder %s396, %s397
      %p406 = scmp.eq.s32.totalorder %s38, 0
      %p407 = por %p405, %p406
      %p408 = scmp.ne.s32.totalorder %s396, %s397
      %p409 = scmp.eq.s32.totalorder %s39, 3
      %p410 = por %p408, %p409
      %p412 = scmp.ne.s32.totalorder %s397, %s411
      %p413 = scmp.eq.s32.totalorder %s39, 0
      %p414 = por %p412, %p413
      %s415 = ssub.s32 %s40, %s52
      %p416 = scmp.eq.s32.totalorder %s415, 0
      %s418 = sadd.s32 %s417, 1
      %s419 = scalar_select %p416, %s417, %s418
      %p422 = pneg %p416
      %p423 = scmp.eq.s32.totalorder %s33, 3
      %p424 = por %p422, %p423
      %p425 = scmp.ne.s32.totalorder %s417, %s420
      %p426 = scmp.eq.s32.totalorder %s33, 0
      %p427 = por %p425, %p426
      %p428 = scmp.ne.s32.totalorder %s417, %s420
      %p429 = scmp.eq.s32.totalorder %s38, 3
      %p430 = por %p428, %p429
      %p431 = scmp.ne.s32.totalorder %s420, %s421
      %p432 = scmp.eq.s32.totalorder %s38, 0
      %p433 = por %p431, %p432
      %p434 = scmp.ne.s32.totalorder %s420, %s421
      %p435 = scmp.eq.s32.totalorder %s39, 3
      %p436 = por %p434, %p435
      %p438 = scmp.ne.s32.totalorder %s421, %s437
      %p439 = scmp.eq.s32.totalorder %s39, 0
      %p440 = por %p438, %p439
      %p441 = scmp.le.s32.totalorder 1, %s33
      %p442 = scmp.lt.s32.totalorder %s33, 5
      %p443 = pnand %p441, %p442
      %p444 = pneg %p443
      // Predicated region
      $region9: #{cross_cond_trans_head.1} parent=5 // pred_check
        _
      $region10: #{cross_cond_trans_head.1} parent=5 // pred_check_branch
        %446 = sbr.rel (%p443) target = $region12
      $region11: #{cross_cond_trans_head.1} parent=5 // pred_region
        %s447 = ssub.s32 %s33, 1
        // Predicated region
        $region13: #{cross_cond_trans_head.1} parent=11 // pred_check
          %p448 = pneg %p92
        $region14: #{cross_cond_trans_head.1} parent=11 // pred_check_branch
          %450 = sbr.rel (%p448) target = $region16
        $region15: #{cross_cond_trans_head.1} parent=11 // pred_region
          _
        $region16: #{cross_cond_trans_head.1} parent=11 // pred_fallthru
          _
        // Predicated region
        $region17: #{cross_cond_trans_head.1} parent=11 // pred_check
          %p451 = pneg %p113
        $region18: #{cross_cond_trans_head.1} parent=11 // pred_check_branch
          %453 = sbr.rel (%p451) target = $region20
        $region19: #{cross_cond_trans_head.1} parent=11 // pred_region
          %s455 = ssub.s32 32, 32
          %456 = vsyncadd [#allocation5], %s455
          %s457 = sshll.u32 [#allocation4], 4
          %s458 = int_to_ptr.vmem [resolvable:$true] %s457
          %463 = dma.hbm_to_vmem [thread:$0]  %s2, 32, %s458, [#allocation5], 16, 16, 1
        $region20: #{cross_cond_trans_head.1} parent=11 // pred_fallthru
          _
        // Predicated region
        $region21: #{cross_cond_trans_head.1} parent=11 // pred_check
          %p464 = pneg %p134
        $region22: #{cross_cond_trans_head.1} parent=11 // pred_check_branch
          %466 = sbr.rel (%p464) target = $region24
        $region23: #{cross_cond_trans_head.1} parent=11 // pred_region
          %s468 = ssub.s32 32, 32
          %469 = vsyncadd [#allocation8], %s468
          %s470 = sshll.u32 [#allocation7], 4
          %s471 = int_to_ptr.vmem [resolvable:$true] %s470
          %476 = dma.hbm_to_vmem [thread:$0]  %s3, 32, %s471, [#allocation8], 16, 16, 1
        $region24: #{cross_cond_trans_head.1} parent=11 // pred_fallthru
          _
        // Predicated region
        $region25: #{cross_cond_trans_head.1} parent=11 // pred_check
          %p477 = pneg %p155
        $region26: #{cross_cond_trans_head.1} parent=11 // pred_check_branch
          %479 = sbr.rel (%p477) target = $region28
        $region27: #{cross_cond_trans_head.1} parent=11 // pred_region
          %s481 = ssub.s32 6144, 6144
          %482 = vsyncadd [#allocation8], %s481
          %s483 = sshll.u32 [#allocation9], 4
          %s484 = int_to_ptr.vmem [resolvable:$true] %s483
          %489 = dma.hbm_to_vmem [thread:$0]  %s4, 6144, %s484, [#allocation8], 192, 192, 12
        $region28: #{cross_cond_trans_head.1} parent=11 // pred_fallthru
          _
        // Predicated region
        $region29: #{cross_cond_trans_head.1} parent=11 // pred_check
          %p490 = pneg %p176
        $region30: #{cross_cond_trans_head.1} parent=11 // pred_check_branch
          %492 = sbr.rel (%p490) target = $region32
        $region31: #{cross_cond_trans_head.1} parent=11 // pred_region
          _
        $region32: #{cross_cond_trans_head.1} parent=11 // pred_fallthru
          _
        // Predicated region
        $region33: #{cross_cond_trans_head.1} parent=11 // pred_check
          %p493 = pneg %p197
        $region34: #{cross_cond_trans_head.1} parent=11 // pred_check_branch
          %495 = sbr.rel (%p493) target = $region36
        $region35: #{cross_cond_trans_head.1} parent=11 // pred_region
          %s497 = ssub.s32 2048, 2048
          %498 = vsyncadd [#allocation11], %s497
          %s499 = sshll.u32 [#allocation10], 4
          %s500 = int_to_ptr.vmem [resolvable:$true] %s499
          %505 = dma.hbm_to_vmem [thread:$0]  %s6, 2048, %s500, [#allocation11], 64, 64, 4
        $region36: #{cross_cond_trans_head.1} parent=11 // pred_fallthru
          _
        // Predicated region
        $region37: #{cross_cond_trans_head.1} parent=11 // pred_check
          %p506 = pneg %p218
        $region38: #{cross_cond_trans_head.1} parent=11 // pred_check_branch
          %508 = sbr.rel (%p506) target = $region40
        $region39: #{cross_cond_trans_head.1} parent=11 // pred_region
          %s510 = ssub.s32 32, 32
          %511 = vsyncadd [#allocation11], %s510
          %s512 = sshll.u32 [#allocation12], 4
          %s513 = int_to_ptr.vmem [resolvable:$true] %s512
          %518 = dma.hbm_to_vmem [thread:$0]  %s7, 32, %s513, [#allocation11], 16, 16, 1
        $region40: #{cross_cond_trans_head.1} parent=11 // pred_fallthru
          _
        // Predicated region
        $region41: #{cross_cond_trans_head.1} parent=11 // pred_check
          %p519 = pneg %p239
        $region42: #{cross_cond_trans_head.1} parent=11 // pred_check_branch
          %521 = sbr.rel (%p519) target = $region44
        $region43: #{cross_cond_trans_head.1} parent=11 // pred_region
          %s523 = ssub.s32 32, 32
          %524 = vsyncadd [#allocation14], %s523
          %s525 = sshll.u32 [#allocation13], 4
          %s526 = int_to_ptr.vmem [resolvable:$true] %s525
          %531 = dma.hbm_to_vmem [thread:$0]  %s8, 32, %s526, [#allocation14], 16, 16, 1
        $region44: #{cross_cond_trans_head.1} parent=11 // pred_fallthru
          _
        // Predicated region
        $region45: #{cross_cond_trans_head.1} parent=11 // pred_check
          %p532 = pneg %p260
        $region46: #{cross_cond_trans_head.1} parent=11 // pred_check_branch
          %534 = sbr.rel (%p532) target = $region48
        $region47: #{cross_cond_trans_head.1} parent=11 // pred_region
          %s536 = ssub.s32 32, 32
          %537 = vsyncadd [#allocation14], %s536
          %s538 = sshll.u32 [#allocation15], 4
          %s539 = int_to_ptr.vmem [resolvable:$true] %s538
          %544 = dma.hbm_to_vmem [thread:$0]  %s9, 32, %s539, [#allocation14], 16, 16, 1
        $region48: #{cross_cond_trans_head.1} parent=11 // pred_fallthru
          _
        // Predicated region
        $region49: #{cross_cond_trans_head.1} parent=11 // pred_check
          %p545 = pneg %p281
        $region50: #{cross_cond_trans_head.1} parent=11 // pred_check_branch
          %547 = sbr.rel (%p545) target = $region52
        $region51: #{cross_cond_trans_head.1} parent=11 // pred_region
          %s549 = ssub.s32 8192, 8192
          %550 = vsyncadd [#allocation17], %s549
          %s551 = sshll.u32 [#allocation16], 4
          %s552 = int_to_ptr.vmem [resolvable:$true] %s551
          %557 = dma.hbm_to_vmem [thread:$0]  %s10, 8192, %s552, [#allocation17], 256, 256, 16
        $region52: #{cross_cond_trans_head.1} parent=11 // pred_fallthru
          _
        // Predicated region
        $region53: #{cross_cond_trans_head.1} parent=11 // pred_check
          %p558 = pneg %p302
        $region54: #{cross_cond_trans_head.1} parent=11 // pred_check_branch
          %560 = sbr.rel (%p558) target = $region56
        $region55: #{cross_cond_trans_head.1} parent=11 // pred_region
          %s562 = ssub.s32 128, 128
          %563 = vsyncadd [#allocation17], %s562
          %s564 = sshll.u32 [#allocation18], 4
          %s565 = int_to_ptr.vmem [resolvable:$true] %s564
          %570 = dma.hbm_to_vmem [thread:$0]  %s11, 128, %s565, [#allocation17], 64, 64, 4
        $region56: #{cross_cond_trans_head.1} parent=11 // pred_fallthru
          _
        // Predicated region
        $region57: #{cross_cond_trans_head.1} parent=11 // pred_check
          %p571 = pneg %p323
        $region58: #{cross_cond_trans_head.1} parent=11 // pred_check_branch
          %573 = sbr.rel (%p571) target = $region60
        $region59: #{cross_cond_trans_head.1} parent=11 // pred_region
          %s575 = ssub.s32 8192, 8192
          %576 = vsyncadd [#allocation20], %s575
          %s577 = sshll.u32 [#allocation19], 4
          %s578 = int_to_ptr.vmem [resolvable:$true] %s577
          %583 = dma.hbm_to_vmem [thread:$0]  %s12, 8192, %s578, [#allocation20], 64, 64, 4
        $region60: #{cross_cond_trans_head.1} parent=11 // pred_fallthru
          _
        // Predicated region
        $region61: #{cross_cond_trans_head.1} parent=11 // pred_check
          %p584 = pneg %p344
        $region62: #{cross_cond_trans_head.1} parent=11 // pred_check_branch
          %586 = sbr.rel (%p584) target = $region64
        $region63: #{cross_cond_trans_head.1} parent=11 // pred_region
          %s588 = ssub.s32 32, 32
          %589 = vsyncadd [#allocation20], %s588
          %s590 = sshll.u32 [#allocation21], 4
          %s591 = int_to_ptr.vmem [resolvable:$true] %s590
          %596 = dma.hbm_to_vmem [thread:$0]  %s13, 32, %s591, [#allocation20], 16, 16, 1
        $region64: #{cross_cond_trans_head.1} parent=11 // pred_fallthru
          _
        // Predicated region
        $region65: #{cross_cond_trans_head.1} parent=11 // pred_check
          %p597 = pneg %p365
        $region66: #{cross_cond_trans_head.1} parent=11 // pred_check_branch
          %599 = sbr.rel (%p597) target = $region68
        $region67: #{cross_cond_trans_head.1} parent=11 // pred_region
          _
        $region68: #{cross_cond_trans_head.1} parent=11 // pred_fallthru
          _
        // Predicated region
        $region69: #{cross_cond_trans_head.1} parent=11 // pred_check
          %p600 = pneg %p386
        $region70: #{cross_cond_trans_head.1} parent=11 // pred_check_branch
          %602 = sbr.rel (%p600) target = $region72
        $region71: #{cross_cond_trans_head.1} parent=11 // pred_region
          %s604 = ssub.s32 16, 16
          %605 = vsyncadd [#allocation23], %s604
          %s607 = sshll.u32 [#allocation22], 4
          %s608 = int_to_ptr.vmem [resolvable:$true] %s607
          %610 = dma.hbm_to_vmem [thread:$0]  %s15, 16, %s608, [#allocation23]
        $region72: #{cross_cond_trans_head.1} parent=11 // pred_fallthru
          _
        // Predicated region
        $region73: #{cross_cond_trans_head.1} parent=11 // pred_check
          %p611 = pneg %p407
        $region74: #{cross_cond_trans_head.1} parent=11 // pred_check_branch
          %613 = sbr.rel (%p611) target = $region76
        $region75: #{cross_cond_trans_head.1} parent=11 // pred_region
          %s615 = ssub.s32 1024, 1024
          %616 = vsyncadd [#allocation23], %s615
          %s617 = sshll.u32 [#allocation24], 4
          %s618 = int_to_ptr.vmem [resolvable:$true] %s617
          %623 = dma.hbm_to_vmem [thread:$0]  %s16, 1024, %s618, [#allocation23], 64, 64, 4
        $region76: #{cross_cond_trans_head.1} parent=11 // pred_fallthru
          _
      $region12: #{cross_cond_trans_head.1} parent=5 // pred_fallthru
        _
      %p624 = scmp.lt.s32.totalorder %s33, 4
      // Predicated region
      $region77: #{cross_cond_trans_head.1} parent=5 // pred_check
        %p625 = pneg %p624
      $region78: #{cross_cond_trans_head.1} parent=5 // pred_check_branch
        %627 = sbr.rel (%p625) target = $region80
      $region79: #{cross_cond_trans_head.1} parent=5 // pred_region
        // Predicated region
        $region81: #{cross_cond_trans_head.1} parent=79 // pred_check
          %p628 = pneg %p65
        $region82: #{cross_cond_trans_head.1} parent=79 // pred_check_branch
          %630 = sbr.rel (%p628) target = $region84
        $region83: #{cross_cond_trans_head.1} parent=79 // pred_region
          %p631 = scmp.lt.s32.totalorder %s40, 1
          %s632 = scalar_select %p631, %s40, 1
          %s633 = smul.addr %s632, 2
          %s634 = smul.addr %s633, 8
          %s635 = scalar_lea.vmem %s0, %s634
        $region84: #{cross_cond_trans_head.1} parent=79 // pred_fallthru
          _
      $region80: #{cross_cond_trans_head.1} parent=5 // pred_fallthru
        _
      %p636 = scmp.le.s32.totalorder 1, %s33
      %p637 = scmp.lt.s32.totalorder %s33, 5
      %p638 = pnand %p636, %p637
      %p639 = pneg %p638
      // Predicated region
      $region85: #{cross_cond_trans_head.1} parent=5 // pred_check
        _
      $region86: #{cross_cond_trans_head.1} parent=5 // pred_check_branch
        %641 = sbr.rel (%p638) target = $region88
      $region87: #{cross_cond_trans_head.1} parent=5 // pred_region
        %s642 = ssub.s32 %s33, 1
        // Predicated region
        $region89: #{cross_cond_trans_head.1} parent=87 // pred_check
          %p643 = pneg %p113
        $region90: #{cross_cond_trans_head.1} parent=87 // pred_check_branch
          %645 = sbr.rel (%p643) target = $region92
        $region91: #{cross_cond_trans_head.1} parent=87 // pred_region
          %646 = dma.done [#allocation5], 32
        $region92: #{cross_cond_trans_head.1} parent=87 // pred_fallthru
          _
        // Predicated region
        $region93: #{cross_cond_trans_head.1} parent=87 // pred_check
          %p647 = pneg %p134
        $region94: #{cross_cond_trans_head.1} parent=87 // pred_check_branch
          %649 = sbr.rel (%p647) target = $region96
        $region95: #{cross_cond_trans_head.1} parent=87 // pred_region
          %650 = dma.done [#allocation8], 32
        $region96: #{cross_cond_trans_head.1} parent=87 // pred_fallthru
          _
        // Predicated region
        $region97: #{cross_cond_trans_head.1} parent=87 // pred_check
          %p651 = pneg %p155
        $region98: #{cross_cond_trans_head.1} parent=87 // pred_check_branch
          %653 = sbr.rel (%p651) target = $region100
        $region99: #{cross_cond_trans_head.1} parent=87 // pred_region
          %654 = dma.done [#allocation8], 6144
        $region100: #{cross_cond_trans_head.1} parent=87 // pred_fallthru
          _
        // Predicated region
        $region101: #{cross_cond_trans_head.1} parent=87 // pred_check
          %p655 = pneg %p197
        $region102: #{cross_cond_trans_head.1} parent=87 // pred_check_branch
          %657 = sbr.rel (%p655) target = $region104
        $region103: #{cross_cond_trans_head.1} parent=87 // pred_region
          %658 = dma.done [#allocation11], 2048
        $region104: #{cross_cond_trans_head.1} parent=87 // pred_fallthru
          _
        // Predicated region
        $region105: #{cross_cond_trans_head.1} parent=87 // pred_check
          %p659 = pneg %p218
        $region106: #{cross_cond_trans_head.1} parent=87 // pred_check_branch
          %661 = sbr.rel (%p659) target = $region108
        $region107: #{cross_cond_trans_head.1} parent=87 // pred_region
          %662 = dma.done [#allocation11], 32
        $region108: #{cross_cond_trans_head.1} parent=87 // pred_fallthru
          _
        // Predicated region
        $region109: #{cross_cond_trans_head.1} parent=87 // pred_check
          %p663 = pneg %p239
        $region110: #{cross_cond_trans_head.1} parent=87 // pred_check_branch
          %665 = sbr.rel (%p663) target = $region112
        $region111: #{cross_cond_trans_head.1} parent=87 // pred_region
          %666 = dma.done [#allocation14], 32
        $region112: #{cross_cond_trans_head.1} parent=87 // pred_fallthru
          _
        // Predicated region
        $region113: #{cross_cond_trans_head.1} parent=87 // pred_check
          %p667 = pneg %p260
        $region114: #{cross_cond_trans_head.1} parent=87 // pred_check_branch
          %669 = sbr.rel (%p667) target = $region116
        $region115: #{cross_cond_trans_head.1} parent=87 // pred_region
          %670 = dma.done [#allocation14], 32
        $region116: #{cross_cond_trans_head.1} parent=87 // pred_fallthru
          _
        // Predicated region
        $region117: #{cross_cond_trans_head.1} parent=87 // pred_check
          %p671 = pneg %p281
        $region118: #{cross_cond_trans_head.1} parent=87 // pred_check_branch
          %673 = sbr.rel (%p671) target = $region120
        $region119: #{cross_cond_trans_head.1} parent=87 // pred_region
          %674 = dma.done [#allocation17], 8192
        $region120: #{cross_cond_trans_head.1} parent=87 // pred_fallthru
          _
        // Predicated region
        $region121: #{cross_cond_trans_head.1} parent=87 // pred_check
          %p675 = pneg %p302
        $region122: #{cross_cond_trans_head.1} parent=87 // pred_check_branch
          %677 = sbr.rel (%p675) target = $region124
        $region123: #{cross_cond_trans_head.1} parent=87 // pred_region
          %678 = dma.done [#allocation17], 128
        $region124: #{cross_cond_trans_head.1} parent=87 // pred_fallthru
          _
        // Predicated region
        $region125: #{cross_cond_trans_head.1} parent=87 // pred_check
          %p679 = pneg %p323
        $region126: #{cross_cond_trans_head.1} parent=87 // pred_check_branch
          %681 = sbr.rel (%p679) target = $region128
        $region127: #{cross_cond_trans_head.1} parent=87 // pred_region
          %682 = dma.done [#allocation20], 8192
        $region128: #{cross_cond_trans_head.1} parent=87 // pred_fallthru
          _
        // Predicated region
        $region129: #{cross_cond_trans_head.1} parent=87 // pred_check
          %p683 = pneg %p344
        $region130: #{cross_cond_trans_head.1} parent=87 // pred_check_branch
          %685 = sbr.rel (%p683) target = $region132
        $region131: #{cross_cond_trans_head.1} parent=87 // pred_region
          %686 = dma.done [#allocation20], 32
        $region132: #{cross_cond_trans_head.1} parent=87 // pred_fallthru
          _
        // Predicated region
        $region133: #{cross_cond_trans_head.1} parent=87 // pred_check
          %p687 = pneg %p386
        $region134: #{cross_cond_trans_head.1} parent=87 // pred_check_branch
          %689 = sbr.rel (%p687) target = $region136
        $region135: #{cross_cond_trans_head.1} parent=87 // pred_region
          %690 = dma.done [#allocation23], 16
        $region136: #{cross_cond_trans_head.1} parent=87 // pred_fallthru
          _
        // Predicated region
        $region137: #{cross_cond_trans_head.1} parent=87 // pred_check
          %p691 = pneg %p407
        $region138: #{cross_cond_trans_head.1} parent=87 // pred_check_branch
          %693 = sbr.rel (%p691) target = $region140
        $region139: #{cross_cond_trans_head.1} parent=87 // pred_region
          %694 = dma.done [#allocation23], 1024
        $region140: #{cross_cond_trans_head.1} parent=87 // pred_fallthru
          _
        %p695 = scmp.lt.s32.totalorder %s42, 1
        %s696 = scalar_select %p695, %s42, 1
        %s697 = smul.addr %s696, 2
        %s698 = smul.addr %s697, 8
        %s699 = scalar_lea.vmem %s0, %s698
        %p700 = pneg %p71
        %p701 = pneg %p68
        %p702 = pneg %p92
        %p703 = pneg %p89
        %p704 = pneg %p113
        %p705 = pneg %p110
        %p706 = pneg %p134
        %p707 = pneg %p131
        %p708 = pneg %p155
        %p709 = pneg %p152
        %p710 = pneg %p176
        %p711 = pneg %p173
        %p712 = pneg %p197
        %p713 = pneg %p194
        %p714 = pneg %p218
        %p715 = pneg %p215
        %p716 = pneg %p239
        %p717 = pneg %p236
        %p718 = pneg %p260
        %p719 = pneg %p257
        %p720 = pneg %p281
        %p721 = pneg %p278
        %p722 = pneg %p302
        %p723 = pneg %p299
        %p724 = pneg %p323
        %p725 = pneg %p320
        %p726 = pneg %p344
        %p727 = pneg %p341
        %p728 = pneg %p365
        %p729 = pneg %p362
        %p730 = pneg %p386
        %p731 = pneg %p383
        %p732 = pneg %p407
        %p733 = pneg %p404
        %p734 = pneg %p433
        %p735 = pneg %p430
        %s736 = sand.u32 %s420, 1
        %s737 = scalar_lea.sflag [#allocation6], %s736
        %s738 = sand.u32 %s420, 1
        %s739 = smul.addr %s738, 16
        %s740 = scalar_lea.vmem [#allocation25], %s739
        %p741 = scmp.lt.s32.totalorder %s42, 1
        %s742 = scalar_select %p741, %s42, 1
        %s743 = smul.addr %s742, 2
        %s744 = smul.addr %s743, 8
        %s745 = scalar_lea.vmem %s0, %s744
        %p747 = scmp.eq.s32.totalorder %s43, 0
        // Predicated region
        $region141: #{cross_cond_trans_head.1} parent=87 // pred_check
          %p748 = pneg %p747
        $region142: #{cross_cond_trans_head.1} parent=87 // pred_check_branch
          %750 = sbr.rel (%p748) target = $region144
        $region143: #{cross_cond_trans_head.1} parent=87 // pred_region
          %v751 = vld [vmem:[%s745] sm:$0xff]
          %v752 = vld [vmem:[%s745 + $0x8] sm:$0xff]
          %753 = vst [vmem:[#allocation2] sm:$0xff] %v751
          %754 = vst [vmem:[#allocation2 + $0x8] sm:$0xff] %v752
        $region144: #{cross_cond_trans_head.1} parent=87 // pred_fallthru
          _
        %v755 = vld [vmem:[#allocation2] sm:$0xff]
        %v756 = vld [vmem:[#allocation2 + $0x8] sm:$0xff]
        %s757 = scalar_lea.vmem [#allocation4], %s43
        %v758 = vld [vmem:[%s757] sm:$0x1]
        %s759 = scalar_lea.vmem [#allocation7], %s43
        %v760 = vld [vmem:[%s759] sm:$0x1]
        %761 = vadd.xlane.f32.xlu0 %v755
        %v762 = vpop.xlane.xlu0 %761
        %763 = vadd.xlane.f32.xlu0 %v756
        %v764 = vpop.xlane.xlu0 %763
        %v765 = vrcp.pop 128.0
        %v766 = vmul.f32 %v762, %v765
        %v767 = vmul.f32 %v764, %v765
        %v768 = vmul.f32 %v755, %v755
        %v769 = vmul.f32 %v756, %v756
        %770 = vadd.xlane.f32.xlu0 %v768
        %v771 = vpop.xlane.xlu0 %770
        %772 = vadd.xlane.f32.xlu0 %v769
        %v773 = vpop.xlane.xlu0 %772
        %v774 = vmul.f32 %v771, %v765
        %v775 = vmul.f32 %v773, %v765
        %v776 = vmul.f32 %v766, %v766
        %v777 = vmul.f32 %v767, %v767
        %v778 = vsub.f32 %v774, %v776
        %v779 = vsub.f32 %v775, %v777
        %v780 = vmax.f32 %v778, 0.0
        %v781 = vmax.f32 %v779, 0.0
        %v782 = vsub.f32 %v755, %v766
        %v783 = vsub.f32 %v756, %v767
        %v784 = vadd.f32 %v780, 1e-05
        %v785 = vadd.f32 %v781, 1e-05
        %v786 = vrsqrt.pop %v784
        %v787 = vrsqrt.pop %v785
        %v788 = vmul.f32 %v782, %v786
        %v789 = vmul.f32 %v783, %v787
        %v791 = vlaneseq
        %v792 = vshrl.u32 %v791, 7
        %v793 = vsub.s32 0, %v792
        %v794 = vrot.slane %v758, %v793
        %v796 = vmul.f32 %v788, %v794
        %v797 = vmul.f32 %v789, %v794
        %v799 = vlaneseq
        %v800 = vshrl.u32 %v799, 7
        %v801 = vsub.s32 0, %v800
        %v802 = vrot.slane %v760, %v801
        %v804 = vadd.f32 %v796, %v802
        %v805 = vadd.f32 %v797, %v802
        %v806 = vpack.c.bf16 %v805, %v804
        %s807 = smul.u32 %s43, 48
        %s808 = smul.addr %s807, 4
        %s809 = scalar_lea.vmem [#allocation9], %s808
        %v810 = vld [vmem:[%s809] sm:$0xff]
        %v811 = vld [vmem:[%s809 + $0x8] sm:$0xf]
        %v812 = vld [vmem:[%s809 + $0xc] sm:$0xff]
        %v813 = vld [vmem:[%s809 + $0x14] sm:$0xf]
        %v814 = vld [vmem:[%s809 + $0x18] sm:$0xff]
        %v815 = vld [vmem:[%s809 + $0x20] sm:$0xf]
        %v816 = vld [vmem:[%s809 + $0x24] sm:$0xff]
        %v817 = vld [vmem:[%s809 + $0x2c] sm:$0xf]
        %v818 = vld [vmem:[%s809 + $0x30] sm:$0xff]
        %v819 = vld [vmem:[%s809 + $0x38] sm:$0xf]
        %v820 = vld [vmem:[%s809 + $0x3c] sm:$0xff]
        %v821 = vld [vmem:[%s809 + $0x44] sm:$0xf]
        %v822 = vld [vmem:[%s809 + $0x48] sm:$0xff]
        %v823 = vld [vmem:[%s809 + $0x50] sm:$0xf]
        %v824 = vld [vmem:[%s809 + $0x54] sm:$0xff]
        %v825 = vld [vmem:[%s809 + $0x5c] sm:$0xf]
        %v826 = vld [vmem:[%s809 + $0x60] sm:$0xff]
        %v827 = vld [vmem:[%s809 + $0x68] sm:$0xf]
        %v828 = vld [vmem:[%s809 + $0x6c] sm:$0xff]
        %v829 = vld [vmem:[%s809 + $0x74] sm:$0xf]
        %v830 = vld [vmem:[%s809 + $0x78] sm:$0xff]
        %v831 = vld [vmem:[%s809 + $0x80] sm:$0xf]
        %v832 = vld [vmem:[%s809 + $0x84] sm:$0xff]
        %v833 = vld [vmem:[%s809 + $0x8c] sm:$0xf]
        %v834 = vld [vmem:[%s809 + $0x90] sm:$0xff]
        %v835 = vld [vmem:[%s809 + $0x98] sm:$0xf]
        %v836 = vld [vmem:[%s809 + $0x9c] sm:$0xff]
        %v837 = vld [vmem:[%s809 + $0xa4] sm:$0xf]
        %v838 = vld [vmem:[%s809 + $0xa8] sm:$0xff]
        %v839 = vld [vmem:[%s809 + $0xb0] sm:$0xf]
        %v840 = vld [vmem:[%s809 + $0xb4] sm:$0xff]
        %v841 = vld [vmem:[%s809 + $0xbc] sm:$0xf]
        %s842 = smul.u32 %s43, 3
        %s843 = scalar_lea.vmem %s5, %s842
        %v844 = vld [vmem:[%s843] sm:$0x7]
        %v846 = vlaneseq
        %v847 = vshrl.u32 %v846, 7
        %v848 = vsub.s32 0, %v847
        %v849 = vrot.slane %v844, %v848
        %v850 = vlaneseq
        %v851 = vshrl.u32 %v850, 7
        %v852 = vsub.s32 1, %v851
        %v853 = vrot.slane %v844, %v852
        %v854 = vlaneseq
        %v855 = vshrl.u32 %v854, 7
        %v856 = vsub.s32 2, %v855
        %v857 = vrot.slane %v844, %v856
        %v893 = vunpack.c.l.b16 %v810
        %v894 = vunpack.c.h.b16 %v810
        %v895 = vunpack.c.l.b16 %v811
        %v896 = vunpack.c.l.b16 %v812
        %v897 = vunpack.c.h.b16 %v812
        %v898 = vunpack.c.l.b16 %v813
        %v899 = vunpack.c.l.b16 %v814
        %v900 = vunpack.c.h.b16 %v814
        %v901 = vunpack.c.l.b16 %v815
        %v902 = vunpack.c.l.b16 %v816
        %v903 = vunpack.c.h.b16 %v816
        %v904 = vunpack.c.l.b16 %v817
        %v905 = vunpack.c.l.b16 %v818
        %v906 = vunpack.c.h.b16 %v818
        %v907 = vunpack.c.l.b16 %v819
        %v908 = vunpack.c.l.b16 %v820
        %v909 = vunpack.c.h.b16 %v820
        %v910 = vunpack.c.l.b16 %v821
        %v911 = vunpack.c.l.b16 %v822
        %v912 = vunpack.c.h.b16 %v822
        %v913 = vunpack.c.l.b16 %v823
        %v914 = vunpack.c.l.b16 %v824
        %v915 = vunpack.c.h.b16 %v824
        %v916 = vunpack.c.l.b16 %v825
        %v917 = vunpack.c.l.b16 %v826
        %v918 = vunpack.c.h.b16 %v826
        %v919 = vunpack.c.l.b16 %v827
        %v920 = vunpack.c.l.b16 %v828
        %v921 = vunpack.c.h.b16 %v828
        %v922 = vunpack.c.l.b16 %v829
        %v923 = vunpack.c.l.b16 %v830
        %v924 = vunpack.c.h.b16 %v830
        %v925 = vunpack.c.l.b16 %v831
        %v926 = vunpack.c.l.b16 %v832
        %v927 = vunpack.c.h.b16 %v832
        %v928 = vunpack.c.l.b16 %v833
        %v929 = vunpack.c.l.b16 %v834
        %v930 = vunpack.c.h.b16 %v834
        %v931 = vunpack.c.l.b16 %v835
        %v932 = vunpack.c.l.b16 %v836
        %v933 = vunpack.c.h.b16 %v836
        %v934 = vunpack.c.l.b16 %v837
        %v935 = vunpack.c.l.b16 %v838
        %v936 = vunpack.c.h.b16 %v838
        %v937 = vunpack.c.l.b16 %v839
        %v938 = vunpack.c.l.b16 %v840
        %v939 = vunpack.c.h.b16 %v840
        %v940 = vunpack.c.l.b16 %v841
        %v941 = vpack.c.b16 %v896, %v893
        %v942 = vpack.c.b16 %v897, %v894
        %v943 = vpack.c.b16 %v898, %v895
        %v944 = vpack.c.b16 %v902, %v899
        %v945 = vpack.c.b16 %v903, %v900
        %v946 = vpack.c.b16 %v904, %v901
        %v947 = vpack.c.b16 %v908, %v905
        %v948 = vpack.c.b16 %v909, %v906
        %v949 = vpack.c.b16 %v910, %v907
        %v950 = vpack.c.b16 %v914, %v911
        %v951 = vpack.c.b16 %v915, %v912
        %v952 = vpack.c.b16 %v916, %v913
        %v953 = vpack.c.b16 %v920, %v917
        %v954 = vpack.c.b16 %v921, %v918
        %v955 = vpack.c.b16 %v922, %v919
        %v956 = vpack.c.b16 %v926, %v923
        %v957 = vpack.c.b16 %v927, %v924
        %v958 = vpack.c.b16 %v928, %v925
        %v959 = vpack.c.b16 %v932, %v929
        %v960 = vpack.c.b16 %v933, %v930
        %v961 = vpack.c.b16 %v934, %v931
        %v962 = vpack.c.b16 %v938, %v935
        %v963 = vpack.c.b16 %v939, %v936
        %v964 = vpack.c.b16 %v940, %v937
        %989 = vmatprep.subr.bf16.mxu0 %v963
        %990 = vmatpush1.bf16.msra.mxu0 %v962
        %991 = vmatprep.subr.bf16.mxu0 %v960
        %992 = vmatpush1.bf16.msra.mxu0 %v959
        %993 = vmatprep.subr.bf16.mxu0 %v957
        %994 = vmatpush1.bf16.msra.mxu0 %v956
        %995 = vmatprep.subr.bf16.mxu0 %v954
        %996 = vmatpush1.bf16.msra.mxu0 %v953
        %997 = vmatprep.subr.bf16.mxu0 %v951
        %998 = vmatpush1.bf16.msra.mxu0 %v950
        %999 = vmatprep.subr.bf16.mxu0 %v948
        %1000 = vmatpush1.bf16.msra.mxu0 %v947
        %1001 = vmatprep.subr.bf16.mxu0 %v945
        %1002 = vmatpush1.bf16.msra.mxu0 %v944
        %1003 = vmatprep.subr.bf16.mxu0 %v942
        %1004 = vmatpush1.bf16.msra.mxu0 %v941
        %1005 = vmatprep.subr.bf16.mxu0 0
        %1006 = vmatpush2.bf16.msra.mxu0 0
        %1007 = vmatprep.subr.bf16.mxu0 0
        %1008 = vmatpush2.bf16.msra.mxu0 0
        %1009 = vmatprep.subr.bf16.mxu0 0
        %1010 = vmatpush2.bf16.msra.mxu0 0
        %1011 = vmatprep.subr.bf16.mxu0 0
        %1012 = vmatpush2.bf16.msra.mxu0 0
        %1013 = vmatprep.subr.bf16.mxu0 0
        %1014 = vmatpush2.bf16.msra.mxu0 0
        %1015 = vmatprep.subr.bf16.mxu0 0
        %1016 = vmatpush2.bf16.msra.mxu0 0
        %1017 = vmatprep.subr.bf16.mxu0 0
        %1018 = vmatpush2.bf16.msra.mxu0 0
        %1019 = vmatprep.subr.bf16.mxu0 0
        %1020 = vmatpush2.bf16.msra.mxu0 0
        %1021 = vmatprep.mubr.bf16.mxu0 0
        %1022 = vmatmul.mubr.bf16.gmra.mxu0 %v806
        %v1023 = vpop.f32.mrf.mxu0
        %v1024 = vadd.f32 %v849, %v1023
        %v1025 = vpop.f32.mrf.mxu0
        %v1026 = vadd.f32 %v853, %v1025
        %v1027 = vpop.f32.mrf.mxu0
        %v1028 = vadd.f32 %v849, %v1027
        %v1029 = vpop.f32.mrf.mxu0
        %v1030 = vadd.f32 %v853, %v1029
        %1031 = vdwg.mxu0
        %1032 = vmatprep.subr.bf16.mxu0 0
        %1033 = vmatpush1.bf16.msra.mxu0 %v964
        %1034 = vmatprep.subr.bf16.mxu0 0
        %1035 = vmatpush1.bf16.msra.mxu0 %v961
        %1036 = vmatprep.subr.bf16.mxu0 0
        %1037 = vmatpush1.bf16.msra.mxu0 %v958
        %1038 = vmatprep.subr.bf16.mxu0 0
        %1039 = vmatpush1.bf16.msra.mxu0 %v955
        %1040 = vmatprep.subr.bf16.mxu0 0
        %1041 = vmatpush1.bf16.msra.mxu0 %v952
        %1042 = vmatprep.subr.bf16.mxu0 0
        %1043 = vmatpush1.bf16.msra.mxu0 %v949
        %1044 = vmatprep.subr.bf16.mxu0 0
        %1045 = vmatpush1.bf16.msra.mxu0 %v946
        %1046 = vmatprep.subr.bf16.mxu0 0
        %1047 = vmatpush1.bf16.msra.mxu0 %v943
        %1048 = vmatprep.subr.bf16.mxu0 0
        %1049 = vmatpush2.bf16.msra.mxu0 0
        %1050 = vmatprep.subr.bf16.mxu0 0
        %1051 = vmatpush2.bf16.msra.mxu0 0
        %1052 = vmatprep.subr.bf16.mxu0 0
        %1053 = vmatpush2.bf16.msra.mxu0 0
        %1054 = vmatprep.subr.bf16.mxu0 0
        %1055 = vmatpush2.bf16.msra.mxu0 0
        %1056 = vmatprep.subr.bf16.mxu0 0
        %1057 = vmatpush2.bf16.msra.mxu0 0
        %1058 = vmatprep.subr.bf16.mxu0 0
        %1059 = vmatpush2.bf16.msra.mxu0 0
        %1060 = vmatprep.subr.bf16.mxu0 0
        %1061 = vmatpush2.bf16.msra.mxu0 0
        %1062 = vmatprep.subr.bf16.mxu0 0
        %1063 = vmatpush2.bf16.msra.mxu0 0
        %1064 = vmatprep.mubr.bf16.mxu0 0
        %1065 = vmatmul.mubr.bf16.gmra.mxu0 %v806
        %v1066 = vpop.f32.mrf.mxu0
        %v1067 = vadd.f32 %v857, %v1066
        %v1068 = vpop.f32.mrf.mxu0
        %v1069 = vpop.f32.mrf.mxu0
        %v1070 = vadd.f32 %v857, %v1069
        %v1071 = vpop.f32.mrf.mxu0
        %1072 = vdwg.mxu0
        %v1073 = vpack.c.bf16 %v1028, %v1024
        %v1074 = vpack.c.bf16 %v1030, %v1026
        %v1075 = vpack.c.bf16 %v1070, %v1067
        %v1076 = vld [vmem:[%s1] sm:$0xf]
        %v1077 = vld [vmem:[%s1 + $0x4] sm:$0xf]
        %v1078 = vunpack.c.l.bf16 %v1076
        %v1079 = vunpack.c.l.bf16 %v1077
        %vm1080 = vcmask 130048
        %v1082 = vsel %vm1080, %v1073, 0
        %v1085 = vsel %vm1080, %v1074, 0
        %1087 = vmatprep.subr.bf16.mxu0 0
        %1088 = vmatpush1.bf16.xpose.msra.mxu0 0
        %1089 = vmatprep.subr.bf16.mxu0 0
        %1090 = vmatpush1.bf16.xpose.msra.mxu0 0
        %1091 = vmatprep.subr.bf16.mxu0 0
        %1092 = vmatpush1.bf16.xpose.msra.mxu0 0
        %1093 = vmatprep.subr.bf16.mxu0 0
        %1094 = vmatpush1.bf16.xpose.msra.mxu0 0
        %1095 = vmatprep.subr.bf16.mxu0 0
        %1096 = vmatpush1.bf16.xpose.msra.mxu0 0
        %1097 = vmatprep.subr.bf16.mxu0 0
        %1098 = vmatpush1.bf16.xpose.msra.mxu0 0
        %1099 = vmatprep.subr.bf16.mxu0 0
        %1100 = vmatpush1.bf16.xpose.msra.mxu0 0
        %1101 = vmatprep.subr.bf16.mxu0 0
        %1102 = vmatpush1.bf16.xpose.msra.mxu0 %v1085
        %1103 = vmatprep.subr.bf16.mxu0 0
        %1104 = vmatpush2.bf16.xpose.msra.mxu0 0
        %1105 = vmatprep.subr.bf16.mxu0 0
        %1106 = vmatpush2.bf16.xpose.msra.mxu0 0
        %1107 = vmatprep.subr.bf16.mxu0 0
        %1108 = vmatpush2.bf16.xpose.msra.mxu0 0
        %1109 = vmatprep.subr.bf16.mxu0 0
        %1110 = vmatpush2.bf16.xpose.msra.mxu0 0
        %1111 = vmatprep.subr.bf16.mxu0 0
        %1112 = vmatpush2.bf16.xpose.msra.mxu0 0
        %1113 = vmatprep.subr.bf16.mxu0 0
        %1114 = vmatpush2.bf16.xpose.msra.mxu0 0
        %1115 = vmatprep.subr.bf16.mxu0 0
        %1116 = vmatpush2.bf16.xpose.msra.mxu0 0
        %1117 = vmatprep.subr.bf16.mxu0 0
        %1118 = vmatpush2.bf16.xpose.msra.mxu0 0
        %1119 = vmatprep.mubr.bf16.mxu0 0
        %1120 = vmatmul.mubr.bf16.gmra.mxu0 %v1082
        %v1121 = vpop.f32.mrf.mxu0
        %v1122 = vadd.f32 %v1078, %v1121
        %v1123 = vpop.f32.mrf.mxu0
        %v1124 = vpop.f32.mrf.mxu0
        %v1125 = vadd.f32 %v1079, %v1124
        %v1126 = vpop.f32.mrf.mxu0
        %1127 = vdwg.mxu0
        %v1128 = vsel %vm1080, %v1122, -inf
        %1129 = vmax.xlane.f32.xlu0 %v1128
        %v1130 = vpop.xlane.xlu0 %1129
        %v1131 = vsel %vm1080, %v1125, -inf
        %1132 = vmax.xlane.f32.xlu0 %v1131
        %v1133 = vpop.xlane.xlu0 %1132
        %v1134 = vsub.f32 %v1122, %v1130
        %v1135 = vsub.f32 %v1125, %v1133
        %v1136 = vmul.f32 %v1134, 1.442695
        %v1137 = vpow.pop %v1136
        %v1138 = vmul.f32 %v1135, 1.442695
        %v1139 = vpow.pop %v1138
        %v1140 = vsel %vm1080, %v1137, 0.0
        %1141 = vadd.xlane.f32.xlu0 %v1140
        %v1142 = vpop.xlane.xlu0 %1141
        %v1143 = vsel %vm1080, %v1139, 0.0
        %1144 = vadd.xlane.f32.xlu0 %v1143
        %v1145 = vpop.xlane.xlu0 %1144
        %v1146 = vrcp.pop %v1142
        %v1147 = vmul.f32 %v1137, %v1146
        %v1148 = vrcp.pop %v1145
        %v1149 = vmul.f32 %v1139, %v1148
        %v1150 = vpack.c.bf16 %v1149, %v1147
        %v1152 = vsel %vm1080, %v1150, 0
        %1154 = vmatprep.subr.bf16.mxu0 0
        %1155 = vmatpush1.bf16.msra.mxu0 0
        %1156 = vmatprep.subr.bf16.mxu0 0
        %1157 = vmatpush1.bf16.msra.mxu0 0
        %1158 = vmatprep.subr.bf16.mxu0 0
        %1159 = vmatpush1.bf16.msra.mxu0 0
        %1160 = vmatprep.subr.bf16.mxu0 0
        %1161 = vmatpush1.bf16.msra.mxu0 0
        %1162 = vmatprep.subr.bf16.mxu0 0
        %1163 = vmatpush1.bf16.msra.mxu0 0
        %1164 = vmatprep.subr.bf16.mxu0 0
        %1165 = vmatpush1.bf16.msra.mxu0 0
        %1166 = vmatprep.subr.bf16.mxu0 0
        %1167 = vmatpush1.bf16.msra.mxu0 0
        %1168 = vmatprep.subr.bf16.mxu0 0
        %1169 = vmatpush1.bf16.msra.mxu0 %v1075
        %1170 = vmatprep.subr.bf16.mxu0 0
        %1171 = vmatpush2.bf16.msra.mxu0 0
        %1172 = vmatprep.subr.bf16.mxu0 0
        %1173 = vmatpush2.bf16.msra.mxu0 0
        %1174 = vmatprep.subr.bf16.mxu0 0
        %1175 = vmatpush2.bf16.msra.mxu0 0
        %1176 = vmatprep.subr.bf16.mxu0 0
        %1177 = vmatpush2.bf16.msra.mxu0 0
        %1178 = vmatprep.subr.bf16.mxu0 0
        %1179 = vmatpush2.bf16.msra.mxu0 0
        %1180 = vmatprep.subr.bf16.mxu0 0
        %1181 = vmatpush2.bf16.msra.mxu0 0
        %1182 = vmatprep.subr.bf16.mxu0 0
        %1183 = vmatpush2.bf16.msra.mxu0 0
        %1184 = vmatprep.subr.bf16.mxu0 0
        %1185 = vmatpush2.bf16.msra.mxu0 0
        %1186 = vmatprep.mubr.bf16.mxu0 0
        %1187 = vmatmul.mubr.bf16.gmra.mxu0 %v1152
        %v1188 = vpop.f32.mrf.mxu0
        %v1189 = vadd.f32 0.0, %v1188
        %v1190 = vpop.f32.mrf.mxu0
        %v1191 = vpop.f32.mrf.mxu0
        %v1192 = vadd.f32 0.0, %v1191
        %v1193 = vpop.f32.mrf.mxu0
        %1194 = vdwg.mxu0
        %v1195 = vpack.c.bf16 %v1192, %v1189
        %v1197 = vunpack.c.l.b16 %v1195
        %v1198 = vunpack.c.h.b16 %v1195
        %v1199 = vpack.c.b16 %v1197, %v1197
        %v1200 = vpack.c.b16 %v1198, %v1198
        %vm1203 = vcmask 125952
        %1204 = vst.msk [vmem:[#allocation3] sm:$0xf] %vm1203, %v1199
        %1205 = vst.msk [vmem:[#allocation3 + $0x4] sm:$0xf] %vm1203, %v1200
        %1207 = vrot.lane.b32.xlu0 %v1073, 112
        %v1208 = vpop.permute.xlu0 %1207
        %1210 = vrot.lane.b32.xlu0 %v1074, 112
        %v1211 = vpop.permute.xlu0 %1210
        %v1213 = vsel %vm1080, %v1208, 0
        %v1216 = vsel %vm1080, %v1211, 0
        %1218 = vmatprep.subr.bf16.mxu0 0
        %1219 = vmatpush1.bf16.xpose.msra.mxu0 0
        %1220 = vmatprep.subr.bf16.mxu0 0
        %1221 = vmatpush1.bf16.xpose.msra.mxu0 0
        %1222 = vmatprep.subr.bf16.mxu0 0
        %1223 = vmatpush1.bf16.xpose.msra.mxu0 0
        %1224 = vmatprep.subr.bf16.mxu0 0
        %1225 = vmatpush1.bf16.xpose.msra.mxu0 0
        %1226 = vmatprep.subr.bf16.mxu0 0
        %1227 = vmatpush1.bf16.xpose.msra.mxu0 0
        %1228 = vmatprep.subr.bf16.mxu0 0
        %1229 = vmatpush1.bf16.xpose.msra.mxu0 0
        %1230 = vmatprep.subr.bf16.mxu0 0
        %1231 = vmatpush1.bf16.xpose.msra.mxu0 0
        %1232 = vmatprep.subr.bf16.mxu0 0
        %1233 = vmatpush1.bf16.xpose.msra.mxu0 %v1216
        %1234 = vmatprep.subr.bf16.mxu0 0
        %1235 = vmatpush2.bf16.xpose.msra.mxu0 0
        %1236 = vmatprep.subr.bf16.mxu0 0
        %1237 = vmatpush2.bf16.xpose.msra.mxu0 0
        %1238 = vmatprep.subr.bf16.mxu0 0
        %1239 = vmatpush2.bf16.xpose.msra.mxu0 0
        %1240 = vmatprep.subr.bf16.mxu0 0
        %1241 = vmatpush2.bf16.xpose.msra.mxu0 0
        %1242 = vmatprep.subr.bf16.mxu0 0
        %1243 = vmatpush2.bf16.xpose.msra.mxu0 0
        %1244 = vmatprep.subr.bf16.mxu0 0
        %1245 = vmatpush2.bf16.xpose.msra.mxu0 0
        %1246 = vmatprep.subr.bf16.mxu0 0
        %1247 = vmatpush2.bf16.xpose.msra.mxu0 0
        %1248 = vmatprep.subr.bf16.mxu0 0
        %1249 = vmatpush2.bf16.xpose.msra.mxu0 0
        %1250 = vmatprep.mubr.bf16.mxu0 0
        %1251 = vmatmul.mubr.bf16.gmra.mxu0 %v1213
        %v1252 = vpop.f32.mrf.mxu0
        %v1253 = vadd.f32 %v1078, %v1252
        %v1254 = vpop.f32.mrf.mxu0
        %v1255 = vpop.f32.mrf.mxu0
        %v1256 = vadd.f32 %v1079, %v1255
        %v1257 = vpop.f32.mrf.mxu0
        %1258 = vdwg.mxu0
        %v1259 = vsel %vm1080, %v1253, -inf
        %1260 = vmax.xlane.f32.xlu0 %v1259
        %v1261 = vpop.xlane.xlu0 %1260
        %v1262 = vsel %vm1080, %v1256, -inf
        %1263 = vmax.xlane.f32.xlu0 %v1262
        %v1264 = vpop.xlane.xlu0 %1263
        %v1265 = vsub.f32 %v1253, %v1261
        %v1266 = vsub.f32 %v1256, %v1264
        %v1267 = vmul.f32 %v1265, 1.442695
        %v1268 = vpow.pop %v1267
        %v1269 = vmul.f32 %v1266, 1.442695
        %v1270 = vpow.pop %v1269
        %v1271 = vsel %vm1080, %v1268, 0.0
        %1272 = vadd.xlane.f32.xlu0 %v1271
        %v1273 = vpop.xlane.xlu0 %1272
        %v1274 = vsel %vm1080, %v1270, 0.0
        %1275 = vadd.xlane.f32.xlu0 %v1274
        %v1276 = vpop.xlane.xlu0 %1275
        %v1277 = vrcp.pop %v1273
        %v1278 = vmul.f32 %v1268, %v1277
        %v1279 = vrcp.pop %v1276
        %v1280 = vmul.f32 %v1270, %v1279
        %v1281 = vpack.c.bf16 %v1280, %v1278
        %1283 = vrot.lane.b32.xlu0 %v1075, 112
        %v1284 = vpop.permute.xlu0 %1283
        %v1287 = vsel %vm1080, %v1281, 0
        %1289 = vmatprep.subr.bf16.mxu0 0
        %1290 = vmatpush1.bf16.msra.mxu0 0
        %1291 = vmatprep.subr.bf16.mxu0 0
        %1292 = vmatpush1.bf16.msra.mxu0 0
        %1293 = vmatprep.subr.bf16.mxu0 0
        %1294 = vmatpush1.bf16.msra.mxu0 0
        %1295 = vmatprep.subr.bf16.mxu0 0
        %1296 = vmatpush1.bf16.msra.mxu0 0
        %1297 = vmatprep.subr.bf16.mxu0 0
        %1298 = vmatpush1.bf16.msra.mxu0 0
        %1299 = vmatprep.subr.bf16.mxu0 0
        %1300 = vmatpush1.bf16.msra.mxu0 0
        %1301 = vmatprep.subr.bf16.mxu0 0
        %1302 = vmatpush1.bf16.msra.mxu0 0
        %1303 = vmatprep.subr.bf16.mxu0 0
        %1304 = vmatpush1.bf16.msra.mxu0 %v1284
        %1305 = vmatprep.subr.bf16.mxu0 0
        %1306 = vmatpush2.bf16.msra.mxu0 0
        %1307 = vmatprep.subr.bf16.mxu0 0
        %1308 = vmatpush2.bf16.msra.mxu0 0
        %1309 = vmatprep.subr.bf16.mxu0 0
        %1310 = vmatpush2.bf16.msra.mxu0 0
        %1311 = vmatprep.subr.bf16.mxu0 0
        %1312 = vmatpush2.bf16.msra.mxu0 0
        %1313 = vmatprep.subr.bf16.mxu0 0
        %1314 = vmatpush2.bf16.msra.mxu0 0
        %1315 = vmatprep.subr.bf16.mxu0 0
        %1316 = vmatpush2.bf16.msra.mxu0 0
        %1317 = vmatprep.subr.bf16.mxu0 0
        %1318 = vmatpush2.bf16.msra.mxu0 0
        %1319 = vmatprep.subr.bf16.mxu0 0
        %1320 = vmatpush2.bf16.msra.mxu0 0
        %1321 = vmatprep.mubr.bf16.mxu0 0
        %1322 = vmatmul.mubr.bf16.gmra.mxu0 %v1287
        %v1323 = vpop.f32.mrf.mxu0
        %v1324 = vadd.f32 0.0, %v1323
        %v1325 = vpop.f32.mrf.mxu0
        %v1326 = vpop.f32.mrf.mxu0
        %v1327 = vadd.f32 0.0, %v1326
        %v1328 = vpop.f32.mrf.mxu0
        %1329 = vdwg.mxu0
        %v1330 = vpack.c.bf16 %v1327, %v1324
        %v1332 = vunpack.c.l.b16 %v1330
        %v1333 = vunpack.c.h.b16 %v1330
        %v1334 = vpack.c.b16 %v1332, %v1332
        %v1335 = vpack.c.b16 %v1333, %v1333
        %1336 = vrot.lane.b32.xlu0 %v1334, 16
        %v1337 = vpop.permute.xlu0 %1336
        %1338 = vrot.lane.b32.xlu0 %v1335, 16
        %v1339 = vpop.permute.xlu0 %1338
        %vm1342 = vcmask 257152
        %1343 = vst.msk [vmem:[#allocation3] sm:$0xf] %vm1342, %v1337
        %1344 = vst.msk [vmem:[#allocation3 + $0x4] sm:$0xf] %vm1342, %v1339
        %1345 = vrot.lane.b32.xlu0 %v1073, 96
        %v1346 = vpop.permute.xlu0 %1345
        %1347 = vrot.lane.b32.xlu0 %v1074, 96
        %v1348 = vpop.permute.xlu0 %1347
        %v1350 = vsel %vm1080, %v1346, 0
        %v1353 = vsel %vm1080, %v1348, 0
        %1355 = vmatprep.subr.bf16.mxu0 0
        %1356 = vmatpush1.bf16.xpose.msra.mxu0 0
        %1357 = vmatprep.subr.bf16.mxu0 0
        %1358 = vmatpush1.bf16.xpose.msra.mxu0 0
        %1359 = vmatprep.subr.bf16.mxu0 0
        %1360 = vmatpush1.bf16.xpose.msra.mxu0 0
        %1361 = vmatprep.subr.bf16.mxu0 0
        %1362 = vmatpush1.bf16.xpose.msra.mxu0 0
        %1363 = vmatprep.subr.bf16.mxu0 0
        %1364 = vmatpush1.bf16.xpose.msra.mxu0 0
        %1365 = vmatprep.subr.bf16.mxu0 0
        %1366 = vmatpush1.bf16.xpose.msra.mxu0 0
        %1367 = vmatprep.subr.bf16.mxu0 0
        %1368 = vmatpush1.bf16.xpose.msra.mxu0 0
        %1369 = vmatprep.subr.bf16.mxu0 0
        %1370 = vmatpush1.bf16.xpose.msra.mxu0 %v1353
        %1371 = vmatprep.subr.bf16.mxu0 0
        %1372 = vmatpush2.bf16.xpose.msra.mxu0 0
        %1373 = vmatprep.subr.bf16.mxu0 0
        %1374 = vmatpush2.bf16.xpose.msra.mxu0 0
        %1375 = vmatprep.subr.bf16.mxu0 0
        %1376 = vmatpush2.bf16.xpose.msra.mxu0 0
        %1377 = vmatprep.subr.bf16.mxu0 0
        %1378 = vmatpush2.bf16.xpose.msra.mxu0 0
        %1379 = vmatprep.subr.bf16.mxu0 0
        %1380 = vmatpush2.bf16.xpose.msra.mxu0 0
        %1381 = vmatprep.subr.bf16.mxu0 0
        %1382 = vmatpush2.bf16.xpose.msra.mxu0 0
        %1383 = vmatprep.subr.bf16.mxu0 0
        %1384 = vmatpush2.bf16.xpose.msra.mxu0 0
        %1385 = vmatprep.subr.bf16.mxu0 0
        %1386 = vmatpush2.bf16.xpose.msra.mxu0 0
        %1387 = vmatprep.mubr.bf16.mxu0 0
        %1388 = vmatmul.mubr.bf16.gmra.mxu0 %v1350
        %v1389 = vpop.f32.mrf.mxu0
        %v1390 = vadd.f32 %v1078, %v1389
        %v1391 = vpop.f32.mrf.mxu0
        %v1392 = vpop.f32.mrf.mxu0
        %v1393 = vadd.f32 %v1079, %v1392
        %v1394 = vpop.f32.mrf.mxu0
        %1395 = vdwg.mxu0
        %v1396 = vsel %vm1080, %v1390, -inf
        %1397 = vmax.xlane.f32.xlu0 %v1396
        %v1398 = vpop.xlane.xlu0 %1397
        %v1399 = vsel %vm1080, %v1393, -inf
        %1400 = vmax.xlane.f32.xlu0 %v1399
        %v1401 = vpop.xlane.xlu0 %1400
        %v1402 = vsub.f32 %v1390, %v1398
        %v1403 = vsub.f32 %v1393, %v1401
        %v1404 = vmul.f32 %v1402, 1.442695
        %v1405 = vpow.pop %v1404
        %v1406 = vmul.f32 %v1403, 1.442695
        %v1407 = vpow.pop %v1406
        %v1408 = vsel %vm1080, %v1405, 0.0
        %1409 = vadd.xlane.f32.xlu0 %v1408
        %v1410 = vpop.xlane.xlu0 %1409
        %v1411 = vsel %vm1080, %v1407, 0.0
        %1412 = vadd.xlane.f32.xlu0 %v1411
        %v1413 = vpop.xlane.xlu0 %1412
        %v1414 = vrcp.pop %v1410
        %v1415 = vmul.f32 %v1405, %v1414
        %v1416 = vrcp.pop %v1413
        %v1417 = vmul.f32 %v1407, %v1416
        %v1418 = vpack.c.bf16 %v1417, %v1415
        %1419 = vrot.lane.b32.xlu0 %v1075, 96
        %v1420 = vpop.permute.xlu0 %1419
        %v1423 = vsel %vm1080, %v1418, 0
        %1425 = vmatprep.subr.bf16.mxu0 0
        %1426 = vmatpush1.bf16.msra.mxu0 0
        %1427 = vmatprep.subr.bf16.mxu0 0
        %1428 = vmatpush1.bf16.msra.mxu0 0
        %1429 = vmatprep.subr.bf16.mxu0 0
        %1430 = vmatpush1.bf16.msra.mxu0 0
        %1431 = vmatprep.subr.bf16.mxu0 0
        %1432 = vmatpush1.bf16.msra.mxu0 0
        %1433 = vmatprep.subr.bf16.mxu0 0
        %1434 = vmatpush1.bf16.msra.mxu0 0
        %1435 = vmatprep.subr.bf16.mxu0 0
        %1436 = vmatpush1.bf16.msra.mxu0 0
        %1437 = vmatprep.subr.bf16.mxu0 0
        %1438 = vmatpush1.bf16.msra.mxu0 0
        %1439 = vmatprep.subr.bf16.mxu0 0
        %1440 = vmatpush1.bf16.msra.mxu0 %v1420
        %1441 = vmatprep.subr.bf16.mxu0 0
        %1442 = vmatpush2.bf16.msra.mxu0 0
        %1443 = vmatprep.subr.bf16.mxu0 0
        %1444 = vmatpush2.bf16.msra.mxu0 0
        %1445 = vmatprep.subr.bf16.mxu0 0
        %1446 = vmatpush2.bf16.msra.mxu0 0
        %1447 = vmatprep.subr.bf16.mxu0 0
        %1448 = vmatpush2.bf16.msra.mxu0 0
        %1449 = vmatprep.subr.bf16.mxu0 0
        %1450 = vmatpush2.bf16.msra.mxu0 0
        %1451 = vmatprep.subr.bf16.mxu0 0
        %1452 = vmatpush2.bf16.msra.mxu0 0
        %1453 = vmatprep.subr.bf16.mxu0 0
        %1454 = vmatpush2.bf16.msra.mxu0 0
        %1455 = vmatprep.subr.bf16.mxu0 0
        %1456 = vmatpush2.bf16.msra.mxu0 0
        %1457 = vmatprep.mubr.bf16.mxu0 0
        %1458 = vmatmul.mubr.bf16.gmra.mxu0 %v1423
        %v1459 = vpop.f32.mrf.mxu0
        %v1460 = vadd.f32 0.0, %v1459
        %v1461 = vpop.f32.mrf.mxu0
        %v1462 = vpop.f32.mrf.mxu0
        %v1463 = vadd.f32 0.0, %v1462
        %v1464 = vpop.f32.mrf.mxu0
        %1465 = vdwg.mxu0
        %v1466 = vpack.c.bf16 %v1463, %v1460
        %v1468 = vunpack.c.l.b16 %v1466
        %v1469 = vunpack.c.h.b16 %v1466
        %v1470 = vpack.c.b16 %v1468, %v1468
        %v1471 = vpack.c.b16 %v1469, %v1469
        %1472 = vrot.lane.b32.xlu0 %v1470, 32
        %v1473 = vpop.permute.xlu0 %1472
        %1474 = vrot.lane.b32.xlu0 %v1471, 32
        %v1475 = vpop.permute.xlu0 %1474
        %vm1478 = vcmask 388352
        %1479 = vst.msk [vmem:[#allocation3] sm:$0xf] %vm1478, %v1473
        %1480 = vst.msk [vmem:[#allocation3 + $0x4] sm:$0xf] %vm1478, %v1475
        %1481 = vrot.lane.b32.xlu0 %v1073, 80
        %v1482 = vpop.permute.xlu0 %1481
        %1483 = vrot.lane.b32.xlu0 %v1074, 80
        %v1484 = vpop.permute.xlu0 %1483
        %v1486 = vsel %vm1080, %v1482, 0
        %v1489 = vsel %vm1080, %v1484, 0
        %1491 = vmatprep.subr.bf16.mxu0 0
        %1492 = vmatpush1.bf16.xpose.msra.mxu0 0
        %1493 = vmatprep.subr.bf16.mxu0 0
        %1494 = vmatpush1.bf16.xpose.msra.mxu0 0
        %1495 = vmatprep.subr.bf16.mxu0 0
        %1496 = vmatpush1.bf16.xpose.msra.mxu0 0
        %1497 = vmatprep.subr.bf16.mxu0 0
        %1498 = vmatpush1.bf16.xpose.msra.mxu0 0
        %1499 = vmatprep.subr.bf16.mxu0 0
        %1500 = vmatpush1.bf16.xpose.msra.mxu0 0
        %1501 = vmatprep.subr.bf16.mxu0 0
        %1502 = vmatpush1.bf16.xpose.msra.mxu0 0
        %1503 = vmatprep.subr.bf16.mxu0 0
        %1504 = vmatpush1.bf16.xpose.msra.mxu0 0
        %1505 = vmatprep.subr.bf16.mxu0 0
        %1506 = vmatpush1.bf16.xpose.msra.mxu0 %v1489
        %1507 = vmatprep.subr.bf16.mxu0 0
        %1508 = vmatpush2.bf16.xpose.msra.mxu0 0
        %1509 = vmatprep.subr.bf16.mxu0 0
        %1510 = vmatpush2.bf16.xpose.msra.mxu0 0
        %1511 = vmatprep.subr.bf16.mxu0 0
        %1512 = vmatpush2.bf16.xpose.msra.mxu0 0
        %1513 = vmatprep.subr.bf16.mxu0 0
        %1514 = vmatpush2.bf16.xpose.msra.mxu0 0
        %1515 = vmatprep.subr.bf16.mxu0 0
        %1516 = vmatpush2.bf16.xpose.msra.mxu0 0
        %1517 = vmatprep.subr.bf16.mxu0 0
        %1518 = vmatpush2.bf16.xpose.msra.mxu0 0
        %1519 = vmatprep.subr.bf16.mxu0 0
        %1520 = vmatpush2.bf16.xpose.msra.mxu0 0
        %1521 = vmatprep.subr.bf16.mxu0 0
        %1522 = vmatpush2.bf16.xpose.msra.mxu0 0
        %1523 = vmatprep.mubr.bf16.mxu0 0
        %1524 = vmatmul.mubr.bf16.gmra.mxu0 %v1486
        %v1525 = vpop.f32.mrf.mxu0
        %v1526 = vadd.f32 %v1078, %v1525
        %v1527 = vpop.f32.mrf.mxu0
        %v1528 = vpop.f32.mrf.mxu0
        %v1529 = vadd.f32 %v1079, %v1528
        %v1530 = vpop.f32.mrf.mxu0
        %1531 = vdwg.mxu0
        %v1532 = vsel %vm1080, %v1526, -inf
        %1533 = vmax.xlane.f32.xlu0 %v1532
        %v1534 = vpop.xlane.xlu0 %1533
        %v1535 = vsel %vm1080, %v1529, -inf
        %1536 = vmax.xlane.f32.xlu0 %v1535
        %v1537 = vpop.xlane.xlu0 %1536
        %v1538 = vsub.f32 %v1526, %v1534
        %v1539 = vsub.f32 %v1529, %v1537
        %v1540 = vmul.f32 %v1538, 1.442695
        %v1541 = vpow.pop %v1540
        %v1542 = vmul.f32 %v1539, 1.442695
        %v1543 = vpow.pop %v1542
        %v1544 = vsel %vm1080, %v1541, 0.0
        %1545 = vadd.xlane.f32.xlu0 %v1544
        %v1546 = vpop.xlane.xlu0 %1545
        %v1547 = vsel %vm1080, %v1543, 0.0
        %1548 = vadd.xlane.f32.xlu0 %v1547
        %v1549 = vpop.xlane.xlu0 %1548
        %v1550 = vrcp.pop %v1546
        %v1551 = vmul.f32 %v1541, %v1550
        %v1552 = vrcp.pop %v1549
        %v1553 = vmul.f32 %v1543, %v1552
        %v1554 = vpack.c.bf16 %v1553, %v1551
        %1555 = vrot.lane.b32.xlu0 %v1075, 80
        %v1556 = vpop.permute.xlu0 %1555
        %v1559 = vsel %vm1080, %v1554, 0
        %1561 = vmatprep.subr.bf16.mxu0 0
        %1562 = vmatpush1.bf16.msra.mxu0 0
        %1563 = vmatprep.subr.bf16.mxu0 0
        %1564 = vmatpush1.bf16.msra.mxu0 0
        %1565 = vmatprep.subr.bf16.mxu0 0
        %1566 = vmatpush1.bf16.msra.mxu0 0
        %1567 = vmatprep.subr.bf16.mxu0 0
        %1568 = vmatpush1.bf16.msra.mxu0 0
        %1569 = vmatprep.subr.bf16.mxu0 0
        %1570 = vmatpush1.bf16.msra.mxu0 0
        %1571 = vmatprep.subr.bf16.mxu0 0
        %1572 = vmatpush1.bf16.msra.mxu0 0
        %1573 = vmatprep.subr.bf16.mxu0 0
        %1574 = vmatpush1.bf16.msra.mxu0 0
        %1575 = vmatprep.subr.bf16.mxu0 0
        %1576 = vmatpush1.bf16.msra.mxu0 %v1556
        %1577 = vmatprep.subr.bf16.mxu0 0
        %1578 = vmatpush2.bf16.msra.mxu0 0
        %1579 = vmatprep.subr.bf16.mxu0 0
        %1580 = vmatpush2.bf16.msra.mxu0 0
        %1581 = vmatprep.subr.bf16.mxu0 0
        %1582 = vmatpush2.bf16.msra.mxu0 0
        %1583 = vmatprep.subr.bf16.mxu0 0
        %1584 = vmatpush2.bf16.msra.mxu0 0
        %1585 = vmatprep.subr.bf16.mxu0 0
        %1586 = vmatpush2.bf16.msra.mxu0 0
        %1587 = vmatprep.subr.bf16.mxu0 0
        %1588 = vmatpush2.bf16.msra.mxu0 0
        %1589 = vmatprep.subr.bf16.mxu0 0
        %1590 = vmatpush2.bf16.msra.mxu0 0
        %1591 = vmatprep.subr.bf16.mxu0 0
        %1592 = vmatpush2.bf16.msra.mxu0 0
        %1593 = vmatprep.mubr.bf16.mxu0 0
        %1594 = vmatmul.mubr.bf16.gmra.mxu0 %v1559
        %v1595 = vpop.f32.mrf.mxu0
        %v1596 = vadd.f32 0.0, %v1595
        %v1597 = vpop.f32.mrf.mxu0
        %v1598 = vpop.f32.mrf.mxu0
        %v1599 = vadd.f32 0.0, %v1598
        %v1600 = vpop.f32.mrf.mxu0
        %1601 = vdwg.mxu0
        %v1602 = vpack.c.bf16 %v1599, %v1596
        %v1604 = vunpack.c.l.b16 %v1602
        %v1605 = vunpack.c.h.b16 %v1602
        %v1606 = vpack.c.b16 %v1604, %v1604
        %v1607 = vpack.c.b16 %v1605, %v1605
        %1608 = vrot.lane.b32.xlu0 %v1606, 48
        %v1609 = vpop.permute.xlu0 %1608
        %1610 = vrot.lane.b32.xlu0 %v1607, 48
        %v1611 = vpop.permute.xlu0 %1610
        %vm1614 = vcmask 519552
        %1615 = vst.msk [vmem:[#allocation3] sm:$0xf] %vm1614, %v1609
        %1616 = vst.msk [vmem:[#allocation3 + $0x4] sm:$0xf] %vm1614, %v1611
        %1617 = vrot.lane.b32.xlu0 %v1073, 64
        %v1618 = vpop.permute.xlu0 %1617
        %1619 = vrot.lane.b32.xlu0 %v1074, 64
        %v1620 = vpop.permute.xlu0 %1619
        %v1622 = vsel %vm1080, %v1618, 0
        %v1625 = vsel %vm1080, %v1620, 0
        %1627 = vmatprep.subr.bf16.mxu0 0
        %1628 = vmatpush1.bf16.xpose.msra.mxu0 0
        %1629 = vmatprep.subr.bf16.mxu0 0
        %1630 = vmatpush1.bf16.xpose.msra.mxu0 0
        %1631 = vmatprep.subr.bf16.mxu0 0
        %1632 = vmatpush1.bf16.xpose.msra.mxu0 0
        %1633 = vmatprep.subr.bf16.mxu0 0
        %1634 = vmatpush1.bf16.xpose.msra.mxu0 0
        %1635 = vmatprep.subr.bf16.mxu0 0
        %1636 = vmatpush1.bf16.xpose.msra.mxu0 0
        %1637 = vmatprep.subr.bf16.mxu0 0
        %1638 = vmatpush1.bf16.xpose.msra.mxu0 0
        %1639 = vmatprep.subr.bf16.mxu0 0
        %1640 = vmatpush1.bf16.xpose.msra.mxu0 0
        %1641 = vmatprep.subr.bf16.mxu0 0
        %1642 = vmatpush1.bf16.xpose.msra.mxu0 %v1625
        %1643 = vmatprep.subr.bf16.mxu0 0
        %1644 = vmatpush2.bf16.xpose.msra.mxu0 0
        %1645 = vmatprep.subr.bf16.mxu0 0
        %1646 = vmatpush2.bf16.xpose.msra.mxu0 0
        %1647 = vmatprep.subr.bf16.mxu0 0
        %1648 = vmatpush2.bf16.xpose.msra.mxu0 0
        %1649 = vmatprep.subr.bf16.mxu0 0
        %1650 = vmatpush2.bf16.xpose.msra.mxu0 0
        %1651 = vmatprep.subr.bf16.mxu0 0
        %1652 = vmatpush2.bf16.xpose.msra.mxu0 0
        %1653 = vmatprep.subr.bf16.mxu0 0
        %1654 = vmatpush2.bf16.xpose.msra.mxu0 0
        %1655 = vmatprep.subr.bf16.mxu0 0
        %1656 = vmatpush2.bf16.xpose.msra.mxu0 0
        %1657 = vmatprep.subr.bf16.mxu0 0
        %1658 = vmatpush2.bf16.xpose.msra.mxu0 0
        %1659 = vmatprep.mubr.bf16.mxu0 0
        %1660 = vmatmul.mubr.bf16.gmra.mxu0 %v1622
        %v1661 = vpop.f32.mrf.mxu0
        %v1662 = vadd.f32 %v1078, %v1661
        %v1663 = vpop.f32.mrf.mxu0
        %v1664 = vpop.f32.mrf.mxu0
        %v1665 = vadd.f32 %v1079, %v1664
        %v1666 = vpop.f32.mrf.mxu0
        %1667 = vdwg.mxu0
        %v1668 = vsel %vm1080, %v1662, -inf
        %1669 = vmax.xlane.f32.xlu0 %v1668
        %v1670 = vpop.xlane.xlu0 %1669
        %v1671 = vsel %vm1080, %v1665, -inf
        %1672 = vmax.xlane.f32.xlu0 %v1671
        %v1673 = vpop.xlane.xlu0 %1672
        %v1674 = vsub.f32 %v1662, %v1670
        %v1675 = vsub.f32 %v1665, %v1673
        %v1676 = vmul.f32 %v1674, 1.442695
        %v1677 = vpow.pop %v1676
        %v1678 = vmul.f32 %v1675, 1.442695
        %v1679 = vpow.pop %v1678
        %v1680 = vsel %vm1080, %v1677, 0.0
        %1681 = vadd.xlane.f32.xlu0 %v1680
        %v1682 = vpop.xlane.xlu0 %1681
        %v1683 = vsel %vm1080, %v1679, 0.0
        %1684 = vadd.xlane.f32.xlu0 %v1683
        %v1685 = vpop.xlane.xlu0 %1684
        %v1686 = vrcp.pop %v1682
        %v1687 = vmul.f32 %v1677, %v1686
        %v1688 = vrcp.pop %v1685
        %v1689 = vmul.f32 %v1679, %v1688
        %v1690 = vpack.c.bf16 %v1689, %v1687
        %1691 = vrot.lane.b32.xlu0 %v1075, 64
        %v1692 = vpop.permute.xlu0 %1691
        %v1695 = vsel %vm1080, %v1690, 0
        %1697 = vmatprep.subr.bf16.mxu0 0
        %1698 = vmatpush1.bf16.msra.mxu0 0
        %1699 = vmatprep.subr.bf16.mxu0 0
        %1700 = vmatpush1.bf16.msra.mxu0 0
        %1701 = vmatprep.subr.bf16.mxu0 0
        %1702 = vmatpush1.bf16.msra.mxu0 0
        %1703 = vmatprep.subr.bf16.mxu0 0
        %1704 = vmatpush1.bf16.msra.mxu0 0
        %1705 = vmatprep.subr.bf16.mxu0 0
        %1706 = vmatpush1.bf16.msra.mxu0 0
        %1707 = vmatprep.subr.bf16.mxu0 0
        %1708 = vmatpush1.bf16.msra.mxu0 0
        %1709 = vmatprep.subr.bf16.mxu0 0
        %1710 = vmatpush1.bf16.msra.mxu0 0
        %1711 = vmatprep.subr.bf16.mxu0 0
        %1712 = vmatpush1.bf16.msra.mxu0 %v1692
        %1713 = vmatprep.subr.bf16.mxu0 0
        %1714 = vmatpush2.bf16.msra.mxu0 0
        %1715 = vmatprep.subr.bf16.mxu0 0
        %1716 = vmatpush2.bf16.msra.mxu0 0
        %1717 = vmatprep.subr.bf16.mxu0 0
        %1718 = vmatpush2.bf16.msra.mxu0 0
        %1719 = vmatprep.subr.bf16.mxu0 0
        %1720 = vmatpush2.bf16.msra.mxu0 0
        %1721 = vmatprep.subr.bf16.mxu0 0
        %1722 = vmatpush2.bf16.msra.mxu0 0
        %1723 = vmatprep.subr.bf16.mxu0 0
        %1724 = vmatpush2.bf16.msra.mxu0 0
        %1725 = vmatprep.subr.bf16.mxu0 0
        %1726 = vmatpush2.bf16.msra.mxu0 0
        %1727 = vmatprep.subr.bf16.mxu0 0
        %1728 = vmatpush2.bf16.msra.mxu0 0
        %1729 = vmatprep.mubr.bf16.mxu0 0
        %1730 = vmatmul.mubr.bf16.gmra.mxu0 %v1695
        %v1731 = vpop.f32.mrf.mxu0
        %v1732 = vadd.f32 0.0, %v1731
        %v1733 = vpop.f32.mrf.mxu0
        %v1734 = vpop.f32.mrf.mxu0
        %v1735 = vadd.f32 0.0, %v1734
        %v1736 = vpop.f32.mrf.mxu0
        %1737 = vdwg.mxu0
        %v1738 = vpack.c.bf16 %v1735, %v1732
        %v1740 = vunpack.c.l.b16 %v1738
        %v1741 = vunpack.c.h.b16 %v1738
        %v1742 = vpack.c.b16 %v1740, %v1740
        %v1743 = vpack.c.b16 %v1741, %v1741
        %1744 = vrot.lane.b32.xlu0 %v1742, 64
        %v1745 = vpop.permute.xlu0 %1744
        %1746 = vrot.lane.b32.xlu0 %v1743, 64
        %v1747 = vpop.permute.xlu0 %1746
        %vm1750 = vcmask 650752
        %1751 = vst.msk [vmem:[#allocation3] sm:$0xf] %vm1750, %v1745
        %1752 = vst.msk [vmem:[#allocation3 + $0x4] sm:$0xf] %vm1750, %v1747
        %1753 = vrot.lane.b32.xlu0 %v1073, 48
        %v1754 = vpop.permute.xlu0 %1753
        %1755 = vrot.lane.b32.xlu0 %v1074, 48
        %v1756 = vpop.permute.xlu0 %1755
        %v1758 = vsel %vm1080, %v1754, 0
        %v1761 = vsel %vm1080, %v1756, 0
        %1763 = vmatprep.subr.bf16.mxu0 0
        %1764 = vmatpush1.bf16.xpose.msra.mxu0 0
        %1765 = vmatprep.subr.bf16.mxu0 0
        %1766 = vmatpush1.bf16.xpose.msra.mxu0 0
        %1767 = vmatprep.subr.bf16.mxu0 0
        %1768 = vmatpush1.bf16.xpose.msra.mxu0 0
        %1769 = vmatprep.subr.bf16.mxu0 0
        %1770 = vmatpush1.bf16.xpose.msra.mxu0 0
        %1771 = vmatprep.subr.bf16.mxu0 0
        %1772 = vmatpush1.bf16.xpose.msra.mxu0 0
        %1773 = vmatprep.subr.bf16.mxu0 0
        %1774 = vmatpush1.bf16.xpose.msra.mxu0 0
        %1775 = vmatprep.subr.bf16.mxu0 0
        %1776 = vmatpush1.bf16.xpose.msra.mxu0 0
        %1777 = vmatprep.subr.bf16.mxu0 0
        %1778 = vmatpush1.bf16.xpose.msra.mxu0 %v1761
        %1779 = vmatprep.subr.bf16.mxu0 0
        %1780 = vmatpush2.bf16.xpose.msra.mxu0 0
        %1781 = vmatprep.subr.bf16.mxu0 0
        %1782 = vmatpush2.bf16.xpose.msra.mxu0 0
        %1783 = vmatprep.subr.bf16.mxu0 0
        %1784 = vmatpush2.bf16.xpose.msra.mxu0 0
        %1785 = vmatprep.subr.bf16.mxu0 0
        %1786 = vmatpush2.bf16.xpose.msra.mxu0 0
        %1787 = vmatprep.subr.bf16.mxu0 0
        %1788 = vmatpush2.bf16.xpose.msra.mxu0 0
        %1789 = vmatprep.subr.bf16.mxu0 0
        %1790 = vmatpush2.bf16.xpose.msra.mxu0 0
        %1791 = vmatprep.subr.bf16.mxu0 0
        %1792 = vmatpush2.bf16.xpose.msra.mxu0 0
        %1793 = vmatprep.subr.bf16.mxu0 0
        %1794 = vmatpush2.bf16.xpose.msra.mxu0 0
        %1795 = vmatprep.mubr.bf16.mxu0 0
        %1796 = vmatmul.mubr.bf16.gmra.mxu0 %v1758
        %v1797 = vpop.f32.mrf.mxu0
        %v1798 = vadd.f32 %v1078, %v1797
        %v1799 = vpop.f32.mrf.mxu0
        %v1800 = vpop.f32.mrf.mxu0
        %v1801 = vadd.f32 %v1079, %v1800
        %v1802 = vpop.f32.mrf.mxu0
        %1803 = vdwg.mxu0
        %v1804 = vsel %vm1080, %v1798, -inf
        %1805 = vmax.xlane.f32.xlu0 %v1804
        %v1806 = vpop.xlane.xlu0 %1805
        %v1807 = vsel %vm1080, %v1801, -inf
        %1808 = vmax.xlane.f32.xlu0 %v1807
        %v1809 = vpop.xlane.xlu0 %1808
        %v1810 = vsub.f32 %v1798, %v1806
        %v1811 = vsub.f32 %v1801, %v1809
        %v1812 = vmul.f32 %v1810, 1.442695
        %v1813 = vpow.pop %v1812
        %v1814 = vmul.f32 %v1811, 1.442695
        %v1815 = vpow.pop %v1814
        %v1816 = vsel %vm1080, %v1813, 0.0
        %1817 = vadd.xlane.f32.xlu0 %v1816
        %v1818 = vpop.xlane.xlu0 %1817
        %v1819 = vsel %vm1080, %v1815, 0.0
        %1820 = vadd.xlane.f32.xlu0 %v1819
        %v1821 = vpop.xlane.xlu0 %1820
        %v1822 = vrcp.pop %v1818
        %v1823 = vmul.f32 %v1813, %v1822
        %v1824 = vrcp.pop %v1821
        %v1825 = vmul.f32 %v1815, %v1824
        %v1826 = vpack.c.bf16 %v1825, %v1823
        %1827 = vrot.lane.b32.xlu0 %v1075, 48
        %v1828 = vpop.permute.xlu0 %1827
        %v1831 = vsel %vm1080, %v1826, 0
        %1833 = vmatprep.subr.bf16.mxu0 0
        %1834 = vmatpush1.bf16.msra.mxu0 0
        %1835 = vmatprep.subr.bf16.mxu0 0
        %1836 = vmatpush1.bf16.msra.mxu0 0
        %1837 = vmatprep.subr.bf16.mxu0 0
        %1838 = vmatpush1.bf16.msra.mxu0 0
        %1839 = vmatprep.subr.bf16.mxu0 0
        %1840 = vmatpush1.bf16.msra.mxu0 0
        %1841 = vmatprep.subr.bf16.mxu0 0
        %1842 = vmatpush1.bf16.msra.mxu0 0
        %1843 = vmatprep.subr.bf16.mxu0 0
        %1844 = vmatpush1.bf16.msra.mxu0 0
        %1845 = vmatprep.subr.bf16.mxu0 0
        %1846 = vmatpush1.bf16.msra.mxu0 0
        %1847 = vmatprep.subr.bf16.mxu0 0
        %1848 = vmatpush1.bf16.msra.mxu0 %v1828
        %1849 = vmatprep.subr.bf16.mxu0 0
        %1850 = vmatpush2.bf16.msra.mxu0 0
        %1851 = vmatprep.subr.bf16.mxu0 0
        %1852 = vmatpush2.bf16.msra.mxu0 0
        %1853 = vmatprep.subr.bf16.mxu0 0
        %1854 = vmatpush2.bf16.msra.mxu0 0
        %1855 = vmatprep.subr.bf16.mxu0 0
        %1856 = vmatpush2.bf16.msra.mxu0 0
        %1857 = vmatprep.subr.bf16.mxu0 0
        %1858 = vmatpush2.bf16.msra.mxu0 0
        %1859 = vmatprep.subr.bf16.mxu0 0
        %1860 = vmatpush2.bf16.msra.mxu0 0
        %1861 = vmatprep.subr.bf16.mxu0 0
        %1862 = vmatpush2.bf16.msra.mxu0 0
        %1863 = vmatprep.subr.bf16.mxu0 0
        %1864 = vmatpush2.bf16.msra.mxu0 0
        %1865 = vmatprep.mubr.bf16.mxu0 0
        %1866 = vmatmul.mubr.bf16.gmra.mxu0 %v1831
        %v1867 = vpop.f32.mrf.mxu0
        %v1868 = vadd.f32 0.0, %v1867
        %v1869 = vpop.f32.mrf.mxu0
        %v1870 = vpop.f32.mrf.mxu0
        %v1871 = vadd.f32 0.0, %v1870
        %v1872 = vpop.f32.mrf.mxu0
        %1873 = vdwg.mxu0
        %v1874 = vpack.c.bf16 %v1871, %v1868
        %v1876 = vunpack.c.l.b16 %v1874
        %v1877 = vunpack.c.h.b16 %v1874
        %v1878 = vpack.c.b16 %v1876, %v1876
        %v1879 = vpack.c.b16 %v1877, %v1877
        %1880 = vrot.lane.b32.xlu0 %v1878, 80
        %v1881 = vpop.permute.xlu0 %1880
        %1882 = vrot.lane.b32.xlu0 %v1879, 80
        %v1883 = vpop.permute.xlu0 %1882
        %vm1886 = vcmask 781952
        %1887 = vst.msk [vmem:[#allocation3] sm:$0xf] %vm1886, %v1881
        %1888 = vst.msk [vmem:[#allocation3 + $0x4] sm:$0xf] %vm1886, %v1883
        %1889 = vrot.lane.b32.xlu0 %v1073, 32
        %v1890 = vpop.permute.xlu0 %1889
        %1891 = vrot.lane.b32.xlu0 %v1074, 32
        %v1892 = vpop.permute.xlu0 %1891
        %v1894 = vsel %vm1080, %v1890, 0
        %v1897 = vsel %vm1080, %v1892, 0
        %1899 = vmatprep.subr.bf16.mxu0 0
        %1900 = vmatpush1.bf16.xpose.msra.mxu0 0
        %1901 = vmatprep.subr.bf16.mxu0 0
        %1902 = vmatpush1.bf16.xpose.msra.mxu0 0
        %1903 = vmatprep.subr.bf16.mxu0 0
        %1904 = vmatpush1.bf16.xpose.msra.mxu0 0
        %1905 = vmatprep.subr.bf16.mxu0 0
        %1906 = vmatpush1.bf16.xpose.msra.mxu0 0
        %1907 = vmatprep.subr.bf16.mxu0 0
        %1908 = vmatpush1.bf16.xpose.msra.mxu0 0
        %1909 = vmatprep.subr.bf16.mxu0 0
        %1910 = vmatpush1.bf16.xpose.msra.mxu0 0
        %1911 = vmatprep.subr.bf16.mxu0 0
        %1912 = vmatpush1.bf16.xpose.msra.mxu0 0
        %1913 = vmatprep.subr.bf16.mxu0 0
        %1914 = vmatpush1.bf16.xpose.msra.mxu0 %v1897
        %1915 = vmatprep.subr.bf16.mxu0 0
        %1916 = vmatpush2.bf16.xpose.msra.mxu0 0
        %1917 = vmatprep.subr.bf16.mxu0 0
        %1918 = vmatpush2.bf16.xpose.msra.mxu0 0
        %1919 = vmatprep.subr.bf16.mxu0 0
        %1920 = vmatpush2.bf16.xpose.msra.mxu0 0
        %1921 = vmatprep.subr.bf16.mxu0 0
        %1922 = vmatpush2.bf16.xpose.msra.mxu0 0
        %1923 = vmatprep.subr.bf16.mxu0 0
        %1924 = vmatpush2.bf16.xpose.msra.mxu0 0
        %1925 = vmatprep.subr.bf16.mxu0 0
        %1926 = vmatpush2.bf16.xpose.msra.mxu0 0
        %1927 = vmatprep.subr.bf16.mxu0 0
        %1928 = vmatpush2.bf16.xpose.msra.mxu0 0
        %1929 = vmatprep.subr.bf16.mxu0 0
        %1930 = vmatpush2.bf16.xpose.msra.mxu0 0
        %1931 = vmatprep.mubr.bf16.mxu0 0
        %1932 = vmatmul.mubr.bf16.gmra.mxu0 %v1894
        %v1933 = vpop.f32.mrf.mxu0
        %v1934 = vadd.f32 %v1078, %v1933
        %v1935 = vpop.f32.mrf.mxu0
        %v1936 = vpop.f32.mrf.mxu0
        %v1937 = vadd.f32 %v1079, %v1936
        %v1938 = vpop.f32.mrf.mxu0
        %1939 = vdwg.mxu0
        %v1940 = vsel %vm1080, %v1934, -inf
        %1941 = vmax.xlane.f32.xlu0 %v1940
        %v1942 = vpop.xlane.xlu0 %1941
        %v1943 = vsel %vm1080, %v1937, -inf
        %1944 = vmax.xlane.f32.xlu0 %v1943
        %v1945 = vpop.xlane.xlu0 %1944
        %v1946 = vsub.f32 %v1934, %v1942
        %v1947 = vsub.f32 %v1937, %v1945
        %v1948 = vmul.f32 %v1946, 1.442695
        %v1949 = vpow.pop %v1948
        %v1950 = vmul.f32 %v1947, 1.442695
        %v1951 = vpow.pop %v1950
        %v1952 = vsel %vm1080, %v1949, 0.0
        %1953 = vadd.xlane.f32.xlu0 %v1952
        %v1954 = vpop.xlane.xlu0 %1953
        %v1955 = vsel %vm1080, %v1951, 0.0
        %1956 = vadd.xlane.f32.xlu0 %v1955
        %v1957 = vpop.xlane.xlu0 %1956
        %v1958 = vrcp.pop %v1954
        %v1959 = vmul.f32 %v1949, %v1958
        %v1960 = vrcp.pop %v1957
        %v1961 = vmul.f32 %v1951, %v1960
        %v1962 = vpack.c.bf16 %v1961, %v1959
        %1963 = vrot.lane.b32.xlu0 %v1075, 32
        %v1964 = vpop.permute.xlu0 %1963
        %v1967 = vsel %vm1080, %v1962, 0
        %1969 = vmatprep.subr.bf16.mxu0 0
        %1970 = vmatpush1.bf16.msra.mxu0 0
        %1971 = vmatprep.subr.bf16.mxu0 0
        %1972 = vmatpush1.bf16.msra.mxu0 0
        %1973 = vmatprep.subr.bf16.mxu0 0
        %1974 = vmatpush1.bf16.msra.mxu0 0
        %1975 = vmatprep.subr.bf16.mxu0 0
        %1976 = vmatpush1.bf16.msra.mxu0 0
        %1977 = vmatprep.subr.bf16.mxu0 0
        %1978 = vmatpush1.bf16.msra.mxu0 0
        %1979 = vmatprep.subr.bf16.mxu0 0
        %1980 = vmatpush1.bf16.msra.mxu0 0
        %1981 = vmatprep.subr.bf16.mxu0 0
        %1982 = vmatpush1.bf16.msra.mxu0 0
        %1983 = vmatprep.subr.bf16.mxu0 0
        %1984 = vmatpush1.bf16.msra.mxu0 %v1964
        %1985 = vmatprep.subr.bf16.mxu0 0
        %1986 = vmatpush2.bf16.msra.mxu0 0
        %1987 = vmatprep.subr.bf16.mxu0 0
        %1988 = vmatpush2.bf16.msra.mxu0 0
        %1989 = vmatprep.subr.bf16.mxu0 0
        %1990 = vmatpush2.bf16.msra.mxu0 0
        %1991 = vmatprep.subr.bf16.mxu0 0
        %1992 = vmatpush2.bf16.msra.mxu0 0
        %1993 = vmatprep.subr.bf16.mxu0 0
        %1994 = vmatpush2.bf16.msra.mxu0 0
        %1995 = vmatprep.subr.bf16.mxu0 0
        %1996 = vmatpush2.bf16.msra.mxu0 0
        %1997 = vmatprep.subr.bf16.mxu0 0
        %1998 = vmatpush2.bf16.msra.mxu0 0
        %1999 = vmatprep.subr.bf16.mxu0 0
        %2000 = vmatpush2.bf16.msra.mxu0 0
        %2001 = vmatprep.mubr.bf16.mxu0 0
        %2002 = vmatmul.mubr.bf16.gmra.mxu0 %v1967
        %v2003 = vpop.f32.mrf.mxu0
        %v2004 = vadd.f32 0.0, %v2003
        %v2005 = vpop.f32.mrf.mxu0
        %v2006 = vpop.f32.mrf.mxu0
        %v2007 = vadd.f32 0.0, %v2006
        %v2008 = vpop.f32.mrf.mxu0
        %2009 = vdwg.mxu0
        %v2010 = vpack.c.bf16 %v2007, %v2004
        %v2012 = vunpack.c.l.b16 %v2010
        %v2013 = vunpack.c.h.b16 %v2010
        %v2014 = vpack.c.b16 %v2012, %v2012
        %v2015 = vpack.c.b16 %v2013, %v2013
        %2016 = vrot.lane.b32.xlu0 %v2014, 96
        %v2017 = vpop.permute.xlu0 %2016
        %2018 = vrot.lane.b32.xlu0 %v2015, 96
        %v2019 = vpop.permute.xlu0 %2018
        %vm2022 = vcmask 913152
        %2023 = vst.msk [vmem:[#allocation3] sm:$0xf] %vm2022, %v2017
        %2024 = vst.msk [vmem:[#allocation3 + $0x4] sm:$0xf] %vm2022, %v2019
        %2025 = vrot.lane.b32.xlu0 %v1073, 16
        %v2026 = vpop.permute.xlu0 %2025
        %2027 = vrot.lane.b32.xlu0 %v1074, 16
        %v2028 = vpop.permute.xlu0 %2027
        %v2030 = vsel %vm1080, %v2026, 0
        %v2033 = vsel %vm1080, %v2028, 0
        %2035 = vmatprep.subr.bf16.mxu0 0
        %2036 = vmatpush1.bf16.xpose.msra.mxu0 0
        %2037 = vmatprep.subr.bf16.mxu0 0
        %2038 = vmatpush1.bf16.xpose.msra.mxu0 0
        %2039 = vmatprep.subr.bf16.mxu0 0
        %2040 = vmatpush1.bf16.xpose.msra.mxu0 0
        %2041 = vmatprep.subr.bf16.mxu0 0
        %2042 = vmatpush1.bf16.xpose.msra.mxu0 0
        %2043 = vmatprep.subr.bf16.mxu0 0
        %2044 = vmatpush1.bf16.xpose.msra.mxu0 0
        %2045 = vmatprep.subr.bf16.mxu0 0
        %2046 = vmatpush1.bf16.xpose.msra.mxu0 0
        %2047 = vmatprep.subr.bf16.mxu0 0
        %2048 = vmatpush1.bf16.xpose.msra.mxu0 0
        %2049 = vmatprep.subr.bf16.mxu0 0
        %2050 = vmatpush1.bf16.xpose.msra.mxu0 %v2033
        %2051 = vmatprep.subr.bf16.mxu0 0
        %2052 = vmatpush2.bf16.xpose.msra.mxu0 0
        %2053 = vmatprep.subr.bf16.mxu0 0
        %2054 = vmatpush2.bf16.xpose.msra.mxu0 0
        %2055 = vmatprep.subr.bf16.mxu0 0
        %2056 = vmatpush2.bf16.xpose.msra.mxu0 0
        %2057 = vmatprep.subr.bf16.mxu0 0
        %2058 = vmatpush2.bf16.xpose.msra.mxu0 0
        %2059 = vmatprep.subr.bf16.mxu0 0
        %2060 = vmatpush2.bf16.xpose.msra.mxu0 0
        %2061 = vmatprep.subr.bf16.mxu0 0
        %2062 = vmatpush2.bf16.xpose.msra.mxu0 0
        %2063 = vmatprep.subr.bf16.mxu0 0
        %2064 = vmatpush2.bf16.xpose.msra.mxu0 0
        %2065 = vmatprep.subr.bf16.mxu0 0
        %2066 = vmatpush2.bf16.xpose.msra.mxu0 0
        %2067 = vmatprep.mubr.bf16.mxu0 0
        %2068 = vmatmul.mubr.bf16.gmra.mxu0 %v2030
        %v2069 = vpop.f32.mrf.mxu0
        %v2070 = vadd.f32 %v1078, %v2069
        %v2071 = vpop.f32.mrf.mxu0
        %v2072 = vpop.f32.mrf.mxu0
        %v2073 = vadd.f32 %v1079, %v2072
        %v2074 = vpop.f32.mrf.mxu0
        %2075 = vdwg.mxu0
        %v2076 = vsel %vm1080, %v2070, -inf
        %2077 = vmax.xlane.f32.xlu0 %v2076
        %v2078 = vpop.xlane.xlu0 %2077
        %v2079 = vsel %vm1080, %v2073, -inf
        %2080 = vmax.xlane.f32.xlu0 %v2079
        %v2081 = vpop.xlane.xlu0 %2080
        %v2082 = vsub.f32 %v2070, %v2078
        %v2083 = vsub.f32 %v2073, %v2081
        %v2084 = vmul.f32 %v2082, 1.442695
        %v2085 = vpow.pop %v2084
        %v2086 = vmul.f32 %v2083, 1.442695
        %v2087 = vpow.pop %v2086
        %v2088 = vsel %vm1080, %v2085, 0.0
        %2089 = vadd.xlane.f32.xlu0 %v2088
        %v2090 = vpop.xlane.xlu0 %2089
        %v2091 = vsel %vm1080, %v2087, 0.0
        %2092 = vadd.xlane.f32.xlu0 %v2091
        %v2093 = vpop.xlane.xlu0 %2092
        %v2094 = vrcp.pop %v2090
        %v2095 = vmul.f32 %v2085, %v2094
        %v2096 = vrcp.pop %v2093
        %v2097 = vmul.f32 %v2087, %v2096
        %v2098 = vpack.c.bf16 %v2097, %v2095
        %2099 = vrot.lane.b32.xlu0 %v1075, 16
        %v2100 = vpop.permute.xlu0 %2099
        %v2103 = vsel %vm1080, %v2098, 0
        %2105 = vmatprep.subr.bf16.mxu0 0
        %2106 = vmatpush1.bf16.msra.mxu0 0
        %2107 = vmatprep.subr.bf16.mxu0 0
        %2108 = vmatpush1.bf16.msra.mxu0 0
        %2109 = vmatprep.subr.bf16.mxu0 0
        %2110 = vmatpush1.bf16.msra.mxu0 0
        %2111 = vmatprep.subr.bf16.mxu0 0
        %2112 = vmatpush1.bf16.msra.mxu0 0
        %2113 = vmatprep.subr.bf16.mxu0 0
        %2114 = vmatpush1.bf16.msra.mxu0 0
        %2115 = vmatprep.subr.bf16.mxu0 0
        %2116 = vmatpush1.bf16.msra.mxu0 0
        %2117 = vmatprep.subr.bf16.mxu0 0
        %2118 = vmatpush1.bf16.msra.mxu0 0
        %2119 = vmatprep.subr.bf16.mxu0 0
        %2120 = vmatpush1.bf16.msra.mxu0 %v2100
        %2121 = vmatprep.subr.bf16.mxu0 0
        %2122 = vmatpush2.bf16.msra.mxu0 0
        %2123 = vmatprep.subr.bf16.mxu0 0
        %2124 = vmatpush2.bf16.msra.mxu0 0
        %2125 = vmatprep.subr.bf16.mxu0 0
        %2126 = vmatpush2.bf16.msra.mxu0 0
        %2127 = vmatprep.subr.bf16.mxu0 0
        %2128 = vmatpush2.bf16.msra.mxu0 0
        %2129 = vmatprep.subr.bf16.mxu0 0
        %2130 = vmatpush2.bf16.msra.mxu0 0
        %2131 = vmatprep.subr.bf16.mxu0 0
        %2132 = vmatpush2.bf16.msra.mxu0 0
        %2133 = vmatprep.subr.bf16.mxu0 0
        %2134 = vmatpush2.bf16.msra.mxu0 0
        %2135 = vmatprep.subr.bf16.mxu0 0
        %2136 = vmatpush2.bf16.msra.mxu0 0
        %2137 = vmatprep.mubr.bf16.mxu0 0
        %2138 = vmatmul.mubr.bf16.gmra.mxu0 %v2103
        %v2139 = vpop.f32.mrf.mxu0
        %v2140 = vadd.f32 0.0, %v2139
        %v2141 = vpop.f32.mrf.mxu0
        %v2142 = vpop.f32.mrf.mxu0
        %v2143 = vadd.f32 0.0, %v2142
        %v2144 = vpop.f32.mrf.mxu0
        %2145 = vdwg.mxu0
        %v2146 = vpack.c.bf16 %v2143, %v2140
        %v2148 = vunpack.c.l.b16 %v2146
        %v2149 = vunpack.c.h.b16 %v2146
        %v2150 = vpack.c.b16 %v2148, %v2148
        %v2151 = vpack.c.b16 %v2149, %v2149
        %2152 = vrot.lane.b32.xlu0 %v2150, 112
        %v2153 = vpop.permute.xlu0 %2152
        %2154 = vrot.lane.b32.xlu0 %v2151, 112
        %v2155 = vpop.permute.xlu0 %2154
        %vm2158 = vcmask 1044352
        %2159 = vst.msk [vmem:[#allocation3] sm:$0xf] %vm2158, %v2153
        %2160 = vst.msk [vmem:[#allocation3 + $0x4] sm:$0xf] %vm2158, %v2155
        %v2161 = vld [vmem:[#allocation3] sm:$0xf]
        %v2162 = vld [vmem:[#allocation3 + $0x4] sm:$0xf]
        %s2163 = smul.u32 %s43, 16
        %s2164 = smul.addr %s2163, 4
        %s2165 = scalar_lea.vmem [#allocation10], %s2164
        %v2166 = vld [vmem:[%s2165] sm:$0xf]
        %v2167 = vld [vmem:[%s2165 + $0x4] sm:$0xf]
        %v2168 = vld [vmem:[%s2165 + $0x8] sm:$0xf]
        %v2169 = vld [vmem:[%s2165 + $0xc] sm:$0xf]
        %v2170 = vld [vmem:[%s2165 + $0x10] sm:$0xf]
        %v2171 = vld [vmem:[%s2165 + $0x14] sm:$0xf]
        %v2172 = vld [vmem:[%s2165 + $0x18] sm:$0xf]
        %v2173 = vld [vmem:[%s2165 + $0x1c] sm:$0xf]
        %v2174 = vld [vmem:[%s2165 + $0x20] sm:$0xf]
        %v2175 = vld [vmem:[%s2165 + $0x24] sm:$0xf]
        %v2176 = vld [vmem:[%s2165 + $0x28] sm:$0xf]
        %v2177 = vld [vmem:[%s2165 + $0x2c] sm:$0xf]
        %v2178 = vld [vmem:[%s2165 + $0x30] sm:$0xf]
        %v2179 = vld [vmem:[%s2165 + $0x34] sm:$0xf]
        %v2180 = vld [vmem:[%s2165 + $0x38] sm:$0xf]
        %v2181 = vld [vmem:[%s2165 + $0x3c] sm:$0xf]
        %v2184 = vunpack.c.l.b16 %v2161
        %v2185 = vunpack.c.l.b16 %v2162
        %v2186 = vpack.c.b16 %v2185, %v2184
        %v2204 = vunpack.c.l.b16 %v2166
        %v2205 = vunpack.c.l.b16 %v2167
        %v2206 = vunpack.c.l.b16 %v2168
        %v2207 = vunpack.c.l.b16 %v2169
        %v2208 = vunpack.c.l.b16 %v2170
        %v2209 = vunpack.c.l.b16 %v2171
        %v2210 = vunpack.c.l.b16 %v2172
        %v2211 = vunpack.c.l.b16 %v2173
        %v2212 = vunpack.c.l.b16 %v2174
        %v2213 = vunpack.c.l.b16 %v2175
        %v2214 = vunpack.c.l.b16 %v2176
        %v2215 = vunpack.c.l.b16 %v2177
        %v2216 = vunpack.c.l.b16 %v2178
        %v2217 = vunpack.c.l.b16 %v2179
        %v2218 = vunpack.c.l.b16 %v2180
        %v2219 = vunpack.c.l.b16 %v2181
        %v2220 = vpack.c.b16 %v2205, %v2204
        %v2221 = vpack.c.b16 %v2207, %v2206
        %v2222 = vpack.c.b16 %v2209, %v2208
        %v2223 = vpack.c.b16 %v2211, %v2210
        %v2224 = vpack.c.b16 %v2213, %v2212
        %v2225 = vpack.c.b16 %v2215, %v2214
        %v2226 = vpack.c.b16 %v2217, %v2216
        %v2227 = vpack.c.b16 %v2219, %v2218
        %2236 = vmatprep.subr.bf16.mxu0 0
        %2237 = vmatpush1.bf16.msra.mxu0 %v2227
        %2238 = vmatprep.subr.bf16.mxu0 0
        %2239 = vmatpush1.bf16.msra.mxu0 %v2226
        %2240 = vmatprep.subr.bf16.mxu0 0
        %2241 = vmatpush1.bf16.msra.mxu0 %v2225
        %2242 = vmatprep.subr.bf16.mxu0 0
        %2243 = vmatpush1.bf16.msra.mxu0 %v2224
        %2244 = vmatprep.subr.bf16.mxu0 0
        %2245 = vmatpush1.bf16.msra.mxu0 %v2223
        %2246 = vmatprep.subr.bf16.mxu0 0
        %2247 = vmatpush1.bf16.msra.mxu0 %v2222
        %2248 = vmatprep.subr.bf16.mxu0 0
        %2249 = vmatpush1.bf16.msra.mxu0 %v2221
        %2250 = vmatprep.subr.bf16.mxu0 0
        %2251 = vmatpush1.bf16.msra.mxu0 %v2220
        %2252 = vmatprep.subr.bf16.mxu0 0
        %2253 = vmatpush2.bf16.msra.mxu0 0
        %2254 = vmatprep.subr.bf16.mxu0 0
        %2255 = vmatpush2.bf16.msra.mxu0 0
        %2256 = vmatprep.subr.bf16.mxu0 0
        %2257 = vmatpush2.bf16.msra.mxu0 0
        %2258 = vmatprep.subr.bf16.mxu0 0
        %2259 = vmatpush2.bf16.msra.mxu0 0
        %2260 = vmatprep.subr.bf16.mxu0 0
        %2261 = vmatpush2.bf16.msra.mxu0 0
        %2262 = vmatprep.subr.bf16.mxu0 0
        %2263 = vmatpush2.bf16.msra.mxu0 0
        %2264 = vmatprep.subr.bf16.mxu0 0
        %2265 = vmatpush2.bf16.msra.mxu0 0
        %2266 = vmatprep.subr.bf16.mxu0 0
        %2267 = vmatpush2.bf16.msra.mxu0 0
        %2268 = vmatprep.mubr.bf16.mxu0 0
        %2269 = vmatmul.mubr.bf16.gmra.mxu0 %v2186
        %v2270 = vpop.f32.mrf.mxu0
        %v2271 = vadd.f32 0.0, %v2270
        %v2272 = vpop.f32.mrf.mxu0
        %v2273 = vpop.f32.mrf.mxu0
        %v2274 = vadd.f32 0.0, %v2273
        %v2275 = vpop.f32.mrf.mxu0
        %2276 = vdwg.mxu0
        %v2277 = vadd.f32 %v755, %v2271
        %v2278 = vadd.f32 %v756, %v2274
        %s2279 = scalar_lea.vmem [#allocation12], %s43
        %v2280 = vld [vmem:[%s2279] sm:$0x1]
        %v2282 = vlaneseq
        %v2283 = vshrl.u32 %v2282, 7
        %v2284 = vsub.s32 0, %v2283
        %v2285 = vrot.slane %v2280, %v2284
        %v2287 = vadd.f32 %v2277, %v2285
        %v2288 = vadd.f32 %v2278, %v2285
        %s2289 = scalar_lea.vmem [#allocation13], %s43
        %v2290 = vld [vmem:[%s2289] sm:$0x1]
        %s2291 = scalar_lea.vmem [#allocation15], %s43
        %v2292 = vld [vmem:[%s2291] sm:$0x1]
        %2293 = vadd.xlane.f32.xlu0 %v2287
        %v2294 = vpop.xlane.xlu0 %2293
        %2295 = vadd.xlane.f32.xlu0 %v2288
        %v2296 = vpop.xlane.xlu0 %2295
        %v2297 = vmul.f32 %v2294, %v765
        %v2298 = vmul.f32 %v2296, %v765
        %v2299 = vmul.f32 %v2287, %v2287
        %v2300 = vmul.f32 %v2288, %v2288
        %2301 = vadd.xlane.f32.xlu0 %v2299
        %v2302 = vpop.xlane.xlu0 %2301
        %2303 = vadd.xlane.f32.xlu0 %v2300
        %v2304 = vpop.xlane.xlu0 %2303
        %v2305 = vmul.f32 %v2302, %v765
        %v2306 = vmul.f32 %v2304, %v765
        %v2307 = vmul.f32 %v2297, %v2297
        %v2308 = vmul.f32 %v2298, %v2298
        %v2309 = vsub.f32 %v2305, %v2307
        %v2310 = vsub.f32 %v2306, %v2308
        %v2311 = vmax.f32 %v2309, 0.0
        %v2312 = vmax.f32 %v2310, 0.0
        %v2313 = vsub.f32 %v2287, %v2297
        %v2314 = vsub.f32 %v2288, %v2298
        %v2315 = vadd.f32 %v2311, 1e-05
        %v2316 = vadd.f32 %v2312, 1e-05
        %v2317 = vrsqrt.pop %v2315
        %v2318 = vrsqrt.pop %v2316
        %v2319 = vmul.f32 %v2313, %v2317
        %v2320 = vmul.f32 %v2314, %v2318
        %v2322 = vlaneseq
        %v2323 = vshrl.u32 %v2322, 7
        %v2324 = vsub.s32 0, %v2323
        %v2325 = vrot.slane %v2290, %v2324
        %v2327 = vmul.f32 %v2319, %v2325
        %v2328 = vmul.f32 %v2320, %v2325
        %v2330 = vlaneseq
        %v2331 = vshrl.u32 %v2330, 7
        %v2332 = vsub.s32 0, %v2331
        %v2333 = vrot.slane %v2292, %v2332
        %v2335 = vadd.f32 %v2327, %v2333
        %v2336 = vadd.f32 %v2328, %v2333
        %v2337 = vpack.c.bf16 %v2336, %v2335
        %s2338 = smul.u32 %s43, 64
        %s2339 = smul.addr %s2338, 4
        %s2340 = scalar_lea.vmem [#allocation16], %s2339
        %v2341 = vld [vmem:[%s2340] sm:$0xff]
        %v2342 = vld [vmem:[%s2340 + $0x8] sm:$0xff]
        %v2343 = vld [vmem:[%s2340 + $0x10] sm:$0xff]
        %v2344 = vld [vmem:[%s2340 + $0x18] sm:$0xff]
        %v2345 = vld [vmem:[%s2340 + $0x20] sm:$0xff]
        %v2346 = vld [vmem:[%s2340 + $0x28] sm:$0xff]
        %v2347 = vld [vmem:[%s2340 + $0x30] sm:$0xff]
        %v2348 = vld [vmem:[%s2340 + $0x38] sm:$0xff]
        %v2349 = vld [vmem:[%s2340 + $0x40] sm:$0xff]
        %v2350 = vld [vmem:[%s2340 + $0x48] sm:$0xff]
        %v2351 = vld [vmem:[%s2340 + $0x50] sm:$0xff]
        %v2352 = vld [vmem:[%s2340 + $0x58] sm:$0xff]
        %v2353 = vld [vmem:[%s2340 + $0x60] sm:$0xff]
        %v2354 = vld [vmem:[%s2340 + $0x68] sm:$0xff]
        %v2355 = vld [vmem:[%s2340 + $0x70] sm:$0xff]
        %v2356 = vld [vmem:[%s2340 + $0x78] sm:$0xff]
        %v2357 = vld [vmem:[%s2340 + $0x80] sm:$0xff]
        %v2358 = vld [vmem:[%s2340 + $0x88] sm:$0xff]
        %v2359 = vld [vmem:[%s2340 + $0x90] sm:$0xff]
        %v2360 = vld [vmem:[%s2340 + $0x98] sm:$0xff]
        %v2361 = vld [vmem:[%s2340 + $0xa0] sm:$0xff]
        %v2362 = vld [vmem:[%s2340 + $0xa8] sm:$0xff]
        %v2363 = vld [vmem:[%s2340 + $0xb0] sm:$0xff]
        %v2364 = vld [vmem:[%s2340 + $0xb8] sm:$0xff]
        %v2365 = vld [vmem:[%s2340 + $0xc0] sm:$0xff]
        %v2366 = vld [vmem:[%s2340 + $0xc8] sm:$0xff]
        %v2367 = vld [vmem:[%s2340 + $0xd0] sm:$0xff]
        %v2368 = vld [vmem:[%s2340 + $0xd8] sm:$0xff]
        %v2369 = vld [vmem:[%s2340 + $0xe0] sm:$0xff]
        %v2370 = vld [vmem:[%s2340 + $0xe8] sm:$0xff]
        %v2371 = vld [vmem:[%s2340 + $0xf0] sm:$0xff]
        %v2372 = vld [vmem:[%s2340 + $0xf8] sm:$0xff]
        %s2373 = smul.u32 %s43, 4
        %s2374 = scalar_lea.vmem [#allocation18], %s2373
        %v2375 = vld [vmem:[%s2374] sm:$0xf]
        %v2377 = vlaneseq
        %v2378 = vshrl.u32 %v2377, 7
        %v2379 = vsub.s32 0, %v2378
        %v2380 = vrot.slane %v2375, %v2379
        %v2381 = vlaneseq
        %v2382 = vshrl.u32 %v2381, 7
        %v2383 = vsub.s32 1, %v2382
        %v2384 = vrot.slane %v2375, %v2383
        %v2385 = vlaneseq
        %v2386 = vshrl.u32 %v2385, 7
        %v2387 = vsub.s32 2, %v2386
        %v2388 = vrot.slane %v2375, %v2387
        %v2389 = vlaneseq
        %v2390 = vshrl.u32 %v2389, 7
        %v2391 = vsub.s32 3, %v2390
        %v2392 = vrot.slane %v2375, %v2391
        %v2429 = vunpack.c.l.b16 %v2341
        %v2430 = vunpack.c.h.b16 %v2341
        %v2431 = vunpack.c.l.b16 %v2342
        %v2432 = vunpack.c.h.b16 %v2342
        %v2433 = vunpack.c.l.b16 %v2343
        %v2434 = vunpack.c.h.b16 %v2343
        %v2435 = vunpack.c.l.b16 %v2344
        %v2436 = vunpack.c.h.b16 %v2344
        %v2437 = vunpack.c.l.b16 %v2345
        %v2438 = vunpack.c.h.b16 %v2345
        %v2439 = vunpack.c.l.b16 %v2346
        %v2440 = vunpack.c.h.b16 %v2346
        %v2441 = vunpack.c.l.b16 %v2347
        %v2442 = vunpack.c.h.b16 %v2347
        %v2443 = vunpack.c.l.b16 %v2348
        %v2444 = vunpack.c.h.b16 %v2348
        %v2445 = vunpack.c.l.b16 %v2349
        %v2446 = vunpack.c.h.b16 %v2349
        %v2447 = vunpack.c.l.b16 %v2350
        %v2448 = vunpack.c.h.b16 %v2350
        %v2449 = vunpack.c.l.b16 %v2351
        %v2450 = vunpack.c.h.b16 %v2351
        %v2451 = vunpack.c.l.b16 %v2352
        %v2452 = vunpack.c.h.b16 %v2352
        %v2453 = vunpack.c.l.b16 %v2353
        %v2454 = vunpack.c.h.b16 %v2353
        %v2455 = vunpack.c.l.b16 %v2354
        %v2456 = vunpack.c.h.b16 %v2354
        %v2457 = vunpack.c.l.b16 %v2355
        %v2458 = vunpack.c.h.b16 %v2355
        %v2459 = vunpack.c.l.b16 %v2356
        %v2460 = vunpack.c.h.b16 %v2356
        %v2461 = vunpack.c.l.b16 %v2357
        %v2462 = vunpack.c.h.b16 %v2357
        %v2463 = vunpack.c.l.b16 %v2358
        %v2464 = vunpack.c.h.b16 %v2358
        %v2465 = vunpack.c.l.b16 %v2359
        %v2466 = vunpack.c.h.b16 %v2359
        %v2467 = vunpack.c.l.b16 %v2360
        %v2468 = vunpack.c.h.b16 %v2360
        %v2469 = vunpack.c.l.b16 %v2361
        %v2470 = vunpack.c.h.b16 %v2361
        %v2471 = vunpack.c.l.b16 %v2362
        %v2472 = vunpack.c.h.b16 %v2362
        %v2473 = vunpack.c.l.b16 %v2363
        %v2474 = vunpack.c.h.b16 %v2363
        %v2475 = vunpack.c.l.b16 %v2364
        %v2476 = vunpack.c.h.b16 %v2364
        %v2477 = vunpack.c.l.b16 %v2365
        %v2478 = vunpack.c.h.b16 %v2365
        %v2479 = vunpack.c.l.b16 %v2366
        %v2480 = vunpack.c.h.b16 %v2366
        %v2481 = vunpack.c.l.b16 %v2367
        %v2482 = vunpack.c.h.b16 %v2367
        %v2483 = vunpack.c.l.b16 %v2368
        %v2484 = vunpack.c.h.b16 %v2368
        %v2485 = vunpack.c.l.b16 %v2369
        %v2486 = vunpack.c.h.b16 %v2369
        %v2487 = vunpack.c.l.b16 %v2370
        %v2488 = vunpack.c.h.b16 %v2370
        %v2489 = vunpack.c.l.b16 %v2371
        %v2490 = vunpack.c.h.b16 %v2371
        %v2491 = vunpack.c.l.b16 %v2372
        %v2492 = vunpack.c.h.b16 %v2372
        %v2493 = vpack.c.b16 %v2433, %v2429
        %v2494 = vpack.c.b16 %v2434, %v2430
        %v2495 = vpack.c.b16 %v2435, %v2431
        %v2496 = vpack.c.b16 %v2436, %v2432
        %v2497 = vpack.c.b16 %v2441, %v2437
        %v2498 = vpack.c.b16 %v2442, %v2438
        %v2499 = vpack.c.b16 %v2443, %v2439
        %v2500 = vpack.c.b16 %v2444, %v2440
        %v2501 = vpack.c.b16 %v2449, %v2445
        %v2502 = vpack.c.b16 %v2450, %v2446
        %v2503 = vpack.c.b16 %v2451, %v2447
        %v2504 = vpack.c.b16 %v2452, %v2448
        %v2505 = vpack.c.b16 %v2457, %v2453
        %v2506 = vpack.c.b16 %v2458, %v2454
        %v2507 = vpack.c.b16 %v2459, %v2455
        %v2508 = vpack.c.b16 %v2460, %v2456
        %v2509 = vpack.c.b16 %v2465, %v2461
        %v2510 = vpack.c.b16 %v2466, %v2462
        %v2511 = vpack.c.b16 %v2467, %v2463
        %v2512 = vpack.c.b16 %v2468, %v2464
        %v2513 = vpack.c.b16 %v2473, %v2469
        %v2514 = vpack.c.b16 %v2474, %v2470
        %v2515 = vpack.c.b16 %v2475, %v2471
        %v2516 = vpack.c.b16 %v2476, %v2472
        %v2517 = vpack.c.b16 %v2481, %v2477
        %v2518 = vpack.c.b16 %v2482, %v2478
        %v2519 = vpack.c.b16 %v2483, %v2479
        %v2520 = vpack.c.b16 %v2484, %v2480
        %v2521 = vpack.c.b16 %v2489, %v2485
        %v2522 = vpack.c.b16 %v2490, %v2486
        %v2523 = vpack.c.b16 %v2491, %v2487
        %v2524 = vpack.c.b16 %v2492, %v2488
        %2557 = vmatprep.subr.bf16.mxu0 %v2522
        %2558 = vmatpush1.bf16.msra.mxu0 %v2521
        %2559 = vmatprep.subr.bf16.mxu0 %v2518
        %2560 = vmatpush1.bf16.msra.mxu0 %v2517
        %2561 = vmatprep.subr.bf16.mxu0 %v2514
        %2562 = vmatpush1.bf16.msra.mxu0 %v2513
        %2563 = vmatprep.subr.bf16.mxu0 %v2510
        %2564 = vmatpush1.bf16.msra.mxu0 %v2509
        %2565 = vmatprep.subr.bf16.mxu0 %v2506
        %2566 = vmatpush1.bf16.msra.mxu0 %v2505
        %2567 = vmatprep.subr.bf16.mxu0 %v2502
        %2568 = vmatpush1.bf16.msra.mxu0 %v2501
        %2569 = vmatprep.subr.bf16.mxu0 %v2498
        %2570 = vmatpush1.bf16.msra.mxu0 %v2497
        %2571 = vmatprep.subr.bf16.mxu0 %v2494
        %2572 = vmatpush1.bf16.msra.mxu0 %v2493
        %2573 = vmatprep.subr.bf16.mxu0 0
        %2574 = vmatpush2.bf16.msra.mxu0 0
        %2575 = vmatprep.subr.bf16.mxu0 0
        %2576 = vmatpush2.bf16.msra.mxu0 0
        %2577 = vmatprep.subr.bf16.mxu0 0
        %2578 = vmatpush2.bf16.msra.mxu0 0
        %2579 = vmatprep.subr.bf16.mxu0 0
        %2580 = vmatpush2.bf16.msra.mxu0 0
        %2581 = vmatprep.subr.bf16.mxu0 0
        %2582 = vmatpush2.bf16.msra.mxu0 0
        %2583 = vmatprep.subr.bf16.mxu0 0
        %2584 = vmatpush2.bf16.msra.mxu0 0
        %2585 = vmatprep.subr.bf16.mxu0 0
        %2586 = vmatpush2.bf16.msra.mxu0 0
        %2587 = vmatprep.subr.bf16.mxu0 0
        %2588 = vmatpush2.bf16.msra.mxu0 0
        %2589 = vmatprep.mubr.bf16.mxu0 0
        %2590 = vmatmul.mubr.bf16.gmra.mxu0 %v2337
        %v2591 = vpop.f32.mrf.mxu0
        %v2592 = vadd.f32 %v2380, %v2591
        %v2593 = vpop.f32.mrf.mxu0
        %v2594 = vadd.f32 %v2384, %v2593
        %v2595 = vpop.f32.mrf.mxu0
        %v2596 = vadd.f32 %v2380, %v2595
        %v2597 = vpop.f32.mrf.mxu0
        %v2598 = vadd.f32 %v2384, %v2597
        %2599 = vdwg.mxu0
        %2600 = vmatprep.subr.bf16.mxu0 %v2524
        %2601 = vmatpush1.bf16.msra.mxu0 %v2523
        %2602 = vmatprep.subr.bf16.mxu0 %v2520
        %2603 = vmatpush1.bf16.msra.mxu0 %v2519
        %2604 = vmatprep.subr.bf16.mxu0 %v2516
        %2605 = vmatpush1.bf16.msra.mxu0 %v2515
        %2606 = vmatprep.subr.bf16.mxu0 %v2512
        %2607 = vmatpush1.bf16.msra.mxu0 %v2511
        %2608 = vmatprep.subr.bf16.mxu0 %v2508
        %2609 = vmatpush1.bf16.msra.mxu0 %v2507
        %2610 = vmatprep.subr.bf16.mxu0 %v2504
        %2611 = vmatpush1.bf16.msra.mxu0 %v2503
        %2612 = vmatprep.subr.bf16.mxu0 %v2500
        %2613 = vmatpush1.bf16.msra.mxu0 %v2499
        %2614 = vmatprep.subr.bf16.mxu0 %v2496
        %2615 = vmatpush1.bf16.msra.mxu0 %v2495
        %2616 = vmatprep.subr.bf16.mxu0 0
        %2617 = vmatpush2.bf16.msra.mxu0 0
        %2618 = vmatprep.subr.bf16.mxu0 0
        %2619 = vmatpush2.bf16.msra.mxu0 0
        %2620 = vmatprep.subr.bf16.mxu0 0
        %2621 = vmatpush2.bf16.msra.mxu0 0
        %2622 = vmatprep.subr.bf16.mxu0 0
        %2623 = vmatpush2.bf16.msra.mxu0 0
        %2624 = vmatprep.subr.bf16.mxu0 0
        %2625 = vmatpush2.bf16.msra.mxu0 0
        %2626 = vmatprep.subr.bf16.mxu0 0
        %2627 = vmatpush2.bf16.msra.mxu0 0
        %2628 = vmatprep.subr.bf16.mxu0 0
        %2629 = vmatpush2.bf16.msra.mxu0 0
        %2630 = vmatprep.subr.bf16.mxu0 0
        %2631 = vmatpush2.bf16.msra.mxu0 0
        %2632 = vmatprep.mubr.bf16.mxu0 0
        %2633 = vmatmul.mubr.bf16.gmra.mxu0 %v2337
        %v2634 = vpop.f32.mrf.mxu0
        %v2635 = vadd.f32 %v2388, %v2634
        %v2636 = vpop.f32.mrf.mxu0
        %v2637 = vadd.f32 %v2392, %v2636
        %v2638 = vpop.f32.mrf.mxu0
        %v2639 = vadd.f32 %v2388, %v2638
        %v2640 = vpop.f32.mrf.mxu0
        %v2641 = vadd.f32 %v2392, %v2640
        %2642 = vdwg.mxu0
        %v2643 = vmul.f32 %v2592, %v2592
        %v2644 = vmul.f32 %v2594, %v2594
        %v2645 = vmul.f32 %v2635, %v2635
        %v2646 = vmul.f32 %v2637, %v2637
        %v2647 = vmul.f32 %v2596, %v2596
        %v2648 = vmul.f32 %v2598, %v2598
        %v2649 = vmul.f32 %v2639, %v2639
        %v2650 = vmul.f32 %v2641, %v2641
        %v2651 = vmul.f32 %v2592, %v2643
        %v2652 = vmul.f32 %v2594, %v2644
        %v2653 = vmul.f32 %v2635, %v2645
        %v2654 = vmul.f32 %v2637, %v2646
        %v2655 = vmul.f32 %v2596, %v2647
        %v2656 = vmul.f32 %v2598, %v2648
        %v2657 = vmul.f32 %v2639, %v2649
        %v2658 = vmul.f32 %v2641, %v2650
        %v2659 = vmul.f32 %v2651, 0.044715
        %v2660 = vmul.f32 %v2652, 0.044715
        %v2661 = vmul.f32 %v2653, 0.044715
        %v2662 = vmul.f32 %v2654, 0.044715
        %v2663 = vmul.f32 %v2655, 0.044715
        %v2664 = vmul.f32 %v2656, 0.044715
        %v2665 = vmul.f32 %v2657, 0.044715
        %v2666 = vmul.f32 %v2658, 0.044715
        %v2667 = vadd.f32 %v2592, %v2659
        %v2668 = vadd.f32 %v2594, %v2660
        %v2669 = vadd.f32 %v2635, %v2661
        %v2670 = vadd.f32 %v2637, %v2662
        %v2671 = vadd.f32 %v2596, %v2663
        %v2672 = vadd.f32 %v2598, %v2664
        %v2673 = vadd.f32 %v2639, %v2665
        %v2674 = vadd.f32 %v2641, %v2666
        %v2675 = vmul.f32 %v2667, 0.7978846
        %v2676 = vmul.f32 %v2668, 0.7978846
        %v2677 = vmul.f32 %v2669, 0.7978846
        %v2678 = vmul.f32 %v2670, 0.7978846
        %v2679 = vmul.f32 %v2671, 0.7978846
        %v2680 = vmul.f32 %v2672, 0.7978846
        %v2681 = vmul.f32 %v2673, 0.7978846
        %v2682 = vmul.f32 %v2674, 0.7978846
        %v2683 = vtanh.pop %v2675
        %v2684 = vtanh.pop %v2676
        %v2685 = vtanh.pop %v2677
        %v2686 = vtanh.pop %v2678
        %v2687 = vtanh.pop %v2679
        %v2688 = vtanh.pop %v2680
        %v2689 = vtanh.pop %v2681
        %v2690 = vtanh.pop %v2682
        %v2691 = vadd.f32 %v2683, 1.0
        %v2692 = vadd.f32 %v2684, 1.0
        %v2693 = vadd.f32 %v2685, 1.0
        %v2694 = vadd.f32 %v2686, 1.0
        %v2695 = vadd.f32 %v2687, 1.0
        %v2696 = vadd.f32 %v2688, 1.0
        %v2697 = vadd.f32 %v2689, 1.0
        %v2698 = vadd.f32 %v2690, 1.0
        %v2699 = vmul.f32 %v2691, 0.5
        %v2700 = vmul.f32 %v2692, 0.5
        %v2701 = vmul.f32 %v2693, 0.5
        %v2702 = vmul.f32 %v2694, 0.5
        %v2703 = vmul.f32 %v2695, 0.5
        %v2704 = vmul.f32 %v2696, 0.5
        %v2705 = vmul.f32 %v2697, 0.5
        %v2706 = vmul.f32 %v2698, 0.5
        %v2707 = vmul.f32 %v2592, %v2699
        %v2708 = vmul.f32 %v2594, %v2700
        %v2709 = vmul.f32 %v2635, %v2701
        %v2710 = vmul.f32 %v2637, %v2702
        %v2711 = vmul.f32 %v2596, %v2703
        %v2712 = vmul.f32 %v2598, %v2704
        %v2713 = vmul.f32 %v2639, %v2705
        %v2714 = vmul.f32 %v2641, %v2706
        %v2715 = vpack.c.bf16 %v2711, %v2707
        %v2716 = vpack.c.bf16 %v2712, %v2708
        %v2717 = vpack.c.bf16 %v2713, %v2709
        %v2718 = vpack.c.bf16 %v2714, %v2710
        %s2719 = smul.addr %s2338, 4
        %s2720 = scalar_lea.vmem [#allocation19], %s2719
        %v2721 = vld [vmem:[%s2720] sm:$0xf]
        %v2722 = vld [vmem:[%s2720 + $0x4] sm:$0xf]
        %v2723 = vld [vmem:[%s2720 + $0x8] sm:$0xf]
        %v2724 = vld [vmem:[%s2720 + $0xc] sm:$0xf]
        %v2725 = vld [vmem:[%s2720 + $0x10] sm:$0xf]
        %v2726 = vld [vmem:[%s2720 + $0x14] sm:$0xf]
        %v2727 = vld [vmem:[%s2720 + $0x18] sm:$0xf]
        %v2728 = vld [vmem:[%s2720 + $0x1c] sm:$0xf]
        %v2729 = vld [vmem:[%s2720 + $0x20] sm:$0xf]
        %v2730 = vld [vmem:[%s2720 + $0x24] sm:$0xf]
        %v2731 = vld [vmem:[%s2720 + $0x28] sm:$0xf]
        %v2732 = vld [vmem:[%s2720 + $0x2c] sm:$0xf]
        %v2733 = vld [vmem:[%s2720 + $0x30] sm:$0xf]
        %v2734 = vld [vmem:[%s2720 + $0x34] sm:$0xf]
        %v2735 = vld [vmem:[%s2720 + $0x38] sm:$0xf]
        %v2736 = vld [vmem:[%s2720 + $0x3c] sm:$0xf]
        %v2737 = vld [vmem:[%s2720 + $0x40] sm:$0xf]
        %v2738 = vld [vmem:[%s2720 + $0x44] sm:$0xf]
        %v2739 = vld [vmem:[%s2720 + $0x48] sm:$0xf]
        %v2740 = vld [vmem:[%s2720 + $0x4c] sm:$0xf]
        %v2741 = vld [vmem:[%s2720 + $0x50] sm:$0xf]
        %v2742 = vld [vmem:[%s2720 + $0x54] sm:$0xf]
        %v2743 = vld [vmem:[%s2720 + $0x58] sm:$0xf]
        %v2744 = vld [vmem:[%s2720 + $0x5c] sm:$0xf]
        %v2745 = vld [vmem:[%s2720 + $0x60] sm:$0xf]
        %v2746 = vld [vmem:[%s2720 + $0x64] sm:$0xf]
        %v2747 = vld [vmem:[%s2720 + $0x68] sm:$0xf]
        %v2748 = vld [vmem:[%s2720 + $0x6c] sm:$0xf]
        %v2749 = vld [vmem:[%s2720 + $0x70] sm:$0xf]
        %v2750 = vld [vmem:[%s2720 + $0x74] sm:$0xf]
        %v2751 = vld [vmem:[%s2720 + $0x78] sm:$0xf]
        %v2752 = vld [vmem:[%s2720 + $0x7c] sm:$0xf]
        %v2753 = vld [vmem:[%s2720 + $0x80] sm:$0xf]
        %v2754 = vld [vmem:[%s2720 + $0x84] sm:$0xf]
        %v2755 = vld [vmem:[%s2720 + $0x88] sm:$0xf]
        %v2756 = vld [vmem:[%s2720 + $0x8c] sm:$0xf]
        %v2757 = vld [vmem:[%s2720 + $0x90] sm:$0xf]
        %v2758 = vld [vmem:[%s2720 + $0x94] sm:$0xf]
        %v2759 = vld [vmem:[%s2720 + $0x98] sm:$0xf]
        %v2760 = vld [vmem:[%s2720 + $0x9c] sm:$0xf]
        %v2761 = vld [vmem:[%s2720 + $0xa0] sm:$0xf]
        %v2762 = vld [vmem:[%s2720 + $0xa4] sm:$0xf]
        %v2763 = vld [vmem:[%s2720 + $0xa8] sm:$0xf]
        %v2764 = vld [vmem:[%s2720 + $0xac] sm:$0xf]
        %v2765 = vld [vmem:[%s2720 + $0xb0] sm:$0xf]
        %v2766 = vld [vmem:[%s2720 + $0xb4] sm:$0xf]
        %v2767 = vld [vmem:[%s2720 + $0xb8] sm:$0xf]
        %v2768 = vld [vmem:[%s2720 + $0xbc] sm:$0xf]
        %v2769 = vld [vmem:[%s2720 + $0xc0] sm:$0xf]
        %v2770 = vld [vmem:[%s2720 + $0xc4] sm:$0xf]
        %v2771 = vld [vmem:[%s2720 + $0xc8] sm:$0xf]
        %v2772 = vld [vmem:[%s2720 + $0xcc] sm:$0xf]
        %v2773 = vld [vmem:[%s2720 + $0xd0] sm:$0xf]
        %v2774 = vld [vmem:[%s2720 + $0xd4] sm:$0xf]
        %v2775 = vld [vmem:[%s2720 + $0xd8] sm:$0xf]
        %v2776 = vld [vmem:[%s2720 + $0xdc] sm:$0xf]
        %v2777 = vld [vmem:[%s2720 + $0xe0] sm:$0xf]
        %v2778 = vld [vmem:[%s2720 + $0xe4] sm:$0xf]
        %v2779 = vld [vmem:[%s2720 + $0xe8] sm:$0xf]
        %v2780 = vld [vmem:[%s2720 + $0xec] sm:$0xf]
        %v2781 = vld [vmem:[%s2720 + $0xf0] sm:$0xf]
        %v2782 = vld [vmem:[%s2720 + $0xf4] sm:$0xf]
        %v2783 = vld [vmem:[%s2720 + $0xf8] sm:$0xf]
        %v2784 = vld [vmem:[%s2720 + $0xfc] sm:$0xf]
        %v2849 = vunpack.c.l.b16 %v2721
        %v2850 = vunpack.c.l.b16 %v2722
        %v2851 = vunpack.c.l.b16 %v2723
        %v2852 = vunpack.c.l.b16 %v2724
        %v2853 = vunpack.c.l.b16 %v2725
        %v2854 = vunpack.c.l.b16 %v2726
        %v2855 = vunpack.c.l.b16 %v2727
        %v2856 = vunpack.c.l.b16 %v2728
        %v2857 = vunpack.c.l.b16 %v2729
        %v2858 = vunpack.c.l.b16 %v2730
        %v2859 = vunpack.c.l.b16 %v2731
        %v2860 = vunpack.c.l.b16 %v2732
        %v2861 = vunpack.c.l.b16 %v2733
        %v2862 = vunpack.c.l.b16 %v2734
        %v2863 = vunpack.c.l.b16 %v2735
        %v2864 = vunpack.c.l.b16 %v2736
        %v2865 = vunpack.c.l.b16 %v2737
        %v2866 = vunpack.c.l.b16 %v2738
        %v2867 = vunpack.c.l.b16 %v2739
        %v2868 = vunpack.c.l.b16 %v2740
        %v2869 = vunpack.c.l.b16 %v2741
        %v2870 = vunpack.c.l.b16 %v2742
        %v2871 = vunpack.c.l.b16 %v2743
        %v2872 = vunpack.c.l.b16 %v2744
        %v2873 = vunpack.c.l.b16 %v2745
        %v2874 = vunpack.c.l.b16 %v2746
        %v2875 = vunpack.c.l.b16 %v2747
        %v2876 = vunpack.c.l.b16 %v2748
        %v2877 = vunpack.c.l.b16 %v2749
        %v2878 = vunpack.c.l.b16 %v2750
        %v2879 = vunpack.c.l.b16 %v2751
        %v2880 = vunpack.c.l.b16 %v2752
        %v2881 = vunpack.c.l.b16 %v2753
        %v2882 = vunpack.c.l.b16 %v2754
        %v2883 = vunpack.c.l.b16 %v2755
        %v2884 = vunpack.c.l.b16 %v2756
        %v2885 = vunpack.c.l.b16 %v2757
        %v2886 = vunpack.c.l.b16 %v2758
        %v2887 = vunpack.c.l.b16 %v2759
        %v2888 = vunpack.c.l.b16 %v2760
        %v2889 = vunpack.c.l.b16 %v2761
        %v2890 = vunpack.c.l.b16 %v2762
        %v2891 = vunpack.c.l.b16 %v2763
        %v2892 = vunpack.c.l.b16 %v2764
        %v2893 = vunpack.c.l.b16 %v2765
        %v2894 = vunpack.c.l.b16 %v2766
        %v2895 = vunpack.c.l.b16 %v2767
        %v2896 = vunpack.c.l.b16 %v2768
        %v2897 = vunpack.c.l.b16 %v2769
        %v2898 = vunpack.c.l.b16 %v2770
        %v2899 = vunpack.c.l.b16 %v2771
        %v2900 = vunpack.c.l.b16 %v2772
        %v2901 = vunpack.c.l.b16 %v2773
        %v2902 = vunpack.c.l.b16 %v2774
        %v2903 = vunpack.c.l.b16 %v2775
        %v2904 = vunpack.c.l.b16 %v2776
        %v2905 = vunpack.c.l.b16 %v2777
        %v2906 = vunpack.c.l.b16 %v2778
        %v2907 = vunpack.c.l.b16 %v2779
        %v2908 = vunpack.c.l.b16 %v2780
        %v2909 = vunpack.c.l.b16 %v2781
        %v2910 = vunpack.c.l.b16 %v2782
        %v2911 = vunpack.c.l.b16 %v2783
        %v2912 = vunpack.c.l.b16 %v2784
        %v2913 = vpack.c.b16 %v2850, %v2849
        %v2914 = vpack.c.b16 %v2852, %v2851
        %v2915 = vpack.c.b16 %v2854, %v2853
        %v2916 = vpack.c.b16 %v2856, %v2855
        %v2917 = vpack.c.b16 %v2858, %v2857
        %v2918 = vpack.c.b16 %v2860, %v2859
        %v2919 = vpack.c.b16 %v2862, %v2861
        %v2920 = vpack.c.b16 %v2864, %v2863
        %v2921 = vpack.c.b16 %v2866, %v2865
        %v2922 = vpack.c.b16 %v2868, %v2867
        %v2923 = vpack.c.b16 %v2870, %v2869
        %v2924 = vpack.c.b16 %v2872, %v2871
        %v2925 = vpack.c.b16 %v2874, %v2873
        %v2926 = vpack.c.b16 %v2876, %v2875
        %v2927 = vpack.c.b16 %v2878, %v2877
        %v2928 = vpack.c.b16 %v2880, %v2879
        %v2929 = vpack.c.b16 %v2882, %v2881
        %v2930 = vpack.c.b16 %v2884, %v2883
        %v2931 = vpack.c.b16 %v2886, %v2885
        %v2932 = vpack.c.b16 %v2888, %v2887
        %v2933 = vpack.c.b16 %v2890, %v2889
        %v2934 = vpack.c.b16 %v2892, %v2891
        %v2935 = vpack.c.b16 %v2894, %v2893
        %v2936 = vpack.c.b16 %v2896, %v2895
        %v2937 = vpack.c.b16 %v2898, %v2897
        %v2938 = vpack.c.b16 %v2900, %v2899
        %v2939 = vpack.c.b16 %v2902, %v2901
        %v2940 = vpack.c.b16 %v2904, %v2903
        %v2941 = vpack.c.b16 %v2906, %v2905
        %v2942 = vpack.c.b16 %v2908, %v2907
        %v2943 = vpack.c.b16 %v2910, %v2909
        %v2944 = vpack.c.b16 %v2912, %v2911
        %2977 = vmatprep.subr.bf16.mxu0 0
        %2978 = vmatpush1.bf16.msra.mxu0 %v2920
        %2979 = vmatprep.subr.bf16.mxu0 0
        %2980 = vmatpush1.bf16.msra.mxu0 %v2919
        %2981 = vmatprep.subr.bf16.mxu0 0
        %2982 = vmatpush1.bf16.msra.mxu0 %v2918
        %2983 = vmatprep.subr.bf16.mxu0 0
        %2984 = vmatpush1.bf16.msra.mxu0 %v2917
        %2985 = vmatprep.subr.bf16.mxu0 0
        %2986 = vmatpush1.bf16.msra.mxu0 %v2916
        %2987 = vmatprep.subr.bf16.mxu0 0
        %2988 = vmatpush1.bf16.msra.mxu0 %v2915
        %2989 = vmatprep.subr.bf16.mxu0 0
        %2990 = vmatpush1.bf16.msra.mxu0 %v2914
        %2991 = vmatprep.subr.bf16.mxu0 0
        %2992 = vmatpush1.bf16.msra.mxu0 %v2913
        %2993 = vmatprep.subr.bf16.mxu0 0
        %2994 = vmatpush2.bf16.msra.mxu0 %v2928
        %2995 = vmatprep.subr.bf16.mxu0 0
        %2996 = vmatpush2.bf16.msra.mxu0 %v2927
        %2997 = vmatprep.subr.bf16.mxu0 0
        %2998 = vmatpush2.bf16.msra.mxu0 %v2926
        %2999 = vmatprep.subr.bf16.mxu0 0
        %3000 = vmatpush2.bf16.msra.mxu0 %v2925
        %3001 = vmatprep.subr.bf16.mxu0 0
        %3002 = vmatpush2.bf16.msra.mxu0 %v2924
        %3003 = vmatprep.subr.bf16.mxu0 0
        %3004 = vmatpush2.bf16.msra.mxu0 %v2923
        %3005 = vmatprep.subr.bf16.mxu0 0
        %3006 = vmatpush2.bf16.msra.mxu0 %v2922
        %3007 = vmatprep.subr.bf16.mxu0 0
        %3008 = vmatpush2.bf16.msra.mxu0 %v2921
        %3009 = vmatprep.mubr.bf16.mxu0 %v2716
        %3010 = vmatmul.mubr.bf16.gmra.mxu0 %v2715
        %v3011 = vpop.f32.mrf.mxu0
        %v3012 = vadd.f32 0.0, %v3011
        %v3013 = vpop.f32.mrf.mxu0
        %v3014 = vpop.f32.mrf.mxu0
        %v3015 = vadd.f32 0.0, %v3014
        %v3016 = vpop.f32.mrf.mxu0
        %3017 = vdwg.mxu0
        %3018 = vmatprep.subr.bf16.mxu0 0
        %3019 = vmatpush1.bf16.msra.mxu0 %v2936
        %3020 = vmatprep.subr.bf16.mxu0 0
        %3021 = vmatpush1.bf16.msra.mxu0 %v2935
        %3022 = vmatprep.subr.bf16.mxu0 0
        %3023 = vmatpush1.bf16.msra.mxu0 %v2934
        %3024 = vmatprep.subr.bf16.mxu0 0
        %3025 = vmatpush1.bf16.msra.mxu0 %v2933
        %3026 = vmatprep.subr.bf16.mxu0 0
        %3027 = vmatpush1.bf16.msra.mxu0 %v2932
        %3028 = vmatprep.subr.bf16.mxu0 0
        %3029 = vmatpush1.bf16.msra.mxu0 %v2931
        %3030 = vmatprep.subr.bf16.mxu0 0
        %3031 = vmatpush1.bf16.msra.mxu0 %v2930
        %3032 = vmatprep.subr.bf16.mxu0 0
        %3033 = vmatpush1.bf16.msra.mxu0 %v2929
        %3034 = vmatprep.subr.bf16.mxu0 0
        %3035 = vmatpush2.bf16.msra.mxu0 %v2944
        %3036 = vmatprep.subr.bf16.mxu0 0
        %3037 = vmatpush2.bf16.msra.mxu0 %v2943
        %3038 = vmatprep.subr.bf16.mxu0 0
        %3039 = vmatpush2.bf16.msra.mxu0 %v2942
        %3040 = vmatprep.subr.bf16.mxu0 0
        %3041 = vmatpush2.bf16.msra.mxu0 %v2941
        %3042 = vmatprep.subr.bf16.mxu0 0
        %3043 = vmatpush2.bf16.msra.mxu0 %v2940
        %3044 = vmatprep.subr.bf16.mxu0 0
        %3045 = vmatpush2.bf16.msra.mxu0 %v2939
        %3046 = vmatprep.subr.bf16.mxu0 0
        %3047 = vmatpush2.bf16.msra.mxu0 %v2938
        %3048 = vmatprep.subr.bf16.mxu0 0
        %3049 = vmatpush2.bf16.msra.mxu0 %v2937
        %3050 = vmatprep.mubr.bf16.mxu0 %v2718
        %3051 = vmatmul.mubr.bf16.gmra.mxu0 %v2717
        %v3052 = vpop.f32.mrf.mxu0
        %v3053 = vadd.f32 %v3012, %v3052
        %v3054 = vpop.f32.mrf.mxu0
        %v3055 = vpop.f32.mrf.mxu0
        %v3056 = vadd.f32 %v3015, %v3055
        %v3057 = vpop.f32.mrf.mxu0
        %3058 = vdwg.mxu0
        %v3059 = vadd.f32 %v2287, %v3053
        %v3060 = vadd.f32 %v2288, %v3056
        %s3061 = scalar_lea.vmem [#allocation21], %s43
        %v3062 = vld [vmem:[%s3061] sm:$0x1]
        %v3064 = vlaneseq
        %v3065 = vshrl.u32 %v3064, 7
        %v3066 = vsub.s32 0, %v3065
        %v3067 = vrot.slane %v3062, %v3066
        %v3069 = vadd.f32 %v3059, %v3067
        %v3070 = vadd.f32 %v3060, %v3067
        %3071 = vst [vmem:[#allocation2] sm:$0xff] %v3069
        %3072 = vst [vmem:[#allocation2 + $0x8] sm:$0xff] %v3070
        %p3073 = scmp.eq.s32.totalorder %s43, 1
        // Predicated region
        $region145: #{cross_cond_trans_head.1} parent=87 // pred_check
          %p3074 = pneg %p3073
        $region146: #{cross_cond_trans_head.1} parent=87 // pred_check_branch
          %3076 = sbr.rel (%p3074) target = $region148
        $region147: #{cross_cond_trans_head.1} parent=87 // pred_region
          %v3077 = vld [vmem:[#allocation2] sm:$0xff]
          %v3078 = vld [vmem:[#allocation2 + $0x8] sm:$0xff]
          %v3079 = vld [vmem:[%s14] sm:$0x1]
          %v3080 = vld [vmem:[#allocation22] sm:$0x1]
          %3081 = vadd.xlane.f32.xlu0 %v3077
          %v3082 = vpop.xlane.xlu0 %3081
          %3083 = vadd.xlane.f32.xlu0 %v3078
          %v3084 = vpop.xlane.xlu0 %3083
          %v3085 = vmul.f32 %v3082, %v765
          %v3086 = vmul.f32 %v3084, %v765
          %v3087 = vmul.f32 %v3077, %v3077
          %v3088 = vmul.f32 %v3078, %v3078
          %3089 = vadd.xlane.f32.xlu0 %v3087
          %v3090 = vpop.xlane.xlu0 %3089
          %3091 = vadd.xlane.f32.xlu0 %v3088
          %v3092 = vpop.xlane.xlu0 %3091
          %v3093 = vmul.f32 %v3090, %v765
          %v3094 = vmul.f32 %v3092, %v765
          %v3095 = vmul.f32 %v3085, %v3085
          %v3096 = vmul.f32 %v3086, %v3086
          %v3097 = vsub.f32 %v3093, %v3095
          %v3098 = vsub.f32 %v3094, %v3096
          %v3099 = vmax.f32 %v3097, 0.0
          %v3100 = vmax.f32 %v3098, 0.0
          %v3101 = vsub.f32 %v3077, %v3085
          %v3102 = vsub.f32 %v3078, %v3086
          %v3103 = vadd.f32 %v3099, 1e-05
          %v3104 = vadd.f32 %v3100, 1e-05
          %v3105 = vrsqrt.pop %v3103
          %v3106 = vrsqrt.pop %v3104
          %v3107 = vmul.f32 %v3101, %v3105
          %v3108 = vmul.f32 %v3102, %v3106
          %v3110 = vlaneseq
          %v3111 = vshrl.u32 %v3110, 7
          %v3112 = vsub.s32 0, %v3111
          %v3113 = vrot.slane %v3079, %v3112
          %v3115 = vmul.f32 %v3107, %v3113
          %v3116 = vmul.f32 %v3108, %v3113
          %v3118 = vlaneseq
          %v3119 = vshrl.u32 %v3118, 7
          %v3120 = vsub.s32 0, %v3119
          %v3121 = vrot.slane %v3080, %v3120
          %v3123 = vadd.f32 %v3115, %v3121
          %v3124 = vadd.f32 %v3116, %v3121
          %v3125 = vpack.c.bf16 %v3124, %v3123
          %v3126 = vld [vmem:[#allocation24] sm:$0xf]
          %v3127 = vld [vmem:[#allocation24 + $0x4] sm:$0xf]
          %v3128 = vld [vmem:[#allocation24 + $0x8] sm:$0xf]
          %v3129 = vld [vmem:[#allocation24 + $0xc] sm:$0xf]
          %v3130 = vld [vmem:[#allocation24 + $0x10] sm:$0xf]
          %v3131 = vld [vmem:[#allocation24 + $0x14] sm:$0xf]
          %v3132 = vld [vmem:[#allocation24 + $0x18] sm:$0xf]
          %v3133 = vld [vmem:[#allocation24 + $0x1c] sm:$0xf]
          %v3134 = vld [vmem:[#allocation24 + $0x20] sm:$0xf]
          %v3135 = vld [vmem:[#allocation24 + $0x24] sm:$0xf]
          %v3136 = vld [vmem:[#allocation24 + $0x28] sm:$0xf]
          %v3137 = vld [vmem:[#allocation24 + $0x2c] sm:$0xf]
          %v3138 = vld [vmem:[#allocation24 + $0x30] sm:$0xf]
          %v3139 = vld [vmem:[#allocation24 + $0x34] sm:$0xf]
          %v3140 = vld [vmem:[#allocation24 + $0x38] sm:$0xf]
          %v3141 = vld [vmem:[#allocation24 + $0x3c] sm:$0xf]
          %v3158 = vunpack.c.l.b16 %v3126
          %v3159 = vunpack.c.l.b16 %v3127
          %v3160 = vunpack.c.l.b16 %v3128
          %v3161 = vunpack.c.l.b16 %v3129
          %v3162 = vunpack.c.l.b16 %v3130
          %v3163 = vunpack.c.l.b16 %v3131
          %v3164 = vunpack.c.l.b16 %v3132
          %v3165 = vunpack.c.l.b16 %v3133
          %v3166 = vunpack.c.l.b16 %v3134
          %v3167 = vunpack.c.l.b16 %v3135
          %v3168 = vunpack.c.l.b16 %v3136
          %v3169 = vunpack.c.l.b16 %v3137
          %v3170 = vunpack.c.l.b16 %v3138
          %v3171 = vunpack.c.l.b16 %v3139
          %v3172 = vunpack.c.l.b16 %v3140
          %v3173 = vunpack.c.l.b16 %v3141
          %v3174 = vpack.c.b16 %v3159, %v3158
          %v3175 = vpack.c.b16 %v3161, %v3160
          %v3176 = vpack.c.b16 %v3163, %v3162
          %v3177 = vpack.c.b16 %v3165, %v3164
          %v3178 = vpack.c.b16 %v3167, %v3166
          %v3179 = vpack.c.b16 %v3169, %v3168
          %v3180 = vpack.c.b16 %v3171, %v3170
          %v3181 = vpack.c.b16 %v3173, %v3172
          %3190 = vmatprep.subr.bf16.mxu0 0
          %3191 = vmatpush1.bf16.msra.mxu0 %v3181
          %3192 = vmatprep.subr.bf16.mxu0 0
          %3193 = vmatpush1.bf16.msra.mxu0 %v3180
          %3194 = vmatprep.subr.bf16.mxu0 0
          %3195 = vmatpush1.bf16.msra.mxu0 %v3179
          %3196 = vmatprep.subr.bf16.mxu0 0
          %3197 = vmatpush1.bf16.msra.mxu0 %v3178
          %3198 = vmatprep.subr.bf16.mxu0 0
          %3199 = vmatpush1.bf16.msra.mxu0 %v3177
          %3200 = vmatprep.subr.bf16.mxu0 0
          %3201 = vmatpush1.bf16.msra.mxu0 %v3176
          %3202 = vmatprep.subr.bf16.mxu0 0
          %3203 = vmatpush1.bf16.msra.mxu0 %v3175
          %3204 = vmatprep.subr.bf16.mxu0 0
          %3205 = vmatpush1.bf16.msra.mxu0 %v3174
          %3206 = vmatprep.subr.bf16.mxu0 0
          %3207 = vmatpush2.bf16.msra.mxu0 0
          %3208 = vmatprep.subr.bf16.mxu0 0
          %3209 = vmatpush2.bf16.msra.mxu0 0
          %3210 = vmatprep.subr.bf16.mxu0 0
          %3211 = vmatpush2.bf16.msra.mxu0 0
          %3212 = vmatprep.subr.bf16.mxu0 0
          %3213 = vmatpush2.bf16.msra.mxu0 0
          %3214 = vmatprep.subr.bf16.mxu0 0
          %3215 = vmatpush2.bf16.msra.mxu0 0
          %3216 = vmatprep.subr.bf16.mxu0 0
          %3217 = vmatpush2.bf16.msra.mxu0 0
          %3218 = vmatprep.subr.bf16.mxu0 0
          %3219 = vmatpush2.bf16.msra.mxu0 0
          %3220 = vmatprep.subr.bf16.mxu0 0
          %3221 = vmatpush2.bf16.msra.mxu0 0
          %3222 = vmatprep.mubr.bf16.mxu0 0
          %3223 = vmatmul.mubr.bf16.gmra.mxu0 %v3125
          %v3224 = vpop.f32.mrf.mxu0
          %v3225 = vadd.f32 0.0, %v3224
          %v3226 = vpop.f32.mrf.mxu0
          %v3227 = vpop.f32.mrf.mxu0
          %v3228 = vadd.f32 0.0, %v3227
          %v3229 = vpop.f32.mrf.mxu0
          %3230 = vdwg.mxu0
          %3231 = vst [vmem:[%s740] sm:$0xff] %v3225
          %3232 = vst [vmem:[%s740 + $0x8] sm:$0xff] %v3228
        $region148: #{cross_cond_trans_head.1} parent=87 // pred_fallthru
          _
        %s3233 = sand.u32 %s420, 1
        %s3234 = scalar_lea.sflag [#allocation6], %s3233
        %s3235 = sand.u32 %s420, 1
        %s3236 = smul.addr %s3235, 16
        %s3237 = scalar_lea.vmem [#allocation25], %s3236
        // Predicated region
        $region149: #{cross_cond_trans_head.1} parent=87 // pred_check
          %p3238 = pneg %p430
        $region150: #{cross_cond_trans_head.1} parent=87 // pred_check_branch
          %3240 = sbr.rel (%p3238) target = $region152
        $region151: #{cross_cond_trans_head.1} parent=87 // pred_region
          %s3242 = ssub.s32 256, 256
          %3243 = vsyncadd %s3234, %s3242
          %s3244 = smul.addr %s42, 2
          %s3245 = smul.addr %s3244, 128
          %s3246 = scalar_lea.hbm %s17, %s3245
          %s3247 = sshll.u32 %s3237, 4
          %s3248 = int_to_ptr.vmem [resolvable:$true] %s3247
          %3253 = dma.vmem_to_hbm [thread:$0]  %s3248, 256, %s3246, %s3234, 128, 128, 8
        $region152: #{cross_cond_trans_head.1} parent=87 // pred_fallthru
          _
      $region88: #{cross_cond_trans_head.1} parent=5 // pred_fallthru
        _
      %p3254 = scmp.le.s32.totalorder 2, %s33
      // Predicated region
      $region153: #{cross_cond_trans_head.1} parent=5 // pred_check
        %p3255 = pneg %p3254
      $region154: #{cross_cond_trans_head.1} parent=5 // pred_check_branch
        %3257 = sbr.rel (%p3255) target = $region156
      $region155: #{cross_cond_trans_head.1} parent=5 // pred_region
        %s3258 = ssub.s32 %s33, 2
        // Predicated region
        $region157: #{cross_cond_trans_head.1} parent=155 // pred_check
          %p3259 = pneg %p436
        $region158: #{cross_cond_trans_head.1} parent=155 // pred_check_branch
          %3261 = sbr.rel (%p3259) target = $region160
        $region159: #{cross_cond_trans_head.1} parent=155 // pred_region
          %s3262 = sand.u32 %s421, 1
          %s3263 = scalar_lea.sflag [#allocation6], %s3262
          %s3264 = sand.u32 %s421, 1
          %s3265 = smul.addr %s3264, 16
          %s3266 = scalar_lea.vmem [#allocation25], %s3265
          %3267 = dma.done %s3263, 256
        $region160: #{cross_cond_trans_head.1} parent=155 // pred_fallthru
          _
      $region156: #{cross_cond_trans_head.1} parent=5 // pred_fallthru
        _
    $region6: #{cross_cond_trans_head.1} parent=1 // loop_footer
      %s37 = sadd.s32 1, %s33
    $region7: #{cross_cond_trans_head.1} parent=1 // loop_footer_branch
      %32 = sbr.rel target = $region3
    $region8: #{cross_cond_trans_head.1} parent=1 // loop_exit
      _
    %3268 = vsyncpa [#allocation5], 1
    %s3269 = scalar_lea.sflag [#allocation5], 1
    %3270 = vsyncpa %s3269, 1
    %3271 = vsyncpa [#allocation8], 1
    %3272 = vsyncpa [#allocation11], 1
    %3273 = vsyncpa [#allocation14], 1
    %3274 = vsyncpa [#allocation17], 1
    %3275 = vsyncpa [#allocation20], 1
    %3276 = vsyncpa [#allocation23], 1
    %3277 = vsyncpa [#allocation6], 1
    %s3278 = scalar_lea.sflag [#allocation6], 1
    %3279 = vsyncpa %s3278, 1

</llo_original>
